<compile_context>
chip_gen: v7x
topology: tpu7x:2x2x1
jax: 0.10.0
libtpu: 0.0.40
codegen_flags: <defaults>
</compile_context>

<pallas_src>
import functools

import jax
import jax.numpy as jnp
from jax.experimental import pallas as pl
from jax.experimental.pallas import tpu as pltpu


def _inter_attention_kernel(x_ref, gamma_ref, beta_ref, wqkv_ref, bqkv_ref,
                            wo_ref, bo_ref, o_ref, *, num_heads, seq_len,
                            compute_dtype):
    x = x_ref[...].astype(jnp.float32)                     # (M, D), M = Bb*S
    M, D = x.shape
    H = num_heads
    S = seq_len
    Bb = M // S
    hd = D // H
    scale = 1.0 / (hd ** 0.5)

    # ---- LayerNorm over last dim (eps = 1e-5, PyTorch default), f32 ----
    mean = jnp.mean(x, axis=-1, keepdims=True)
    var = jnp.mean((x - mean) ** 2, axis=-1, keepdims=True)
    xn = (x - mean) * jax.lax.rsqrt(var + 1e-5) * gamma_ref[...] + beta_ref[...]

    # ---- fused QKV projection: one M=Bb*S matmul on the MXU ----
    qkv = jnp.dot(xn.astype(compute_dtype), wqkv_ref[...].astype(compute_dtype),
                  preferred_element_type=jnp.float32)
    qkv = qkv + bqkv_ref[...]                              # (M, 3D)

    q = qkv[:, 0 * D:1 * D]
    k = qkv[:, 1 * D:2 * D]
    v = qkv[:, 2 * D:3 * D]

    def to_heads(t):
        # (M, H*hd) -> (H*Bb, S, hd): heads become part of the batched-matmul
        # batch dim (layout-preserving leading-dim reshapes; only the H lane
        # slices move data).
        parts = [t[:, h * hd:(h + 1) * hd] for h in range(H)]
        stacked = jnp.stack(parts, axis=0)                 # (H, M, hd)
        return stacked.reshape(H * Bb, S, hd)

    qh = to_heads(q) * scale
    kh = to_heads(k)
    vh = to_heads(v)

    # ---- batched scaled dot-product attention over b = H*Bb ----
    s = jnp.einsum('bqd,bkd->bqk',
                   qh.astype(compute_dtype), kh.astype(compute_dtype),
                   preferred_element_type=jnp.float32)     # (H*Bb, S, S)
    s = s - jnp.max(s, axis=-1, keepdims=True)
    p = jnp.exp(s)
    denom = jnp.sum(p, axis=-1, keepdims=True)
    # approx=True routes the reciprocal to the EUP in production; exact here to
    # keep the f32 1e-4 correctness check tight.
    p = p * pl.reciprocal(denom, approx=False)

    ctx = jnp.einsum('bqk,bkd->bqd',
                     p.astype(compute_dtype), vh.astype(compute_dtype),
                     preferred_element_type=jnp.float32)   # (H*Bb, S, hd)

    # ---- merge heads back to (M, D) (PyTorch head-major column order) ----
    ctx = ctx.reshape(H, M, hd)
    attn = jnp.concatenate([ctx[h] for h in range(H)], axis=-1)   # (M, D)

    # ---- output projection ----
    out = jnp.dot(attn.astype(compute_dtype), wo_ref[...].astype(compute_dtype),
                  preferred_element_type=jnp.float32)
    out = out + bo_ref[...]                                # (M, D)

    o_ref[...] = out.astype(o_ref.dtype)


def inter_attention(x, params, num_heads, *, batch_blocks=1,
                    compute_dtype=jnp.float32):
    """x: (batch, extra, S, D).  Returns attn_output of the same shape.

    (attn_output_weights are computed by PyTorch's MHA but discarded by the
    reference module's forward, so only attn_output is produced.)

    batch_blocks: 1 for v5e/v6e (single TensorCore); 2 on v7x to shard the
    flattened batch across both TensorCores via the parallel grid axis.
    compute_dtype: jnp.bfloat16 on v6e/v7x for MXU throughput (f32 accumulate);
    f32 here to match the reference within 1e-4.
    """
    batch, extra, S, D = x.shape
    B = batch * extra
    assert D % num_heads == 0, "embed dim must be divisible by num_heads"
    assert B % batch_blocks == 0, "batch_blocks must divide batch*extra"

    x2d = x.reshape(B * S, D)
    rows_per_block = (B // batch_blocks) * S

    gamma2d = params["ln_gamma"].reshape(1, D)
    beta2d = params["ln_beta"].reshape(1, D)
    wqkv_t = params["in_proj_weight"].T                    # (D, 3D)
    bqkv2d = params["in_proj_bias"].reshape(1, 3 * D)
    wo_t = params["out_proj_weight"].T                     # (D, D)
    bo2d = params["out_proj_bias"].reshape(1, D)

    kernel = functools.partial(_inter_attention_kernel, num_heads=num_heads,
                               seq_len=S, compute_dtype=compute_dtype)

    # NOTE: at production D (e.g. >=2048) the invariant weight specs should use
    # pipeline_mode=pl.Buffered(1) and/or bf16 storage so double-buffered Wqkv
    # fits v7x's 64 MiB VMEM; at D=32 the defaults are fine.
    out2d = pl.pallas_call(
        kernel,
        out_shape=jax.ShapeDtypeStruct((B * S, D), x.dtype),
        grid_spec=pltpu.PrefetchScalarGridSpec(
            num_scalar_prefetch=0,
            grid=(batch_blocks,),
            in_specs=[
                pl.BlockSpec((rows_per_block, D), lambda i: (i, 0)),   # x rows
                pl.BlockSpec((1, D), lambda i: (0, 0)),                # gamma
                pl.BlockSpec((1, D), lambda i: (0, 0)),                # beta
                pl.BlockSpec((D, 3 * D), lambda i: (0, 0)),            # Wqkv^T
                pl.BlockSpec((1, 3 * D), lambda i: (0, 0)),            # bqkv
                pl.BlockSpec((D, D), lambda i: (0, 0)),                # Wout^T
                pl.BlockSpec((1, D), lambda i: (0, 0)),                # bout
            ],
            out_specs=pl.BlockSpec((rows_per_block, D), lambda i: (i, 0)),
        ),
        compiler_params=pltpu.CompilerParams(
            dimension_semantics=("parallel",),
            vmem_limit_bytes=32 * 1024 * 1024),
    )(x2d, gamma2d, beta2d, wqkv_t, bqkv2d, wo_t, bo2d)

    return out2d.reshape(batch, extra, S, D)


def inter_attention_ref(x, params, num_heads):
    """Pure-JAX reference mirroring torch LayerNorm + MultiheadAttention."""
    batch, extra, S, D = x.shape
    xf = x.reshape(-1, S, D).astype(jnp.float32)
    mean = jnp.mean(xf, axis=-1, keepdims=True)
    var = jnp.mean((xf - mean) ** 2, axis=-1, keepdims=True)
    xn = (xf - mean) * jax.lax.rsqrt(var + 1e-5) * params["ln_gamma"] + params["ln_beta"]

    qkv = xn @ params["in_proj_weight"].T + params["in_proj_bias"]   # (B, S, 3D)
    q, k, v = jnp.split(qkv, 3, axis=-1)
    hd = D // num_heads
    B = xf.shape[0]

    def split_heads(t):  # (B, S, D) -> (B, H, S, hd)
        return t.reshape(B, S, num_heads, hd).transpose(0, 2, 1, 3)

    qh, kh, vh = split_heads(q), split_heads(k), split_heads(v)
    s = jnp.einsum("bhqd,bhkd->bhqk", qh * (1.0 / hd ** 0.5), kh)
    p = jax.nn.softmax(s, axis=-1)
    o = jnp.einsum("bhqk,bhkd->bhqd", p, vh)
    o = o.transpose(0, 2, 1, 3).reshape(B, S, D)
    o = o @ params["out_proj_weight"].T + params["out_proj_bias"]
    return o.reshape(batch, extra, S, D)


def make_params(key, dim):
    ks = jax.random.split(key, 4)
    return {
        "ln_gamma": jnp.ones((dim,), jnp.float32),
        "ln_beta": jnp.zeros((dim,), jnp.float32),
        # MHA in_proj_weight: (3*dim, dim); in_proj_bias: (3*dim,)
        "in_proj_weight": jax.random.normal(ks[0], (3 * dim, dim), jnp.float32) * 0.1,
        "in_proj_bias": jax.random.normal(ks[1], (3 * dim,), jnp.float32) * 0.05,
        # out_proj: (dim, dim) weight, (dim,) bias
        "out_proj_weight": jax.random.normal(ks[2], (dim, dim), jnp.float32) * 0.1,
        "out_proj_bias": jax.random.normal(ks[3], (dim,), jnp.float32) * 0.05,
    }


if __name__ == "__main__":
    # x: (batch, extra_dimension, seq, dim) — small shapes per the module spec.
    batch, extra, seq, dim, num_heads = 2, 4, 8, 32, 4

    key = jax.random.PRNGKey(0)
    kx, kp = jax.random.split(key)
    x = jax.random.normal(kx, (batch, extra, seq, dim), jnp.float32)
    params = make_params(kp, dim)

    out = inter_attention(x, params, num_heads)            # batch_blocks=2 on v7x
    out = jax.block_until_ready(out)

    ref = inter_attention_ref(x, params, num_heads)
    assert out.shape == (batch, extra, seq, dim)
    assert jnp.allclose(out, ref, atol=1e-4, rtol=1e-4), "mismatch vs JAX reference"

    print("KERNEL_OK")
</pallas_src>

<mosaic_0001>
module attributes {stable_mosaic.version = 11 : i64} {
  func.func @_inter_attention_kernel(%arg0: i32, %arg1: memref<64x32xf32, #tpu.memory_space<vmem>>, %arg2: memref<1x32xf32, #tpu.memory_space<vmem>>, %arg3: memref<1x32xf32, #tpu.memory_space<vmem>>, %arg4: memref<32x96xf32, #tpu.memory_space<vmem>>, %arg5: memref<1x96xf32, #tpu.memory_space<vmem>>, %arg6: memref<32x32xf32, #tpu.memory_space<vmem>>, %arg7: memref<1x32xf32, #tpu.memory_space<vmem>>, %arg8: memref<64x32xf32, #tpu.memory_space<vmem>>) attributes {dimension_semantics = [#tpu.dimension_semantics<parallel>], iteration_bounds = array<i64: 1>, scalar_prefetch = 0 : i64, scratch_operands = 0 : i64, tpu.core_type = #tpu.core_type<tc>, window_params = [{transform_indices = @transform_0, window_bounds = array<i64: 64, 32>}, {pipeline_mode = #tpu.pipeline_mode<synchronous>, transform_indices = @transform_1, window_bounds = array<i64: 1, 32>}, {pipeline_mode = #tpu.pipeline_mode<synchronous>, transform_indices = @transform_2, window_bounds = array<i64: 1, 32>}, {pipeline_mode = #tpu.pipeline_mode<synchronous>, transform_indices = @transform_3, window_bounds = array<i64: 32, 96>}, {pipeline_mode = #tpu.pipeline_mode<synchronous>, transform_indices = @transform_4, window_bounds = array<i64: 1, 96>}, {pipeline_mode = #tpu.pipeline_mode<synchronous>, transform_indices = @transform_5, window_bounds = array<i64: 32, 32>}, {pipeline_mode = #tpu.pipeline_mode<synchronous>, transform_indices = @transform_6, window_bounds = array<i64: 1, 32>}, {transform_indices = @transform_7, window_bounds = array<i64: 64, 32>}]} {
    %c0 = arith.constant 0 : index
    %c0_0 = arith.constant 0 : index
    %0 = vector.load %arg1[%c0, %c0_0] : memref<64x32xf32, #tpu.memory_space<vmem>>, vector<64x32xf32>
    %cst = arith.constant dense<0.000000e+00> : vector<64xf32>
    %1 = vector.multi_reduction <add>, %0, %cst [1] : vector<64x32xf32> to vector<64xf32>
    %2 = vector.shape_cast %1 : vector<64xf32> to vector<64x1xf32>
    %cst_1 = arith.constant 3.200000e+01 : f32
    %3 = vector.broadcast %cst_1 : f32 to vector<64x1xf32>
    %4 = arith.divf %2, %3 : vector<64x1xf32>
    %5 = vector.broadcast %4 : vector<64x1xf32> to vector<64x32xf32>
    %6 = arith.subf %0, %5 : vector<64x32xf32>
    %7 = arith.mulf %6, %6 : vector<64x32xf32>
    %cst_2 = arith.constant dense<0.000000e+00> : vector<64xf32>
    %8 = vector.multi_reduction <add>, %7, %cst_2 [1] : vector<64x32xf32> to vector<64xf32>
    %9 = vector.shape_cast %8 : vector<64xf32> to vector<64x1xf32>
    %cst_3 = arith.constant 3.200000e+01 : f32
    %10 = vector.broadcast %cst_3 : f32 to vector<64x1xf32>
    %11 = arith.divf %9, %10 : vector<64x1xf32>
    %12 = vector.broadcast %4 : vector<64x1xf32> to vector<64x32xf32>
    %13 = arith.subf %0, %12 : vector<64x32xf32>
    %cst_4 = arith.constant 9.99999974E-6 : f32
    %14 = vector.broadcast %cst_4 : f32 to vector<64x1xf32>
    %15 = arith.addf %11, %14 : vector<64x1xf32>
    %16 = math.rsqrt %15 : vector<64x1xf32>
    %17 = vector.broadcast %16 : vector<64x1xf32> to vector<64x32xf32>
    %18 = arith.mulf %13, %17 : vector<64x32xf32>
    %c0_5 = arith.constant 0 : index
    %c0_6 = arith.constant 0 : index
    %19 = vector.load %arg2[%c0_5, %c0_6] : memref<1x32xf32, #tpu.memory_space<vmem>>, vector<1x32xf32>
    %20 = vector.broadcast %19 : vector<1x32xf32> to vector<64x32xf32>
    %21 = arith.mulf %18, %20 : vector<64x32xf32>
    %c0_7 = arith.constant 0 : index
    %c0_8 = arith.constant 0 : index
    %22 = vector.load %arg3[%c0_7, %c0_8] : memref<1x32xf32, #tpu.memory_space<vmem>>, vector<1x32xf32>
    %23 = vector.broadcast %22 : vector<1x32xf32> to vector<64x32xf32>
    %24 = arith.addf %21, %23 : vector<64x32xf32>
    %c0_9 = arith.constant 0 : index
    %c0_10 = arith.constant 0 : index
    %25 = vector.load %arg4[%c0_9, %c0_10] : memref<32x96xf32, #tpu.memory_space<vmem>>, vector<32x96xf32>
    %cst_11 = arith.constant dense<0.000000e+00> : vector<64x96xf32>
    %26 = tpu.matmul %24, %25, %cst_11 {dimension_numbers = #tpu.dot_dimension_numbers<[1], [0], [0], [1], [0, 0, 1, 1], [], []>} : vector<64x32xf32>, vector<32x96xf32>, vector<64x96xf32> -> vector<64x96xf32>
    %c0_12 = arith.constant 0 : index
    %c0_13 = arith.constant 0 : index
    %27 = vector.load %arg5[%c0_12, %c0_13] : memref<1x96xf32, #tpu.memory_space<vmem>>, vector<1x96xf32>
    %28 = vector.broadcast %27 : vector<1x96xf32> to vector<64x96xf32>
    %29 = arith.addf %26, %28 : vector<64x96xf32>
    %30 = vector.extract_strided_slice %29 {offsets = [0, 0], sizes = [64, 32], strides = [1, 1]} : vector<64x96xf32> to vector<64x32xf32>
    %31 = vector.extract_strided_slice %29 {offsets = [0, 32], sizes = [64, 32], strides = [1, 1]} : vector<64x96xf32> to vector<64x32xf32>
    %32 = vector.extract_strided_slice %29 {offsets = [0, 64], sizes = [64, 32], strides = [1, 1]} : vector<64x96xf32> to vector<64x32xf32>
    %33 = vector.extract_strided_slice %30 {offsets = [0, 0], sizes = [64, 8], strides = [1, 1]} : vector<64x32xf32> to vector<64x8xf32>
    %34 = vector.extract_strided_slice %30 {offsets = [0, 8], sizes = [64, 8], strides = [1, 1]} : vector<64x32xf32> to vector<64x8xf32>
    %35 = vector.extract_strided_slice %30 {offsets = [0, 16], sizes = [64, 8], strides = [1, 1]} : vector<64x32xf32> to vector<64x8xf32>
    %36 = vector.extract_strided_slice %30 {offsets = [0, 24], sizes = [64, 8], strides = [1, 1]} : vector<64x32xf32> to vector<64x8xf32>
    %37 = vector.shape_cast %33 : vector<64x8xf32> to vector<1x64x8xf32>
    %38 = vector.shape_cast %34 : vector<64x8xf32> to vector<1x64x8xf32>
    %39 = vector.shape_cast %35 : vector<64x8xf32> to vector<1x64x8xf32>
    %40 = vector.shape_cast %36 : vector<64x8xf32> to vector<1x64x8xf32>
    %41 = tpu.concatenate %37, %38, %39, %40 in 0 : vector<1x64x8xf32>, vector<1x64x8xf32>, vector<1x64x8xf32>, vector<1x64x8xf32> -> vector<4x64x8xf32>
    %42 = vector.shape_cast %41 : vector<4x64x8xf32> to vector<32x8x8xf32>
    %cst_14 = arith.constant 0.353553385 : f32
    %43 = vector.broadcast %cst_14 : f32 to vector<32x8x8xf32>
    %44 = arith.mulf %42, %43 : vector<32x8x8xf32>
    %45 = vector.extract_strided_slice %31 {offsets = [0, 0], sizes = [64, 8], strides = [1, 1]} : vector<64x32xf32> to vector<64x8xf32>
    %46 = vector.extract_strided_slice %31 {offsets = [0, 8], sizes = [64, 8], strides = [1, 1]} : vector<64x32xf32> to vector<64x8xf32>
    %47 = vector.extract_strided_slice %31 {offsets = [0, 16], sizes = [64, 8], strides = [1, 1]} : vector<64x32xf32> to vector<64x8xf32>
    %48 = vector.extract_strided_slice %31 {offsets = [0, 24], sizes = [64, 8], strides = [1, 1]} : vector<64x32xf32> to vector<64x8xf32>
    %49 = vector.shape_cast %45 : vector<64x8xf32> to vector<1x64x8xf32>
    %50 = vector.shape_cast %46 : vector<64x8xf32> to vector<1x64x8xf32>
    %51 = vector.shape_cast %47 : vector<64x8xf32> to vector<1x64x8xf32>
    %52 = vector.shape_cast %48 : vector<64x8xf32> to vector<1x64x8xf32>
    %53 = tpu.concatenate %49, %50, %51, %52 in 0 : vector<1x64x8xf32>, vector<1x64x8xf32>, vector<1x64x8xf32>, vector<1x64x8xf32> -> vector<4x64x8xf32>
    %54 = vector.shape_cast %53 : vector<4x64x8xf32> to vector<32x8x8xf32>
    %55 = vector.extract_strided_slice %32 {offsets = [0, 0], sizes = [64, 8], strides = [1, 1]} : vector<64x32xf32> to vector<64x8xf32>
    %56 = vector.extract_strided_slice %32 {offsets = [0, 8], sizes = [64, 8], strides = [1, 1]} : vector<64x32xf32> to vector<64x8xf32>
    %57 = vector.extract_strided_slice %32 {offsets = [0, 16], sizes = [64, 8], strides = [1, 1]} : vector<64x32xf32> to vector<64x8xf32>
    %58 = vector.extract_strided_slice %32 {offsets = [0, 24], sizes = [64, 8], strides = [1, 1]} : vector<64x32xf32> to vector<64x8xf32>
    %59 = vector.shape_cast %55 : vector<64x8xf32> to vector<1x64x8xf32>
    %60 = vector.shape_cast %56 : vector<64x8xf32> to vector<1x64x8xf32>
    %61 = vector.shape_cast %57 : vector<64x8xf32> to vector<1x64x8xf32>
    %62 = vector.shape_cast %58 : vector<64x8xf32> to vector<1x64x8xf32>
    %63 = tpu.concatenate %59, %60, %61, %62 in 0 : vector<1x64x8xf32>, vector<1x64x8xf32>, vector<1x64x8xf32>, vector<1x64x8xf32> -> vector<4x64x8xf32>
    %64 = vector.shape_cast %63 : vector<4x64x8xf32> to vector<32x8x8xf32>
    "tpu.trace_start"() <{level = 10 : i32, message = "bqd,bkd->bqk"}> : () -> ()
    %cst_15 = arith.constant dense<0.000000e+00> : vector<32x8x8xf32>
    %65 = tpu.matmul %44, %54, %cst_15 {dimension_numbers = #tpu.dot_dimension_numbers<[2], [2], [1], [1], [0, 0, 0, 1, 1, 1], [0], [0]>} : vector<32x8x8xf32>, vector<32x8x8xf32>, vector<32x8x8xf32> -> vector<32x8x8xf32>
    "tpu.trace_stop"() : () -> ()
    %cst_16 = arith.constant dense<0xFF800000> : vector<32x8xf32>
    %66 = vector.multi_reduction <maximumf>, %65, %cst_16 [2] : vector<32x8x8xf32> to vector<32x8xf32>
    %67 = vector.shape_cast %66 : vector<32x8xf32> to vector<32x8x1xf32>
    %68 = vector.broadcast %67 : vector<32x8x1xf32> to vector<32x8x8xf32>
    %69 = arith.subf %65, %68 : vector<32x8x8xf32>
    %70 = math.exp %69 : vector<32x8x8xf32>
    %cst_17 = arith.constant dense<0.000000e+00> : vector<32x8xf32>
    %71 = vector.multi_reduction <add>, %70, %cst_17 [2] : vector<32x8x8xf32> to vector<32x8xf32>
    %72 = vector.shape_cast %71 : vector<32x8xf32> to vector<32x8x1xf32>
    %73 = tpu.reciprocal %72 : vector<32x8x1xf32> -> vector<32x8x1xf32>
    %74 = vector.broadcast %73 : vector<32x8x1xf32> to vector<32x8x8xf32>
    %75 = arith.mulf %70, %74 : vector<32x8x8xf32>
    "tpu.trace_start"() <{level = 10 : i32, message = "bqk,bkd->bqd"}> : () -> ()
    %cst_18 = arith.constant dense<0.000000e+00> : vector<32x8x8xf32>
    %76 = tpu.matmul %75, %64, %cst_18 {dimension_numbers = #tpu.dot_dimension_numbers<[2], [1], [1], [2], [0, 0, 0, 1, 1, 2], [0], [0]>} : vector<32x8x8xf32>, vector<32x8x8xf32>, vector<32x8x8xf32> -> vector<32x8x8xf32>
    "tpu.trace_stop"() : () -> ()
    %77 = vector.shape_cast %76 : vector<32x8x8xf32> to vector<4x64x8xf32>
    %78 = vector.extract_strided_slice %77 {offsets = [0, 0, 0], sizes = [1, 64, 8], strides = [1, 1, 1]} : vector<4x64x8xf32> to vector<1x64x8xf32>
    %79 = vector.shape_cast %78 : vector<1x64x8xf32> to vector<64x8xf32>
    %80 = vector.extract_strided_slice %77 {offsets = [1, 0, 0], sizes = [1, 64, 8], strides = [1, 1, 1]} : vector<4x64x8xf32> to vector<1x64x8xf32>
    %81 = vector.shape_cast %80 : vector<1x64x8xf32> to vector<64x8xf32>
    %82 = vector.extract_strided_slice %77 {offsets = [2, 0, 0], sizes = [1, 64, 8], strides = [1, 1, 1]} : vector<4x64x8xf32> to vector<1x64x8xf32>
    %83 = vector.shape_cast %82 : vector<1x64x8xf32> to vector<64x8xf32>
    %84 = vector.extract_strided_slice %77 {offsets = [3, 0, 0], sizes = [1, 64, 8], strides = [1, 1, 1]} : vector<4x64x8xf32> to vector<1x64x8xf32>
    %85 = vector.shape_cast %84 : vector<1x64x8xf32> to vector<64x8xf32>
    %86 = tpu.concatenate %79, %81, %83, %85 in 1 : vector<64x8xf32>, vector<64x8xf32>, vector<64x8xf32>, vector<64x8xf32> -> vector<64x32xf32>
    %c0_19 = arith.constant 0 : index
    %c0_20 = arith.constant 0 : index
    %87 = vector.load %arg6[%c0_19, %c0_20] : memref<32x32xf32, #tpu.memory_space<vmem>>, vector<32x32xf32>
    %cst_21 = arith.constant dense<0.000000e+00> : vector<64x32xf32>
    %88 = tpu.matmul %86, %87, %cst_21 {dimension_numbers = #tpu.dot_dimension_numbers<[1], [0], [0], [1], [0, 0, 1, 1], [], []>} : vector<64x32xf32>, vector<32x32xf32>, vector<64x32xf32> -> vector<64x32xf32>
    %c0_22 = arith.constant 0 : index
    %c0_23 = arith.constant 0 : index
    %89 = vector.load %arg7[%c0_22, %c0_23] : memref<1x32xf32, #tpu.memory_space<vmem>>, vector<1x32xf32>
    %90 = vector.broadcast %89 : vector<1x32xf32> to vector<64x32xf32>
    %91 = arith.addf %88, %90 : vector<64x32xf32>
    %c0_24 = arith.constant 0 : index
    %c0_25 = arith.constant 0 : index
    %92 = vector.load %arg8[%c0_24, %c0_25] : memref<64x32xf32, #tpu.memory_space<vmem>>, vector<64x32xf32>
    tpu.vector_store %arg8[%c0_24, %c0_25], %91 {strides = array<i32>} : memref<64x32xf32, #tpu.memory_space<vmem>>, vector<64x32xf32>,
    return
  }
  func.func @transform_0(%arg0: i32) -> (i32, i32) {
    %c0_i32 = arith.constant 0 : i32
    %c0_i32_0 = arith.constant 0 : i32
    return %arg0, %c0_i32 : i32, i32
  }
  func.func @transform_1(%arg0: i32) -> (i32, i32) {
    %c0_i32 = arith.constant 0 : i32
    %c0_i32_0 = arith.constant 0 : i32
    %c0_i32_1 = arith.constant 0 : i32
    return %c0_i32, %c0_i32_0 : i32, i32
  }
  func.func @transform_2(%arg0: i32) -> (i32, i32) {
    %c0_i32 = arith.constant 0 : i32
    %c0_i32_0 = arith.constant 0 : i32
    %c0_i32_1 = arith.constant 0 : i32
    return %c0_i32, %c0_i32_0 : i32, i32
  }
  func.func @transform_3(%arg0: i32) -> (i32, i32) {
    %c0_i32 = arith.constant 0 : i32
    %c0_i32_0 = arith.constant 0 : i32
    %c0_i32_1 = arith.constant 0 : i32
    return %c0_i32, %c0_i32_0 : i32, i32
  }
  func.func @transform_4(%arg0: i32) -> (i32, i32) {
    %c0_i32 = arith.constant 0 : i32
    %c0_i32_0 = arith.constant 0 : i32
    %c0_i32_1 = arith.constant 0 : i32
    return %c0_i32, %c0_i32_0 : i32, i32
  }
  func.func @transform_5(%arg0: i32) -> (i32, i32) {
    %c0_i32 = arith.constant 0 : i32
    %c0_i32_0 = arith.constant 0 : i32
    %c0_i32_1 = arith.constant 0 : i32
    return %c0_i32, %c0_i32_0 : i32, i32
  }
  func.func @transform_6(%arg0: i32) -> (i32, i32) {
    %c0_i32 = arith.constant 0 : i32
    %c0_i32_0 = arith.constant 0 : i32
    %c0_i32_1 = arith.constant 0 : i32
    return %c0_i32, %c0_i32_0 : i32, i32
  }
  func.func @transform_7(%arg0: i32) -> (i32, i32) {
    %c0_i32 = arith.constant 0 : i32
    %c0_i32_0 = arith.constant 0 : i32
    return %arg0, %c0_i32 : i32, i32
  }
}

</mosaic_0001>

<llo_original>
// kernel: tpu_custom_call.1
$region0: #{tpu_custom_call.1}
  #allocation0 [shape = 'u32[]', space=smem, size = 0x4, offset = 0x4, fixed_abs, tag = 'smem constant byte address 0x4 - core index']
  #allocation1 [shape = 'u32[144,128]{1,0:T(1,128)}', space=vmem, size = 0x12000, scoped, tag = 'internal scratch']
  %s0 = inlined_call_operand.vmem [shape: f32[64,32], index: 0, kind: input, shape index: {}]
  %s1 = inlined_call_operand.vmem [shape: f32[1,32], index: 1, kind: input, shape index: {}]
  %s2 = inlined_call_operand.vmem [shape: f32[1,32], index: 2, kind: input, shape index: {}]
  %s3 = inlined_call_operand.vmem [shape: f32[32,96], index: 3, kind: input, shape index: {}]
  %s4 = inlined_call_operand.vmem [shape: f32[1,96], index: 4, kind: input, shape index: {}]
  %s5 = inlined_call_operand.vmem [shape: f32[32,32], index: 5, kind: input, shape index: {}]
  %s6 = inlined_call_operand.vmem [shape: f32[1,32], index: 6, kind: input, shape index: {}]
  %s7 = inlined_call_operand.vmem [shape: f32[64,32], index: 7, kind: output, shape index: {}]
  %s8 = sld [smem:[#allocation0]]
  $region38: #{tpu_custom_call.1} parent=0
    _
  %s10 = ssub.s32 1, %s8
  %s11 = scalar_select 0, %s10, %s8
  // Predicated region
  $region2: #{tpu_custom_call.1} parent=0 // pred_check
    _
  $region3: #{tpu_custom_call.1} parent=0 // pred_check_branch
    %13 = sbr.rel (0) target = $region5
  $region4: #{tpu_custom_call.1} parent=0 // pred_region
    _
  $region5: #{tpu_custom_call.1} parent=0 // pred_fallthru
    _
  // Predicated region
  $region6: #{tpu_custom_call.1} parent=0 // pred_check
    _
  $region7: #{tpu_custom_call.1} parent=0 // pred_check_branch
    %15 = sbr.rel (0) target = $region9
  $region8: #{tpu_custom_call.1} parent=0 // pred_region
    _
  $region9: #{tpu_custom_call.1} parent=0 // pred_fallthru
    _
  // Predicated region
  $region10: #{tpu_custom_call.1} parent=0 // pred_check
    _
  $region11: #{tpu_custom_call.1} parent=0 // pred_check_branch
    %17 = sbr.rel (0) target = $region13
  $region12: #{tpu_custom_call.1} parent=0 // pred_region
    _
  $region13: #{tpu_custom_call.1} parent=0 // pred_fallthru
    _
  // Predicated region
  $region14: #{tpu_custom_call.1} parent=0 // pred_check
    _
  $region15: #{tpu_custom_call.1} parent=0 // pred_check_branch
    %19 = sbr.rel (0) target = $region17
  $region16: #{tpu_custom_call.1} parent=0 // pred_region
    _
  $region17: #{tpu_custom_call.1} parent=0 // pred_fallthru
    _
  // Predicated region
  $region18: #{tpu_custom_call.1} parent=0 // pred_check
    _
  $region19: #{tpu_custom_call.1} parent=0 // pred_check_branch
    %21 = sbr.rel (0) target = $region21
  $region20: #{tpu_custom_call.1} parent=0 // pred_region
    _
  $region21: #{tpu_custom_call.1} parent=0 // pred_fallthru
    _
  // Predicated region
  $region22: #{tpu_custom_call.1} parent=0 // pred_check
    _
  $region23: #{tpu_custom_call.1} parent=0 // pred_check_branch
    %23 = sbr.rel (0) target = $region25
  $region24: #{tpu_custom_call.1} parent=0 // pred_region
    _
  $region25: #{tpu_custom_call.1} parent=0 // pred_fallthru
    _
  // Predicated region
  $region26: #{tpu_custom_call.1} parent=0 // pred_check
    _
  $region27: #{tpu_custom_call.1} parent=0 // pred_check_branch
    %25 = sbr.rel (0) target = $region29
  $region28: #{tpu_custom_call.1} parent=0 // pred_region
    _
  $region29: #{tpu_custom_call.1} parent=0 // pred_fallthru
    _
  %v26 = vld [vmem:[%s0] sm:$0xff]
  %v27 = vld [vmem:[%s0 + $0x8] sm:$0xff]
  %v28 = vld [vmem:[%s0 + $0x10] sm:$0xff]
  %v29 = vld [vmem:[%s0 + $0x18] sm:$0xff]
  %v30 = vld [vmem:[%s0 + $0x20] sm:$0xff]
  %v31 = vld [vmem:[%s0 + $0x28] sm:$0xff]
  %v32 = vld [vmem:[%s0 + $0x30] sm:$0xff]
  %v33 = vld [vmem:[%s0 + $0x38] sm:$0xff]
  %vm34 = vcmask 261120
  %v35 = vsel %vm34, %v26, 0.0
  %36 = vadd.xlane.f32.xlu0 %v35
  %v37 = vpop.xlane.xlu0 %36
  %v38 = vsel %vm34, %v27, 0.0
  %39 = vadd.xlane.f32.xlu0 %v38
  %v40 = vpop.xlane.xlu0 %39
  %v41 = vsel %vm34, %v28, 0.0
  %42 = vadd.xlane.f32.xlu0 %v41
  %v43 = vpop.xlane.xlu0 %42
  %v44 = vsel %vm34, %v29, 0.0
  %45 = vadd.xlane.f32.xlu0 %v44
  %v46 = vpop.xlane.xlu0 %45
  %v47 = vsel %vm34, %v30, 0.0
  %48 = vadd.xlane.f32.xlu0 %v47
  %v49 = vpop.xlane.xlu0 %48
  %v50 = vsel %vm34, %v31, 0.0
  %51 = vadd.xlane.f32.xlu0 %v50
  %v52 = vpop.xlane.xlu0 %51
  %v53 = vsel %vm34, %v32, 0.0
  %54 = vadd.xlane.f32.xlu0 %v53
  %v55 = vpop.xlane.xlu0 %54
  %v56 = vsel %vm34, %v33, 0.0
  %57 = vadd.xlane.f32.xlu0 %v56
  %v58 = vpop.xlane.xlu0 %57
  %v59 = vrcp.pop 32.0
  %v60 = vmul.f32 %v37, %v59
  %v61 = vmul.f32 %v40, %v59
  %v62 = vmul.f32 %v43, %v59
  %v63 = vmul.f32 %v46, %v59
  %v64 = vmul.f32 %v49, %v59
  %v65 = vmul.f32 %v52, %v59
  %v66 = vmul.f32 %v55, %v59
  %v67 = vmul.f32 %v58, %v59
  %v68 = vsub.f32 %v26, %v60
  %v69 = vsub.f32 %v27, %v61
  %v70 = vsub.f32 %v28, %v62
  %v71 = vsub.f32 %v29, %v63
  %v72 = vsub.f32 %v30, %v64
  %v73 = vsub.f32 %v31, %v65
  %v74 = vsub.f32 %v32, %v66
  %v75 = vsub.f32 %v33, %v67
  %v76 = vmul.f32 %v68, %v68
  %v77 = vmul.f32 %v69, %v69
  %v78 = vmul.f32 %v70, %v70
  %v79 = vmul.f32 %v71, %v71
  %v80 = vmul.f32 %v72, %v72
  %v81 = vmul.f32 %v73, %v73
  %v82 = vmul.f32 %v74, %v74
  %v83 = vmul.f32 %v75, %v75
  %v84 = vsel %vm34, %v76, 0.0
  %85 = vadd.xlane.f32.xlu0 %v84
  %v86 = vpop.xlane.xlu0 %85
  %v87 = vsel %vm34, %v77, 0.0
  %88 = vadd.xlane.f32.xlu0 %v87
  %v89 = vpop.xlane.xlu0 %88
  %v90 = vsel %vm34, %v78, 0.0
  %91 = vadd.xlane.f32.xlu0 %v90
  %v92 = vpop.xlane.xlu0 %91
  %v93 = vsel %vm34, %v79, 0.0
  %94 = vadd.xlane.f32.xlu0 %v93
  %v95 = vpop.xlane.xlu0 %94
  %v96 = vsel %vm34, %v80, 0.0
  %97 = vadd.xlane.f32.xlu0 %v96
  %v98 = vpop.xlane.xlu0 %97
  %v99 = vsel %vm34, %v81, 0.0
  %100 = vadd.xlane.f32.xlu0 %v99
  %v101 = vpop.xlane.xlu0 %100
  %v102 = vsel %vm34, %v82, 0.0
  %103 = vadd.xlane.f32.xlu0 %v102
  %v104 = vpop.xlane.xlu0 %103
  %v105 = vsel %vm34, %v83, 0.0
  %106 = vadd.xlane.f32.xlu0 %v105
  %v107 = vpop.xlane.xlu0 %106
  %v108 = vmul.f32 %v86, %v59
  %v109 = vmul.f32 %v89, %v59
  %v110 = vmul.f32 %v92, %v59
  %v111 = vmul.f32 %v95, %v59
  %v112 = vmul.f32 %v98, %v59
  %v113 = vmul.f32 %v101, %v59
  %v114 = vmul.f32 %v104, %v59
  %v115 = vmul.f32 %v107, %v59
  %v116 = vadd.f32 %v108, 1e-05
  %v117 = vadd.f32 %v109, 1e-05
  %v118 = vadd.f32 %v110, 1e-05
  %v119 = vadd.f32 %v111, 1e-05
  %v120 = vadd.f32 %v112, 1e-05
  %v121 = vadd.f32 %v113, 1e-05
  %v122 = vadd.f32 %v114, 1e-05
  %v123 = vadd.f32 %v115, 1e-05
  %v124 = vrsqrt.pop %v116
  %v125 = vrsqrt.pop %v117
  %v126 = vrsqrt.pop %v118
  %v127 = vrsqrt.pop %v119
  %v128 = vrsqrt.pop %v120
  %v129 = vrsqrt.pop %v121
  %v130 = vrsqrt.pop %v122
  %v131 = vrsqrt.pop %v123
  %v132 = vmul.f32 %v68, %v124
  %v133 = vmul.f32 %v69, %v125
  %v134 = vmul.f32 %v70, %v126
  %v135 = vmul.f32 %v71, %v127
  %v136 = vmul.f32 %v72, %v128
  %v137 = vmul.f32 %v73, %v129
  %v138 = vmul.f32 %v74, %v130
  %v139 = vmul.f32 %v75, %v131
  %v140 = vld [vmem:[%s1] sm:$0x1]
  %v142 = vlaneseq
  %v143 = vshrl.u32 %v142, 7
  %v144 = vsub.s32 0, %v143
  %v145 = vrot.slane %v140, %v144
  %v147 = vmul.f32 %v132, %v145
  %v148 = vmul.f32 %v133, %v145
  %v149 = vmul.f32 %v134, %v145
  %v150 = vmul.f32 %v135, %v145
  %v151 = vmul.f32 %v136, %v145
  %v152 = vmul.f32 %v137, %v145
  %v153 = vmul.f32 %v138, %v145
  %v154 = vmul.f32 %v139, %v145
  %v155 = vld [vmem:[%s2] sm:$0x1]
  %v157 = vlaneseq
  %v158 = vshrl.u32 %v157, 7
  %v159 = vsub.s32 0, %v158
  %v160 = vrot.slane %v155, %v159
  %v162 = vadd.f32 %v147, %v160
  %v163 = vadd.f32 %v148, %v160
  %v164 = vadd.f32 %v149, %v160
  %v165 = vadd.f32 %v150, %v160
  %v166 = vadd.f32 %v151, %v160
  %v167 = vadd.f32 %v152, %v160
  %v168 = vadd.f32 %v153, %v160
  %v169 = vadd.f32 %v154, %v160
  %v170 = vld [vmem:[%s3] sm:$0xff]
  %v171 = vld [vmem:[%s3 + $0x8] sm:$0xff]
  %v172 = vld [vmem:[%s3 + $0x10] sm:$0xff]
  %v173 = vld [vmem:[%s3 + $0x18] sm:$0xff]
  %v174 = vld [vmem:[%s4] sm:$0x1]
  %v176 = vlaneseq
  %v177 = vshrl.u32 %v176, 7
  %v178 = vsub.s32 0, %v177
  %v179 = vrot.slane %v174, %v178
  %v182 = vsel %vm34, %v162, 0
  %v185 = vsel %vm34, %v163, 0
  %v188 = vsel %vm34, %v164, 0
  %v191 = vsel %vm34, %v165, 0
  %v194 = vsel %vm34, %v166, 0
  %v197 = vsel %vm34, %v167, 0
  %v200 = vsel %vm34, %v168, 0
  %v203 = vsel %vm34, %v169, 0
  %205 = vmatprep.subr.mxu0 0.0
  %206 = vmatpush1.msra.mxu0 %v170
  %207 = vmatprep.subr.mxu0 0.0
  %208 = vmatpush1.msra.mxu0 %v171
  %209 = vmatprep.subr.mxu0 0.0
  %210 = vmatpush1.msra.mxu0 %v172
  %211 = vmatprep.subr.mxu0 0.0
  %212 = vmatpush1.msra.mxu0 %v173
  %213 = vmatprep.subr.mxu0 0.0
  %214 = vmatpush1.msra.mxu0 0.0
  %215 = vmatprep.subr.mxu0 0.0
  %216 = vmatpush1.msra.mxu0 0.0
  %217 = vmatprep.subr.mxu0 0.0
  %218 = vmatpush1.msra.mxu0 0.0
  %219 = vmatprep.subr.mxu0 0.0
  %220 = vmatpush1.msra.mxu0 0.0
  %221 = vmatprep.subr.mxu0 0.0
  %222 = vmatpush1.msra.mxu0 0.0
  %223 = vmatprep.subr.mxu0 0.0
  %224 = vmatpush1.msra.mxu0 0.0
  %225 = vmatprep.subr.mxu0 0.0
  %226 = vmatpush1.msra.mxu0 0.0
  %227 = vmatprep.subr.mxu0 0.0
  %228 = vmatpush1.msra.mxu0 0.0
  %229 = vmatprep.subr.mxu0 0.0
  %230 = vmatpush1.msra.mxu0 0.0
  %231 = vmatprep.subr.mxu0 0.0
  %232 = vmatpush1.msra.mxu0 0.0
  %233 = vmatprep.subr.mxu0 0.0
  %234 = vmatpush1.msra.mxu0 0.0
  %235 = vmatprep.subr.mxu0 0.0
  %236 = vmatpush1.msra.mxu0 0.0
  %237 = vmatprep.subr.mxu0 0.0
  %238 = vmatpush1.msra.mxu0 0.0
  %239 = vmatprep.subr.mxu0 0.0
  %240 = vmatpush1.msra.mxu0 0.0
  %241 = vmatprep.subr.mxu0 0.0
  %242 = vmatpush1.msra.mxu0 0.0
  %243 = vmatprep.subr.mxu0 0.0
  %244 = vmatpush1.msra.mxu0 0.0
  %245 = vmatprep.subr.mxu0 0.0
  %246 = vmatpush1.msra.mxu0 0.0
  %247 = vmatprep.subr.mxu0 0.0
  %248 = vmatpush1.msra.mxu0 0.0
  %249 = vmatprep.subr.mxu0 0.0
  %250 = vmatpush1.msra.mxu0 0.0
  %251 = vmatprep.subr.mxu0 0.0
  %252 = vmatpush1.msra.mxu0 0.0
  %253 = vmatprep.subr.mxu0 0.0
  %254 = vmatpush1.msra.mxu0 0.0
  %255 = vmatprep.subr.mxu0 0.0
  %256 = vmatpush1.msra.mxu0 0.0
  %257 = vmatprep.subr.mxu0 0.0
  %258 = vmatpush1.msra.mxu0 0.0
  %259 = vmatprep.subr.mxu0 0.0
  %260 = vmatpush1.msra.mxu0 0.0
  %261 = vmatprep.subr.mxu0 0.0
  %262 = vmatpush1.msra.mxu0 0.0
  %263 = vmatprep.subr.mxu0 0.0
  %264 = vmatpush1.msra.mxu0 0.0
  %265 = vmatprep.subr.mxu0 0.0
  %266 = vmatpush1.msra.mxu0 0.0
  %267 = vmatprep.subr.mxu0 0.0
  %268 = vmatpush1.msra.mxu0 0.0
  %269 = vmatprep.mubr.f32.mxu0 0.0
  %270 = vmatmul.mubr.f32.gmra.mrb[0].mxu0 %v182
  %v271 = vpop.f32.mrb[0].mxu0
  %v272 = vadd.f32 %v179, %v271
  %v273 = vpop.f32.mrb[0].mxu0
  %274 = vmatprep.mubr.f32.mxu0 0.0
  %275 = vmatmul.mubr.f32.gmra.mrb[0].mxu0 %v185
  %v276 = vpop.f32.mrb[0].mxu0
  %v277 = vadd.f32 %v179, %v276
  %v278 = vpop.f32.mrb[0].mxu0
  %279 = vmatprep.mubr.f32.mxu0 0.0
  %280 = vmatmul.mubr.f32.gmra.mrb[0].mxu0 %v188
  %v281 = vpop.f32.mrb[0].mxu0
  %v282 = vadd.f32 %v179, %v281
  %v283 = vpop.f32.mrb[0].mxu0
  %284 = vmatprep.mubr.f32.mxu0 0.0
  %285 = vmatmul.mubr.f32.gmra.mrb[0].mxu0 %v191
  %v286 = vpop.f32.mrb[0].mxu0
  %v287 = vadd.f32 %v179, %v286
  %v288 = vpop.f32.mrb[0].mxu0
  %289 = vmatprep.mubr.f32.mxu0 0.0
  %290 = vmatmul.mubr.f32.gmra.mrb[0].mxu0 %v194
  %v291 = vpop.f32.mrb[0].mxu0
  %v292 = vadd.f32 %v179, %v291
  %v293 = vpop.f32.mrb[0].mxu0
  %294 = vmatprep.mubr.f32.mxu0 0.0
  %295 = vmatmul.mubr.f32.gmra.mrb[0].mxu0 %v197
  %v296 = vpop.f32.mrb[0].mxu0
  %v297 = vadd.f32 %v179, %v296
  %v298 = vpop.f32.mrb[0].mxu0
  %299 = vmatprep.mubr.f32.mxu0 0.0
  %300 = vmatmul.mubr.f32.gmra.mrb[0].mxu0 %v200
  %v301 = vpop.f32.mrb[0].mxu0
  %v302 = vadd.f32 %v179, %v301
  %v303 = vpop.f32.mrb[0].mxu0
  %304 = vmatprep.mubr.f32.mxu0 0.0
  %305 = vmatmul.mubr.f32.gmra.mrb[0].mxu0 %v203
  %v306 = vpop.f32.mrb[0].mxu0
  %v307 = vadd.f32 %v179, %v306
  %v308 = vpop.f32.mrb[0].mxu0
  %309 = vdwg.mxu0
  %318 = vrot.lane.b32.xlu0 %v272, 120
  %v319 = vpop.permute.xlu0 %318
  %320 = vrot.lane.b32.xlu0 %v277, 120
  %v321 = vpop.permute.xlu0 %320
  %322 = vrot.lane.b32.xlu0 %v282, 120
  %v323 = vpop.permute.xlu0 %322
  %324 = vrot.lane.b32.xlu0 %v287, 120
  %v325 = vpop.permute.xlu0 %324
  %326 = vrot.lane.b32.xlu0 %v292, 120
  %v327 = vpop.permute.xlu0 %326
  %328 = vrot.lane.b32.xlu0 %v297, 120
  %v329 = vpop.permute.xlu0 %328
  %330 = vrot.lane.b32.xlu0 %v302, 120
  %v331 = vpop.permute.xlu0 %330
  %332 = vrot.lane.b32.xlu0 %v307, 120
  %v333 = vpop.permute.xlu0 %332
  %342 = vrot.lane.b32.xlu0 %v272, 112
  %v343 = vpop.permute.xlu0 %342
  %344 = vrot.lane.b32.xlu0 %v277, 112
  %v345 = vpop.permute.xlu0 %344
  %346 = vrot.lane.b32.xlu0 %v282, 112
  %v347 = vpop.permute.xlu0 %346
  %348 = vrot.lane.b32.xlu0 %v287, 112
  %v349 = vpop.permute.xlu0 %348
  %350 = vrot.lane.b32.xlu0 %v292, 112
  %v351 = vpop.permute.xlu0 %350
  %352 = vrot.lane.b32.xlu0 %v297, 112
  %v353 = vpop.permute.xlu0 %352
  %354 = vrot.lane.b32.xlu0 %v302, 112
  %v355 = vpop.permute.xlu0 %354
  %356 = vrot.lane.b32.xlu0 %v307, 112
  %v357 = vpop.permute.xlu0 %356
  %366 = vrot.lane.b32.xlu0 %v272, 104
  %v367 = vpop.permute.xlu0 %366
  %368 = vrot.lane.b32.xlu0 %v277, 104
  %v369 = vpop.permute.xlu0 %368
  %370 = vrot.lane.b32.xlu0 %v282, 104
  %v371 = vpop.permute.xlu0 %370
  %372 = vrot.lane.b32.xlu0 %v287, 104
  %v373 = vpop.permute.xlu0 %372
  %374 = vrot.lane.b32.xlu0 %v292, 104
  %v375 = vpop.permute.xlu0 %374
  %376 = vrot.lane.b32.xlu0 %v297, 104
  %v377 = vpop.permute.xlu0 %376
  %378 = vrot.lane.b32.xlu0 %v302, 104
  %v379 = vpop.permute.xlu0 %378
  %380 = vrot.lane.b32.xlu0 %v307, 104
  %v381 = vpop.permute.xlu0 %380
  %v390 = vmul.f32 %v272, 0.35355338
  %v391 = vmul.f32 %v277, 0.35355338
  %v392 = vmul.f32 %v282, 0.35355338
  %v393 = vmul.f32 %v287, 0.35355338
  %v394 = vmul.f32 %v292, 0.35355338
  %v395 = vmul.f32 %v297, 0.35355338
  %v396 = vmul.f32 %v302, 0.35355338
  %v397 = vmul.f32 %v307, 0.35355338
  %v398 = vmul.f32 %v319, 0.35355338
  %v399 = vmul.f32 %v321, 0.35355338
  %v400 = vmul.f32 %v323, 0.35355338
  %v401 = vmul.f32 %v325, 0.35355338
  %v402 = vmul.f32 %v327, 0.35355338
  %v403 = vmul.f32 %v329, 0.35355338
  %v404 = vmul.f32 %v331, 0.35355338
  %v405 = vmul.f32 %v333, 0.35355338
  %v406 = vmul.f32 %v343, 0.35355338
  %v407 = vmul.f32 %v345, 0.35355338
  %v408 = vmul.f32 %v347, 0.35355338
  %v409 = vmul.f32 %v349, 0.35355338
  %v410 = vmul.f32 %v351, 0.35355338
  %v411 = vmul.f32 %v353, 0.35355338
  %v412 = vmul.f32 %v355, 0.35355338
  %v413 = vmul.f32 %v357, 0.35355338
  %v414 = vmul.f32 %v367, 0.35355338
  %v415 = vmul.f32 %v369, 0.35355338
  %v416 = vmul.f32 %v371, 0.35355338
  %v417 = vmul.f32 %v373, 0.35355338
  %v418 = vmul.f32 %v375, 0.35355338
  %v419 = vmul.f32 %v377, 0.35355338
  %v420 = vmul.f32 %v379, 0.35355338
  %v421 = vmul.f32 %v381, 0.35355338
  %422 = vrot.lane.b32.xlu0 %v272, 96
  %v423 = vpop.permute.xlu0 %422
  %vm424 = vcmask 64512
  %v426 = vsel %vm424, %v390, 0
  %v428 = vsel %vm424, %v423, 0
  %430 = vmatprep.subr.mxu0 0.0
  %431 = vmatpush1.xpose.msra.mxu0 %v428
  %432 = vmatprep.subr.mxu0 0.0
  %433 = vmatpush1.xpose.msra.mxu0 0.0
  %434 = vmatprep.subr.mxu0 0.0
  %435 = vmatpush1.xpose.msra.mxu0 0.0
  %436 = vmatprep.subr.mxu0 0.0
  %437 = vmatpush1.xpose.msra.mxu0 0.0
  %438 = vmatprep.subr.mxu0 0.0
  %439 = vmatpush1.xpose.msra.mxu0 0.0
  %440 = vmatprep.subr.mxu0 0.0
  %441 = vmatpush1.xpose.msra.mxu0 0.0
  %442 = vmatprep.subr.mxu0 0.0
  %443 = vmatpush1.xpose.msra.mxu0 0.0
  %444 = vmatprep.subr.mxu0 0.0
  %445 = vmatpush1.xpose.msra.mxu0 0.0
  %446 = vmatprep.subr.mxu0 0.0
  %447 = vmatpush1.xpose.msra.mxu0 0.0
  %448 = vmatprep.subr.mxu0 0.0
  %449 = vmatpush1.xpose.msra.mxu0 0.0
  %450 = vmatprep.subr.mxu0 0.0
  %451 = vmatpush1.xpose.msra.mxu0 0.0
  %452 = vmatprep.subr.mxu0 0.0
  %453 = vmatpush1.xpose.msra.mxu0 0.0
  %454 = vmatprep.subr.mxu0 0.0
  %455 = vmatpush1.xpose.msra.mxu0 0.0
  %456 = vmatprep.subr.mxu0 0.0
  %457 = vmatpush1.xpose.msra.mxu0 0.0
  %458 = vmatprep.subr.mxu0 0.0
  %459 = vmatpush1.xpose.msra.mxu0 0.0
  %460 = vmatprep.subr.mxu0 0.0
  %461 = vmatpush1.xpose.msra.mxu0 0.0
  %462 = vmatprep.subr.mxu0 0.0
  %463 = vmatpush1.xpose.msra.mxu0 0.0
  %464 = vmatprep.subr.mxu0 0.0
  %465 = vmatpush1.xpose.msra.mxu0 0.0
  %466 = vmatprep.subr.mxu0 0.0
  %467 = vmatpush1.xpose.msra.mxu0 0.0
  %468 = vmatprep.subr.mxu0 0.0
  %469 = vmatpush1.xpose.msra.mxu0 0.0
  %470 = vmatprep.subr.mxu0 0.0
  %471 = vmatpush1.xpose.msra.mxu0 0.0
  %472 = vmatprep.subr.mxu0 0.0
  %473 = vmatpush1.xpose.msra.mxu0 0.0
  %474 = vmatprep.subr.mxu0 0.0
  %475 = vmatpush1.xpose.msra.mxu0 0.0
  %476 = vmatprep.subr.mxu0 0.0
  %477 = vmatpush1.xpose.msra.mxu0 0.0
  %478 = vmatprep.subr.mxu0 0.0
  %479 = vmatpush1.xpose.msra.mxu0 0.0
  %480 = vmatprep.subr.mxu0 0.0
  %481 = vmatpush1.xpose.msra.mxu0 0.0
  %482 = vmatprep.subr.mxu0 0.0
  %483 = vmatpush1.xpose.msra.mxu0 0.0
  %484 = vmatprep.subr.mxu0 0.0
  %485 = vmatpush1.xpose.msra.mxu0 0.0
  %486 = vmatprep.subr.mxu0 0.0
  %487 = vmatpush1.xpose.msra.mxu0 0.0
  %488 = vmatprep.subr.mxu0 0.0
  %489 = vmatpush1.xpose.msra.mxu0 0.0
  %490 = vmatprep.subr.mxu0 0.0
  %491 = vmatpush1.xpose.msra.mxu0 0.0
  %492 = vmatprep.subr.mxu0 0.0
  %493 = vmatpush1.xpose.msra.mxu0 0.0
  %494 = vmatprep.mubr.f32.mxu0 0.0
  %495 = vmatmul.mubr.f32.gmra.mrb[0].mxu0 %v426
  %v496 = vpop.f32.mrb[0].mxu0
  %v497 = vadd.f32 0.0, %v496
  %v498 = vpop.f32.mrb[0].mxu0
  %499 = vdwg.mxu0
  %500 = vrot.lane.b32.xlu0 %v277, 96
  %v501 = vpop.permute.xlu0 %500
  %v503 = vsel %vm424, %v391, 0
  %v505 = vsel %vm424, %v501, 0
  %507 = vmatprep.subr.mxu0 0.0
  %508 = vmatpush1.xpose.msra.mxu0 %v505
  %509 = vmatprep.subr.mxu0 0.0
  %510 = vmatpush1.xpose.msra.mxu0 0.0
  %511 = vmatprep.subr.mxu0 0.0
  %512 = vmatpush1.xpose.msra.mxu0 0.0
  %513 = vmatprep.subr.mxu0 0.0
  %514 = vmatpush1.xpose.msra.mxu0 0.0
  %515 = vmatprep.subr.mxu0 0.0
  %516 = vmatpush1.xpose.msra.mxu0 0.0
  %517 = vmatprep.subr.mxu0 0.0
  %518 = vmatpush1.xpose.msra.mxu0 0.0
  %519 = vmatprep.subr.mxu0 0.0
  %520 = vmatpush1.xpose.msra.mxu0 0.0
  %521 = vmatprep.subr.mxu0 0.0
  %522 = vmatpush1.xpose.msra.mxu0 0.0
  %523 = vmatprep.subr.mxu0 0.0
  %524 = vmatpush1.xpose.msra.mxu0 0.0
  %525 = vmatprep.subr.mxu0 0.0
  %526 = vmatpush1.xpose.msra.mxu0 0.0
  %527 = vmatprep.subr.mxu0 0.0
  %528 = vmatpush1.xpose.msra.mxu0 0.0
  %529 = vmatprep.subr.mxu0 0.0
  %530 = vmatpush1.xpose.msra.mxu0 0.0
  %531 = vmatprep.subr.mxu0 0.0
  %532 = vmatpush1.xpose.msra.mxu0 0.0
  %533 = vmatprep.subr.mxu0 0.0
  %534 = vmatpush1.xpose.msra.mxu0 0.0
  %535 = vmatprep.subr.mxu0 0.0
  %536 = vmatpush1.xpose.msra.mxu0 0.0
  %537 = vmatprep.subr.mxu0 0.0
  %538 = vmatpush1.xpose.msra.mxu0 0.0
  %539 = vmatprep.subr.mxu0 0.0
  %540 = vmatpush1.xpose.msra.mxu0 0.0
  %541 = vmatprep.subr.mxu0 0.0
  %542 = vmatpush1.xpose.msra.mxu0 0.0
  %543 = vmatprep.subr.mxu0 0.0
  %544 = vmatpush1.xpose.msra.mxu0 0.0
  %545 = vmatprep.subr.mxu0 0.0
  %546 = vmatpush1.xpose.msra.mxu0 0.0
  %547 = vmatprep.subr.mxu0 0.0
  %548 = vmatpush1.xpose.msra.mxu0 0.0
  %549 = vmatprep.subr.mxu0 0.0
  %550 = vmatpush1.xpose.msra.mxu0 0.0
  %551 = vmatprep.subr.mxu0 0.0
  %552 = vmatpush1.xpose.msra.mxu0 0.0
  %553 = vmatprep.subr.mxu0 0.0
  %554 = vmatpush1.xpose.msra.mxu0 0.0
  %555 = vmatprep.subr.mxu0 0.0
  %556 = vmatpush1.xpose.msra.mxu0 0.0
  %557 = vmatprep.subr.mxu0 0.0
  %558 = vmatpush1.xpose.msra.mxu0 0.0
  %559 = vmatprep.subr.mxu0 0.0
  %560 = vmatpush1.xpose.msra.mxu0 0.0
  %561 = vmatprep.subr.mxu0 0.0
  %562 = vmatpush1.xpose.msra.mxu0 0.0
  %563 = vmatprep.subr.mxu0 0.0
  %564 = vmatpush1.xpose.msra.mxu0 0.0
  %565 = vmatprep.subr.mxu0 0.0
  %566 = vmatpush1.xpose.msra.mxu0 0.0
  %567 = vmatprep.subr.mxu0 0.0
  %568 = vmatpush1.xpose.msra.mxu0 0.0
  %569 = vmatprep.subr.mxu0 0.0
  %570 = vmatpush1.xpose.msra.mxu0 0.0
  %571 = vmatprep.mubr.f32.mxu0 0.0
  %572 = vmatmul.mubr.f32.gmra.mrb[0].mxu0 %v503
  %v573 = vpop.f32.mrb[0].mxu0
  %v574 = vadd.f32 0.0, %v573
  %v575 = vpop.f32.mrb[0].mxu0
  %576 = vdwg.mxu0
  %577 = vrot.lane.b32.xlu0 %v282, 96
  %v578 = vpop.permute.xlu0 %577
  %v580 = vsel %vm424, %v392, 0
  %v582 = vsel %vm424, %v578, 0
  %584 = vmatprep.subr.mxu0 0.0
  %585 = vmatpush1.xpose.msra.mxu0 %v582
  %586 = vmatprep.subr.mxu0 0.0
  %587 = vmatpush1.xpose.msra.mxu0 0.0
  %588 = vmatprep.subr.mxu0 0.0
  %589 = vmatpush1.xpose.msra.mxu0 0.0
  %590 = vmatprep.subr.mxu0 0.0
  %591 = vmatpush1.xpose.msra.mxu0 0.0
  %592 = vmatprep.subr.mxu0 0.0
  %593 = vmatpush1.xpose.msra.mxu0 0.0
  %594 = vmatprep.subr.mxu0 0.0
  %595 = vmatpush1.xpose.msra.mxu0 0.0
  %596 = vmatprep.subr.mxu0 0.0
  %597 = vmatpush1.xpose.msra.mxu0 0.0
  %598 = vmatprep.subr.mxu0 0.0
  %599 = vmatpush1.xpose.msra.mxu0 0.0
  %600 = vmatprep.subr.mxu0 0.0
  %601 = vmatpush1.xpose.msra.mxu0 0.0
  %602 = vmatprep.subr.mxu0 0.0
  %603 = vmatpush1.xpose.msra.mxu0 0.0
  %604 = vmatprep.subr.mxu0 0.0
  %605 = vmatpush1.xpose.msra.mxu0 0.0
  %606 = vmatprep.subr.mxu0 0.0
  %607 = vmatpush1.xpose.msra.mxu0 0.0
  %608 = vmatprep.subr.mxu0 0.0
  %609 = vmatpush1.xpose.msra.mxu0 0.0
  %610 = vmatprep.subr.mxu0 0.0
  %611 = vmatpush1.xpose.msra.mxu0 0.0
  %612 = vmatprep.subr.mxu0 0.0
  %613 = vmatpush1.xpose.msra.mxu0 0.0
  %614 = vmatprep.subr.mxu0 0.0
  %615 = vmatpush1.xpose.msra.mxu0 0.0
  %616 = vmatprep.subr.mxu0 0.0
  %617 = vmatpush1.xpose.msra.mxu0 0.0
  %618 = vmatprep.subr.mxu0 0.0
  %619 = vmatpush1.xpose.msra.mxu0 0.0
  %620 = vmatprep.subr.mxu0 0.0
  %621 = vmatpush1.xpose.msra.mxu0 0.0
  %622 = vmatprep.subr.mxu0 0.0
  %623 = vmatpush1.xpose.msra.mxu0 0.0
  %624 = vmatprep.subr.mxu0 0.0
  %625 = vmatpush1.xpose.msra.mxu0 0.0
  %626 = vmatprep.subr.mxu0 0.0
  %627 = vmatpush1.xpose.msra.mxu0 0.0
  %628 = vmatprep.subr.mxu0 0.0
  %629 = vmatpush1.xpose.msra.mxu0 0.0
  %630 = vmatprep.subr.mxu0 0.0
  %631 = vmatpush1.xpose.msra.mxu0 0.0
  %632 = vmatprep.subr.mxu0 0.0
  %633 = vmatpush1.xpose.msra.mxu0 0.0
  %634 = vmatprep.subr.mxu0 0.0
  %635 = vmatpush1.xpose.msra.mxu0 0.0
  %636 = vmatprep.subr.mxu0 0.0
  %637 = vmatpush1.xpose.msra.mxu0 0.0
  %638 = vmatprep.subr.mxu0 0.0
  %639 = vmatpush1.xpose.msra.mxu0 0.0
  %640 = vmatprep.subr.mxu0 0.0
  %641 = vmatpush1.xpose.msra.mxu0 0.0
  %642 = vmatprep.subr.mxu0 0.0
  %643 = vmatpush1.xpose.msra.mxu0 0.0
  %644 = vmatprep.subr.mxu0 0.0
  %645 = vmatpush1.xpose.msra.mxu0 0.0
  %646 = vmatprep.subr.mxu0 0.0
  %647 = vmatpush1.xpose.msra.mxu0 0.0
  %648 = vmatprep.mubr.f32.mxu0 0.0
  %649 = vmatmul.mubr.f32.gmra.mrb[0].mxu0 %v580
  %v650 = vpop.f32.mrb[0].mxu0
  %v651 = vadd.f32 0.0, %v650
  %v652 = vpop.f32.mrb[0].mxu0
  %653 = vdwg.mxu0
  %654 = vrot.lane.b32.xlu0 %v287, 96
  %v655 = vpop.permute.xlu0 %654
  %v657 = vsel %vm424, %v393, 0
  %v659 = vsel %vm424, %v655, 0
  %661 = vmatprep.subr.mxu0 0.0
  %662 = vmatpush1.xpose.msra.mxu0 %v659
  %663 = vmatprep.subr.mxu0 0.0
  %664 = vmatpush1.xpose.msra.mxu0 0.0
  %665 = vmatprep.subr.mxu0 0.0
  %666 = vmatpush1.xpose.msra.mxu0 0.0
  %667 = vmatprep.subr.mxu0 0.0
  %668 = vmatpush1.xpose.msra.mxu0 0.0
  %669 = vmatprep.subr.mxu0 0.0
  %670 = vmatpush1.xpose.msra.mxu0 0.0
  %671 = vmatprep.subr.mxu0 0.0
  %672 = vmatpush1.xpose.msra.mxu0 0.0
  %673 = vmatprep.subr.mxu0 0.0
  %674 = vmatpush1.xpose.msra.mxu0 0.0
  %675 = vmatprep.subr.mxu0 0.0
  %676 = vmatpush1.xpose.msra.mxu0 0.0
  %677 = vmatprep.subr.mxu0 0.0
  %678 = vmatpush1.xpose.msra.mxu0 0.0
  %679 = vmatprep.subr.mxu0 0.0
  %680 = vmatpush1.xpose.msra.mxu0 0.0
  %681 = vmatprep.subr.mxu0 0.0
  %682 = vmatpush1.xpose.msra.mxu0 0.0
  %683 = vmatprep.subr.mxu0 0.0
  %684 = vmatpush1.xpose.msra.mxu0 0.0
  %685 = vmatprep.subr.mxu0 0.0
  %686 = vmatpush1.xpose.msra.mxu0 0.0
  %687 = vmatprep.subr.mxu0 0.0
  %688 = vmatpush1.xpose.msra.mxu0 0.0
  %689 = vmatprep.subr.mxu0 0.0
  %690 = vmatpush1.xpose.msra.mxu0 0.0
  %691 = vmatprep.subr.mxu0 0.0
  %692 = vmatpush1.xpose.msra.mxu0 0.0
  %693 = vmatprep.subr.mxu0 0.0
  %694 = vmatpush1.xpose.msra.mxu0 0.0
  %695 = vmatprep.subr.mxu0 0.0
  %696 = vmatpush1.xpose.msra.mxu0 0.0
  %697 = vmatprep.subr.mxu0 0.0
  %698 = vmatpush1.xpose.msra.mxu0 0.0
  %699 = vmatprep.subr.mxu0 0.0
  %700 = vmatpush1.xpose.msra.mxu0 0.0
  %701 = vmatprep.subr.mxu0 0.0
  %702 = vmatpush1.xpose.msra.mxu0 0.0
  %703 = vmatprep.subr.mxu0 0.0
  %704 = vmatpush1.xpose.msra.mxu0 0.0
  %705 = vmatprep.subr.mxu0 0.0
  %706 = vmatpush1.xpose.msra.mxu0 0.0
  %707 = vmatprep.subr.mxu0 0.0
  %708 = vmatpush1.xpose.msra.mxu0 0.0
  %709 = vmatprep.subr.mxu0 0.0
  %710 = vmatpush1.xpose.msra.mxu0 0.0
  %711 = vmatprep.subr.mxu0 0.0
  %712 = vmatpush1.xpose.msra.mxu0 0.0
  %713 = vmatprep.subr.mxu0 0.0
  %714 = vmatpush1.xpose.msra.mxu0 0.0
  %715 = vmatprep.subr.mxu0 0.0
  %716 = vmatpush1.xpose.msra.mxu0 0.0
  %717 = vmatprep.subr.mxu0 0.0
  %718 = vmatpush1.xpose.msra.mxu0 0.0
  %719 = vmatprep.subr.mxu0 0.0
  %720 = vmatpush1.xpose.msra.mxu0 0.0
  %721 = vmatprep.subr.mxu0 0.0
  %722 = vmatpush1.xpose.msra.mxu0 0.0
  %723 = vmatprep.subr.mxu0 0.0
  %724 = vmatpush1.xpose.msra.mxu0 0.0
  %725 = vmatprep.mubr.f32.mxu0 0.0
  %726 = vmatmul.mubr.f32.gmra.mrb[0].mxu0 %v657
  %v727 = vpop.f32.mrb[0].mxu0
  %v728 = vadd.f32 0.0, %v727
  %v729 = vpop.f32.mrb[0].mxu0
  %730 = vdwg.mxu0
  %731 = vrot.lane.b32.xlu0 %v292, 96
  %v732 = vpop.permute.xlu0 %731
  %v734 = vsel %vm424, %v394, 0
  %v736 = vsel %vm424, %v732, 0
  %738 = vmatprep.subr.mxu0 0.0
  %739 = vmatpush1.xpose.msra.mxu0 %v736
  %740 = vmatprep.subr.mxu0 0.0
  %741 = vmatpush1.xpose.msra.mxu0 0.0
  %742 = vmatprep.subr.mxu0 0.0
  %743 = vmatpush1.xpose.msra.mxu0 0.0
  %744 = vmatprep.subr.mxu0 0.0
  %745 = vmatpush1.xpose.msra.mxu0 0.0
  %746 = vmatprep.subr.mxu0 0.0
  %747 = vmatpush1.xpose.msra.mxu0 0.0
  %748 = vmatprep.subr.mxu0 0.0
  %749 = vmatpush1.xpose.msra.mxu0 0.0
  %750 = vmatprep.subr.mxu0 0.0
  %751 = vmatpush1.xpose.msra.mxu0 0.0
  %752 = vmatprep.subr.mxu0 0.0
  %753 = vmatpush1.xpose.msra.mxu0 0.0
  %754 = vmatprep.subr.mxu0 0.0
  %755 = vmatpush1.xpose.msra.mxu0 0.0
  %756 = vmatprep.subr.mxu0 0.0
  %757 = vmatpush1.xpose.msra.mxu0 0.0
  %758 = vmatprep.subr.mxu0 0.0
  %759 = vmatpush1.xpose.msra.mxu0 0.0
  %760 = vmatprep.subr.mxu0 0.0
  %761 = vmatpush1.xpose.msra.mxu0 0.0
  %762 = vmatprep.subr.mxu0 0.0
  %763 = vmatpush1.xpose.msra.mxu0 0.0
  %764 = vmatprep.subr.mxu0 0.0
  %765 = vmatpush1.xpose.msra.mxu0 0.0
  %766 = vmatprep.subr.mxu0 0.0
  %767 = vmatpush1.xpose.msra.mxu0 0.0
  %768 = vmatprep.subr.mxu0 0.0
  %769 = vmatpush1.xpose.msra.mxu0 0.0
  %770 = vmatprep.subr.mxu0 0.0
  %771 = vmatpush1.xpose.msra.mxu0 0.0
  %772 = vmatprep.subr.mxu0 0.0
  %773 = vmatpush1.xpose.msra.mxu0 0.0
  %774 = vmatprep.subr.mxu0 0.0
  %775 = vmatpush1.xpose.msra.mxu0 0.0
  %776 = vmatprep.subr.mxu0 0.0
  %777 = vmatpush1.xpose.msra.mxu0 0.0
  %778 = vmatprep.subr.mxu0 0.0
  %779 = vmatpush1.xpose.msra.mxu0 0.0
  %780 = vmatprep.subr.mxu0 0.0
  %781 = vmatpush1.xpose.msra.mxu0 0.0
  %782 = vmatprep.subr.mxu0 0.0
  %783 = vmatpush1.xpose.msra.mxu0 0.0
  %784 = vmatprep.subr.mxu0 0.0
  %785 = vmatpush1.xpose.msra.mxu0 0.0
  %786 = vmatprep.subr.mxu0 0.0
  %787 = vmatpush1.xpose.msra.mxu0 0.0
  %788 = vmatprep.subr.mxu0 0.0
  %789 = vmatpush1.xpose.msra.mxu0 0.0
  %790 = vmatprep.subr.mxu0 0.0
  %791 = vmatpush1.xpose.msra.mxu0 0.0
  %792 = vmatprep.subr.mxu0 0.0
  %793 = vmatpush1.xpose.msra.mxu0 0.0
  %794 = vmatprep.subr.mxu0 0.0
  %795 = vmatpush1.xpose.msra.mxu0 0.0
  %796 = vmatprep.subr.mxu0 0.0
  %797 = vmatpush1.xpose.msra.mxu0 0.0
  %798 = vmatprep.subr.mxu0 0.0
  %799 = vmatpush1.xpose.msra.mxu0 0.0
  %800 = vmatprep.subr.mxu0 0.0
  %801 = vmatpush1.xpose.msra.mxu0 0.0
  %802 = vmatprep.mubr.f32.mxu0 0.0
  %803 = vmatmul.mubr.f32.gmra.mrb[0].mxu0 %v734
  %v804 = vpop.f32.mrb[0].mxu0
  %v805 = vadd.f32 0.0, %v804
  %v806 = vpop.f32.mrb[0].mxu0
  %807 = vdwg.mxu0
  %808 = vrot.lane.b32.xlu0 %v297, 96
  %v809 = vpop.permute.xlu0 %808
  %v811 = vsel %vm424, %v395, 0
  %v813 = vsel %vm424, %v809, 0
  %815 = vmatprep.subr.mxu0 0.0
  %816 = vmatpush1.xpose.msra.mxu0 %v813
  %817 = vmatprep.subr.mxu0 0.0
  %818 = vmatpush1.xpose.msra.mxu0 0.0
  %819 = vmatprep.subr.mxu0 0.0
  %820 = vmatpush1.xpose.msra.mxu0 0.0
  %821 = vmatprep.subr.mxu0 0.0
  %822 = vmatpush1.xpose.msra.mxu0 0.0
  %823 = vmatprep.subr.mxu0 0.0
  %824 = vmatpush1.xpose.msra.mxu0 0.0
  %825 = vmatprep.subr.mxu0 0.0
  %826 = vmatpush1.xpose.msra.mxu0 0.0
  %827 = vmatprep.subr.mxu0 0.0
  %828 = vmatpush1.xpose.msra.mxu0 0.0
  %829 = vmatprep.subr.mxu0 0.0
  %830 = vmatpush1.xpose.msra.mxu0 0.0
  %831 = vmatprep.subr.mxu0 0.0
  %832 = vmatpush1.xpose.msra.mxu0 0.0
  %833 = vmatprep.subr.mxu0 0.0
  %834 = vmatpush1.xpose.msra.mxu0 0.0
  %835 = vmatprep.subr.mxu0 0.0
  %836 = vmatpush1.xpose.msra.mxu0 0.0
  %837 = vmatprep.subr.mxu0 0.0
  %838 = vmatpush1.xpose.msra.mxu0 0.0
  %839 = vmatprep.subr.mxu0 0.0
  %840 = vmatpush1.xpose.msra.mxu0 0.0
  %841 = vmatprep.subr.mxu0 0.0
  %842 = vmatpush1.xpose.msra.mxu0 0.0
  %843 = vmatprep.subr.mxu0 0.0
  %844 = vmatpush1.xpose.msra.mxu0 0.0
  %845 = vmatprep.subr.mxu0 0.0
  %846 = vmatpush1.xpose.msra.mxu0 0.0
  %847 = vmatprep.subr.mxu0 0.0
  %848 = vmatpush1.xpose.msra.mxu0 0.0
  %849 = vmatprep.subr.mxu0 0.0
  %850 = vmatpush1.xpose.msra.mxu0 0.0
  %851 = vmatprep.subr.mxu0 0.0
  %852 = vmatpush1.xpose.msra.mxu0 0.0
  %853 = vmatprep.subr.mxu0 0.0
  %854 = vmatpush1.xpose.msra.mxu0 0.0
  %855 = vmatprep.subr.mxu0 0.0
  %856 = vmatpush1.xpose.msra.mxu0 0.0
  %857 = vmatprep.subr.mxu0 0.0
  %858 = vmatpush1.xpose.msra.mxu0 0.0
  %859 = vmatprep.subr.mxu0 0.0
  %860 = vmatpush1.xpose.msra.mxu0 0.0
  %861 = vmatprep.subr.mxu0 0.0
  %862 = vmatpush1.xpose.msra.mxu0 0.0
  %863 = vmatprep.subr.mxu0 0.0
  %864 = vmatpush1.xpose.msra.mxu0 0.0
  %865 = vmatprep.subr.mxu0 0.0
  %866 = vmatpush1.xpose.msra.mxu0 0.0
  %867 = vmatprep.subr.mxu0 0.0
  %868 = vmatpush1.xpose.msra.mxu0 0.0
  %869 = vmatprep.subr.mxu0 0.0
  %870 = vmatpush1.xpose.msra.mxu0 0.0
  %871 = vmatprep.subr.mxu0 0.0
  %872 = vmatpush1.xpose.msra.mxu0 0.0
  %873 = vmatprep.subr.mxu0 0.0
  %874 = vmatpush1.xpose.msra.mxu0 0.0
  %875 = vmatprep.subr.mxu0 0.0
  %876 = vmatpush1.xpose.msra.mxu0 0.0
  %877 = vmatprep.subr.mxu0 0.0
  %878 = vmatpush1.xpose.msra.mxu0 0.0
  %879 = vmatprep.mubr.f32.mxu0 0.0
  %880 = vmatmul.mubr.f32.gmra.mrb[0].mxu0 %v811
  %v881 = vpop.f32.mrb[0].mxu0
  %v882 = vadd.f32 0.0, %v881
  %v883 = vpop.f32.mrb[0].mxu0
  %884 = vdwg.mxu0
  %885 = vrot.lane.b32.xlu0 %v302, 96
  %v886 = vpop.permute.xlu0 %885
  %v888 = vsel %vm424, %v396, 0
  %v890 = vsel %vm424, %v886, 0
  %892 = vmatprep.subr.mxu0 0.0
  %893 = vmatpush1.xpose.msra.mxu0 %v890
  %894 = vmatprep.subr.mxu0 0.0
  %895 = vmatpush1.xpose.msra.mxu0 0.0
  %896 = vmatprep.subr.mxu0 0.0
  %897 = vmatpush1.xpose.msra.mxu0 0.0
  %898 = vmatprep.subr.mxu0 0.0
  %899 = vmatpush1.xpose.msra.mxu0 0.0
  %900 = vmatprep.subr.mxu0 0.0
  %901 = vmatpush1.xpose.msra.mxu0 0.0
  %902 = vmatprep.subr.mxu0 0.0
  %903 = vmatpush1.xpose.msra.mxu0 0.0
  %904 = vmatprep.subr.mxu0 0.0
  %905 = vmatpush1.xpose.msra.mxu0 0.0
  %906 = vmatprep.subr.mxu0 0.0
  %907 = vmatpush1.xpose.msra.mxu0 0.0
  %908 = vmatprep.subr.mxu0 0.0
  %909 = vmatpush1.xpose.msra.mxu0 0.0
  %910 = vmatprep.subr.mxu0 0.0
  %911 = vmatpush1.xpose.msra.mxu0 0.0
  %912 = vmatprep.subr.mxu0 0.0
  %913 = vmatpush1.xpose.msra.mxu0 0.0
  %914 = vmatprep.subr.mxu0 0.0
  %915 = vmatpush1.xpose.msra.mxu0 0.0
  %916 = vmatprep.subr.mxu0 0.0
  %917 = vmatpush1.xpose.msra.mxu0 0.0
  %918 = vmatprep.subr.mxu0 0.0
  %919 = vmatpush1.xpose.msra.mxu0 0.0
  %920 = vmatprep.subr.mxu0 0.0
  %921 = vmatpush1.xpose.msra.mxu0 0.0
  %922 = vmatprep.subr.mxu0 0.0
  %923 = vmatpush1.xpose.msra.mxu0 0.0
  %924 = vmatprep.subr.mxu0 0.0
  %925 = vmatpush1.xpose.msra.mxu0 0.0
  %926 = vmatprep.subr.mxu0 0.0
  %927 = vmatpush1.xpose.msra.mxu0 0.0
  %928 = vmatprep.subr.mxu0 0.0
  %929 = vmatpush1.xpose.msra.mxu0 0.0
  %930 = vmatprep.subr.mxu0 0.0
  %931 = vmatpush1.xpose.msra.mxu0 0.0
  %932 = vmatprep.subr.mxu0 0.0
  %933 = vmatpush1.xpose.msra.mxu0 0.0
  %934 = vmatprep.subr.mxu0 0.0
  %935 = vmatpush1.xpose.msra.mxu0 0.0
  %936 = vmatprep.subr.mxu0 0.0
  %937 = vmatpush1.xpose.msra.mxu0 0.0
  %938 = vmatprep.subr.mxu0 0.0
  %939 = vmatpush1.xpose.msra.mxu0 0.0
  %940 = vmatprep.subr.mxu0 0.0
  %941 = vmatpush1.xpose.msra.mxu0 0.0
  %942 = vmatprep.subr.mxu0 0.0
  %943 = vmatpush1.xpose.msra.mxu0 0.0
  %944 = vmatprep.subr.mxu0 0.0
  %945 = vmatpush1.xpose.msra.mxu0 0.0
  %946 = vmatprep.subr.mxu0 0.0
  %947 = vmatpush1.xpose.msra.mxu0 0.0
  %948 = vmatprep.subr.mxu0 0.0
  %949 = vmatpush1.xpose.msra.mxu0 0.0
  %950 = vmatprep.subr.mxu0 0.0
  %951 = vmatpush1.xpose.msra.mxu0 0.0
  %952 = vmatprep.subr.mxu0 0.0
  %953 = vmatpush1.xpose.msra.mxu0 0.0
  %954 = vmatprep.subr.mxu0 0.0
  %955 = vmatpush1.xpose.msra.mxu0 0.0
  %956 = vmatprep.mubr.f32.mxu0 0.0
  %957 = vmatmul.mubr.f32.gmra.mrb[0].mxu0 %v888
  %v958 = vpop.f32.mrb[0].mxu0
  %v959 = vadd.f32 0.0, %v958
  %v960 = vpop.f32.mrb[0].mxu0
  %961 = vdwg.mxu0
  %962 = vrot.lane.b32.xlu0 %v307, 96
  %v963 = vpop.permute.xlu0 %962
  %v965 = vsel %vm424, %v397, 0
  %v967 = vsel %vm424, %v963, 0
  %969 = vmatprep.subr.mxu0 0.0
  %970 = vmatpush1.xpose.msra.mxu0 %v967
  %971 = vmatprep.subr.mxu0 0.0
  %972 = vmatpush1.xpose.msra.mxu0 0.0
  %973 = vmatprep.subr.mxu0 0.0
  %974 = vmatpush1.xpose.msra.mxu0 0.0
  %975 = vmatprep.subr.mxu0 0.0
  %976 = vmatpush1.xpose.msra.mxu0 0.0
  %977 = vmatprep.subr.mxu0 0.0
  %978 = vmatpush1.xpose.msra.mxu0 0.0
  %979 = vmatprep.subr.mxu0 0.0
  %980 = vmatpush1.xpose.msra.mxu0 0.0
  %981 = vmatprep.subr.mxu0 0.0
  %982 = vmatpush1.xpose.msra.mxu0 0.0
  %983 = vmatprep.subr.mxu0 0.0
  %984 = vmatpush1.xpose.msra.mxu0 0.0
  %985 = vmatprep.subr.mxu0 0.0
  %986 = vmatpush1.xpose.msra.mxu0 0.0
  %987 = vmatprep.subr.mxu0 0.0
  %988 = vmatpush1.xpose.msra.mxu0 0.0
  %989 = vmatprep.subr.mxu0 0.0
  %990 = vmatpush1.xpose.msra.mxu0 0.0
  %991 = vmatprep.subr.mxu0 0.0
  %992 = vmatpush1.xpose.msra.mxu0 0.0
  %993 = vmatprep.subr.mxu0 0.0
  %994 = vmatpush1.xpose.msra.mxu0 0.0
  %995 = vmatprep.subr.mxu0 0.0
  %996 = vmatpush1.xpose.msra.mxu0 0.0
  %997 = vmatprep.subr.mxu0 0.0
  %998 = vmatpush1.xpose.msra.mxu0 0.0
  %999 = vmatprep.subr.mxu0 0.0
  %1000 = vmatpush1.xpose.msra.mxu0 0.0
  %1001 = vmatprep.subr.mxu0 0.0
  %1002 = vmatpush1.xpose.msra.mxu0 0.0
  %1003 = vmatprep.subr.mxu0 0.0
  %1004 = vmatpush1.xpose.msra.mxu0 0.0
  %1005 = vmatprep.subr.mxu0 0.0
  %1006 = vmatpush1.xpose.msra.mxu0 0.0
  %1007 = vmatprep.subr.mxu0 0.0
  %1008 = vmatpush1.xpose.msra.mxu0 0.0
  %1009 = vmatprep.subr.mxu0 0.0
  %1010 = vmatpush1.xpose.msra.mxu0 0.0
  %1011 = vmatprep.subr.mxu0 0.0
  %1012 = vmatpush1.xpose.msra.mxu0 0.0
  %1013 = vmatprep.subr.mxu0 0.0
  %1014 = vmatpush1.xpose.msra.mxu0 0.0
  %1015 = vmatprep.subr.mxu0 0.0
  %1016 = vmatpush1.xpose.msra.mxu0 0.0
  %1017 = vmatprep.subr.mxu0 0.0
  %1018 = vmatpush1.xpose.msra.mxu0 0.0
  %1019 = vmatprep.subr.mxu0 0.0
  %1020 = vmatpush1.xpose.msra.mxu0 0.0
  %1021 = vmatprep.subr.mxu0 0.0
  %1022 = vmatpush1.xpose.msra.mxu0 0.0
  %1023 = vmatprep.subr.mxu0 0.0
  %1024 = vmatpush1.xpose.msra.mxu0 0.0
  %1025 = vmatprep.subr.mxu0 0.0
  %1026 = vmatpush1.xpose.msra.mxu0 0.0
  %1027 = vmatprep.subr.mxu0 0.0
  %1028 = vmatpush1.xpose.msra.mxu0 0.0
  %1029 = vmatprep.subr.mxu0 0.0
  %1030 = vmatpush1.xpose.msra.mxu0 0.0
  %1031 = vmatprep.subr.mxu0 0.0
  %1032 = vmatpush1.xpose.msra.mxu0 0.0
  %1033 = vmatprep.mubr.f32.mxu0 0.0
  %1034 = vmatmul.mubr.f32.gmra.mrb[0].mxu0 %v965
  %v1035 = vpop.f32.mrb[0].mxu0
  %v1036 = vadd.f32 0.0, %v1035
  %v1037 = vpop.f32.mrb[0].mxu0
  %1038 = vdwg.mxu0
  %1039 = vrot.lane.b32.xlu0 %v319, 96
  %v1040 = vpop.permute.xlu0 %1039
  %v1042 = vsel %vm424, %v398, 0
  %v1044 = vsel %vm424, %v1040, 0
  %1046 = vmatprep.subr.mxu0 0.0
  %1047 = vmatpush1.xpose.msra.mxu0 %v1044
  %1048 = vmatprep.subr.mxu0 0.0
  %1049 = vmatpush1.xpose.msra.mxu0 0.0
  %1050 = vmatprep.subr.mxu0 0.0
  %1051 = vmatpush1.xpose.msra.mxu0 0.0
  %1052 = vmatprep.subr.mxu0 0.0
  %1053 = vmatpush1.xpose.msra.mxu0 0.0
  %1054 = vmatprep.subr.mxu0 0.0
  %1055 = vmatpush1.xpose.msra.mxu0 0.0
  %1056 = vmatprep.subr.mxu0 0.0
  %1057 = vmatpush1.xpose.msra.mxu0 0.0
  %1058 = vmatprep.subr.mxu0 0.0
  %1059 = vmatpush1.xpose.msra.mxu0 0.0
  %1060 = vmatprep.subr.mxu0 0.0
  %1061 = vmatpush1.xpose.msra.mxu0 0.0
  %1062 = vmatprep.subr.mxu0 0.0
  %1063 = vmatpush1.xpose.msra.mxu0 0.0
  %1064 = vmatprep.subr.mxu0 0.0
  %1065 = vmatpush1.xpose.msra.mxu0 0.0
  %1066 = vmatprep.subr.mxu0 0.0
  %1067 = vmatpush1.xpose.msra.mxu0 0.0
  %1068 = vmatprep.subr.mxu0 0.0
  %1069 = vmatpush1.xpose.msra.mxu0 0.0
  %1070 = vmatprep.subr.mxu0 0.0
  %1071 = vmatpush1.xpose.msra.mxu0 0.0
  %1072 = vmatprep.subr.mxu0 0.0
  %1073 = vmatpush1.xpose.msra.mxu0 0.0
  %1074 = vmatprep.subr.mxu0 0.0
  %1075 = vmatpush1.xpose.msra.mxu0 0.0
  %1076 = vmatprep.subr.mxu0 0.0
  %1077 = vmatpush1.xpose.msra.mxu0 0.0
  %1078 = vmatprep.subr.mxu0 0.0
  %1079 = vmatpush1.xpose.msra.mxu0 0.0
  %1080 = vmatprep.subr.mxu0 0.0
  %1081 = vmatpush1.xpose.msra.mxu0 0.0
  %1082 = vmatprep.subr.mxu0 0.0
  %1083 = vmatpush1.xpose.msra.mxu0 0.0
  %1084 = vmatprep.subr.mxu0 0.0
  %1085 = vmatpush1.xpose.msra.mxu0 0.0
  %1086 = vmatprep.subr.mxu0 0.0
  %1087 = vmatpush1.xpose.msra.mxu0 0.0
  %1088 = vmatprep.subr.mxu0 0.0
  %1089 = vmatpush1.xpose.msra.mxu0 0.0
  %1090 = vmatprep.subr.mxu0 0.0
  %1091 = vmatpush1.xpose.msra.mxu0 0.0
  %1092 = vmatprep.subr.mxu0 0.0
  %1093 = vmatpush1.xpose.msra.mxu0 0.0
  %1094 = vmatprep.subr.mxu0 0.0
  %1095 = vmatpush1.xpose.msra.mxu0 0.0
  %1096 = vmatprep.subr.mxu0 0.0
  %1097 = vmatpush1.xpose.msra.mxu0 0.0
  %1098 = vmatprep.subr.mxu0 0.0
  %1099 = vmatpush1.xpose.msra.mxu0 0.0
  %1100 = vmatprep.subr.mxu0 0.0
  %1101 = vmatpush1.xpose.msra.mxu0 0.0
  %1102 = vmatprep.subr.mxu0 0.0
  %1103 = vmatpush1.xpose.msra.mxu0 0.0
  %1104 = vmatprep.subr.mxu0 0.0
  %1105 = vmatpush1.xpose.msra.mxu0 0.0
  %1106 = vmatprep.subr.mxu0 0.0
  %1107 = vmatpush1.xpose.msra.mxu0 0.0
  %1108 = vmatprep.subr.mxu0 0.0
  %1109 = vmatpush1.xpose.msra.mxu0 0.0
  %1110 = vmatprep.mubr.f32.mxu0 0.0
  %1111 = vmatmul.mubr.f32.gmra.mrb[0].mxu0 %v1042
  %v1112 = vpop.f32.mrb[0].mxu0
  %v1113 = vadd.f32 0.0, %v1112
  %v1114 = vpop.f32.mrb[0].mxu0
  %1115 = vdwg.mxu0
  %1116 = vrot.lane.b32.xlu0 %v321, 96
  %v1117 = vpop.permute.xlu0 %1116
  %v1119 = vsel %vm424, %v399, 0
  %v1121 = vsel %vm424, %v1117, 0
  %1123 = vmatprep.subr.mxu0 0.0
  %1124 = vmatpush1.xpose.msra.mxu0 %v1121
  %1125 = vmatprep.subr.mxu0 0.0
  %1126 = vmatpush1.xpose.msra.mxu0 0.0
  %1127 = vmatprep.subr.mxu0 0.0
  %1128 = vmatpush1.xpose.msra.mxu0 0.0
  %1129 = vmatprep.subr.mxu0 0.0
  %1130 = vmatpush1.xpose.msra.mxu0 0.0
  %1131 = vmatprep.subr.mxu0 0.0
  %1132 = vmatpush1.xpose.msra.mxu0 0.0
  %1133 = vmatprep.subr.mxu0 0.0
  %1134 = vmatpush1.xpose.msra.mxu0 0.0
  %1135 = vmatprep.subr.mxu0 0.0
  %1136 = vmatpush1.xpose.msra.mxu0 0.0
  %1137 = vmatprep.subr.mxu0 0.0
  %1138 = vmatpush1.xpose.msra.mxu0 0.0
  %1139 = vmatprep.subr.mxu0 0.0
  %1140 = vmatpush1.xpose.msra.mxu0 0.0
  %1141 = vmatprep.subr.mxu0 0.0
  %1142 = vmatpush1.xpose.msra.mxu0 0.0
  %1143 = vmatprep.subr.mxu0 0.0
  %1144 = vmatpush1.xpose.msra.mxu0 0.0
  %1145 = vmatprep.subr.mxu0 0.0
  %1146 = vmatpush1.xpose.msra.mxu0 0.0
  %1147 = vmatprep.subr.mxu0 0.0
  %1148 = vmatpush1.xpose.msra.mxu0 0.0
  %1149 = vmatprep.subr.mxu0 0.0
  %1150 = vmatpush1.xpose.msra.mxu0 0.0
  %1151 = vmatprep.subr.mxu0 0.0
  %1152 = vmatpush1.xpose.msra.mxu0 0.0
  %1153 = vmatprep.subr.mxu0 0.0
  %1154 = vmatpush1.xpose.msra.mxu0 0.0
  %1155 = vmatprep.subr.mxu0 0.0
  %1156 = vmatpush1.xpose.msra.mxu0 0.0
  %1157 = vmatprep.subr.mxu0 0.0
  %1158 = vmatpush1.xpose.msra.mxu0 0.0
  %1159 = vmatprep.subr.mxu0 0.0
  %1160 = vmatpush1.xpose.msra.mxu0 0.0
  %1161 = vmatprep.subr.mxu0 0.0
  %1162 = vmatpush1.xpose.msra.mxu0 0.0
  %1163 = vmatprep.subr.mxu0 0.0
  %1164 = vmatpush1.xpose.msra.mxu0 0.0
  %1165 = vmatprep.subr.mxu0 0.0
  %1166 = vmatpush1.xpose.msra.mxu0 0.0
  %1167 = vmatprep.subr.mxu0 0.0
  %1168 = vmatpush1.xpose.msra.mxu0 0.0
  %1169 = vmatprep.subr.mxu0 0.0
  %1170 = vmatpush1.xpose.msra.mxu0 0.0
  %1171 = vmatprep.subr.mxu0 0.0
  %1172 = vmatpush1.xpose.msra.mxu0 0.0
  %1173 = vmatprep.subr.mxu0 0.0
  %1174 = vmatpush1.xpose.msra.mxu0 0.0
  %1175 = vmatprep.subr.mxu0 0.0
  %1176 = vmatpush1.xpose.msra.mxu0 0.0
  %1177 = vmatprep.subr.mxu0 0.0
  %1178 = vmatpush1.xpose.msra.mxu0 0.0
  %1179 = vmatprep.subr.mxu0 0.0
  %1180 = vmatpush1.xpose.msra.mxu0 0.0
  %1181 = vmatprep.subr.mxu0 0.0
  %1182 = vmatpush1.xpose.msra.mxu0 0.0
  %1183 = vmatprep.subr.mxu0 0.0
  %1184 = vmatpush1.xpose.msra.mxu0 0.0
  %1185 = vmatprep.subr.mxu0 0.0
  %1186 = vmatpush1.xpose.msra.mxu0 0.0
  %1187 = vmatprep.mubr.f32.mxu0 0.0
  %1188 = vmatmul.mubr.f32.gmra.mrb[0].mxu0 %v1119
  %v1189 = vpop.f32.mrb[0].mxu0
  %v1190 = vadd.f32 0.0, %v1189
  %v1191 = vpop.f32.mrb[0].mxu0
  %1192 = vdwg.mxu0
  %1193 = vrot.lane.b32.xlu0 %v323, 96
  %v1194 = vpop.permute.xlu0 %1193
  %v1196 = vsel %vm424, %v400, 0
  %v1198 = vsel %vm424, %v1194, 0
  %1200 = vmatprep.subr.mxu0 0.0
  %1201 = vmatpush1.xpose.msra.mxu0 %v1198
  %1202 = vmatprep.subr.mxu0 0.0
  %1203 = vmatpush1.xpose.msra.mxu0 0.0
  %1204 = vmatprep.subr.mxu0 0.0
  %1205 = vmatpush1.xpose.msra.mxu0 0.0
  %1206 = vmatprep.subr.mxu0 0.0
  %1207 = vmatpush1.xpose.msra.mxu0 0.0
  %1208 = vmatprep.subr.mxu0 0.0
  %1209 = vmatpush1.xpose.msra.mxu0 0.0
  %1210 = vmatprep.subr.mxu0 0.0
  %1211 = vmatpush1.xpose.msra.mxu0 0.0
  %1212 = vmatprep.subr.mxu0 0.0
  %1213 = vmatpush1.xpose.msra.mxu0 0.0
  %1214 = vmatprep.subr.mxu0 0.0
  %1215 = vmatpush1.xpose.msra.mxu0 0.0
  %1216 = vmatprep.subr.mxu0 0.0
  %1217 = vmatpush1.xpose.msra.mxu0 0.0
  %1218 = vmatprep.subr.mxu0 0.0
  %1219 = vmatpush1.xpose.msra.mxu0 0.0
  %1220 = vmatprep.subr.mxu0 0.0
  %1221 = vmatpush1.xpose.msra.mxu0 0.0
  %1222 = vmatprep.subr.mxu0 0.0
  %1223 = vmatpush1.xpose.msra.mxu0 0.0
  %1224 = vmatprep.subr.mxu0 0.0
  %1225 = vmatpush1.xpose.msra.mxu0 0.0
  %1226 = vmatprep.subr.mxu0 0.0
  %1227 = vmatpush1.xpose.msra.mxu0 0.0
  %1228 = vmatprep.subr.mxu0 0.0
  %1229 = vmatpush1.xpose.msra.mxu0 0.0
  %1230 = vmatprep.subr.mxu0 0.0
  %1231 = vmatpush1.xpose.msra.mxu0 0.0
  %1232 = vmatprep.subr.mxu0 0.0
  %1233 = vmatpush1.xpose.msra.mxu0 0.0
  %1234 = vmatprep.subr.mxu0 0.0
  %1235 = vmatpush1.xpose.msra.mxu0 0.0
  %1236 = vmatprep.subr.mxu0 0.0
  %1237 = vmatpush1.xpose.msra.mxu0 0.0
  %1238 = vmatprep.subr.mxu0 0.0
  %1239 = vmatpush1.xpose.msra.mxu0 0.0
  %1240 = vmatprep.subr.mxu0 0.0
  %1241 = vmatpush1.xpose.msra.mxu0 0.0
  %1242 = vmatprep.subr.mxu0 0.0
  %1243 = vmatpush1.xpose.msra.mxu0 0.0
  %1244 = vmatprep.subr.mxu0 0.0
  %1245 = vmatpush1.xpose.msra.mxu0 0.0
  %1246 = vmatprep.subr.mxu0 0.0
  %1247 = vmatpush1.xpose.msra.mxu0 0.0
  %1248 = vmatprep.subr.mxu0 0.0
  %1249 = vmatpush1.xpose.msra.mxu0 0.0
  %1250 = vmatprep.subr.mxu0 0.0
  %1251 = vmatpush1.xpose.msra.mxu0 0.0
  %1252 = vmatprep.subr.mxu0 0.0
  %1253 = vmatpush1.xpose.msra.mxu0 0.0
  %1254 = vmatprep.subr.mxu0 0.0
  %1255 = vmatpush1.xpose.msra.mxu0 0.0
  %1256 = vmatprep.subr.mxu0 0.0
  %1257 = vmatpush1.xpose.msra.mxu0 0.0
  %1258 = vmatprep.subr.mxu0 0.0
  %1259 = vmatpush1.xpose.msra.mxu0 0.0
  %1260 = vmatprep.subr.mxu0 0.0
  %1261 = vmatpush1.xpose.msra.mxu0 0.0
  %1262 = vmatprep.subr.mxu0 0.0
  %1263 = vmatpush1.xpose.msra.mxu0 0.0
  %1264 = vmatprep.mubr.f32.mxu0 0.0
  %1265 = vmatmul.mubr.f32.gmra.mrb[0].mxu0 %v1196
  %v1266 = vpop.f32.mrb[0].mxu0
  %v1267 = vadd.f32 0.0, %v1266
  %v1268 = vpop.f32.mrb[0].mxu0
  %1269 = vdwg.mxu0
  %1270 = vrot.lane.b32.xlu0 %v325, 96
  %v1271 = vpop.permute.xlu0 %1270
  %v1273 = vsel %vm424, %v401, 0
  %v1275 = vsel %vm424, %v1271, 0
  %1277 = vmatprep.subr.mxu0 0.0
  %1278 = vmatpush1.xpose.msra.mxu0 %v1275
  %1279 = vmatprep.subr.mxu0 0.0
  %1280 = vmatpush1.xpose.msra.mxu0 0.0
  %1281 = vmatprep.subr.mxu0 0.0
  %1282 = vmatpush1.xpose.msra.mxu0 0.0
  %1283 = vmatprep.subr.mxu0 0.0
  %1284 = vmatpush1.xpose.msra.mxu0 0.0
  %1285 = vmatprep.subr.mxu0 0.0
  %1286 = vmatpush1.xpose.msra.mxu0 0.0
  %1287 = vmatprep.subr.mxu0 0.0
  %1288 = vmatpush1.xpose.msra.mxu0 0.0
  %1289 = vmatprep.subr.mxu0 0.0
  %1290 = vmatpush1.xpose.msra.mxu0 0.0
  %1291 = vmatprep.subr.mxu0 0.0
  %1292 = vmatpush1.xpose.msra.mxu0 0.0
  %1293 = vmatprep.subr.mxu0 0.0
  %1294 = vmatpush1.xpose.msra.mxu0 0.0
  %1295 = vmatprep.subr.mxu0 0.0
  %1296 = vmatpush1.xpose.msra.mxu0 0.0
  %1297 = vmatprep.subr.mxu0 0.0
  %1298 = vmatpush1.xpose.msra.mxu0 0.0
  %1299 = vmatprep.subr.mxu0 0.0
  %1300 = vmatpush1.xpose.msra.mxu0 0.0
  %1301 = vmatprep.subr.mxu0 0.0
  %1302 = vmatpush1.xpose.msra.mxu0 0.0
  %1303 = vmatprep.subr.mxu0 0.0
  %1304 = vmatpush1.xpose.msra.mxu0 0.0
  %1305 = vmatprep.subr.mxu0 0.0
  %1306 = vmatpush1.xpose.msra.mxu0 0.0
  %1307 = vmatprep.subr.mxu0 0.0
  %1308 = vmatpush1.xpose.msra.mxu0 0.0
  %1309 = vmatprep.subr.mxu0 0.0
  %1310 = vmatpush1.xpose.msra.mxu0 0.0
  %1311 = vmatprep.subr.mxu0 0.0
  %1312 = vmatpush1.xpose.msra.mxu0 0.0
  %1313 = vmatprep.subr.mxu0 0.0
  %1314 = vmatpush1.xpose.msra.mxu0 0.0
  %1315 = vmatprep.subr.mxu0 0.0
  %1316 = vmatpush1.xpose.msra.mxu0 0.0
  %1317 = vmatprep.subr.mxu0 0.0
  %1318 = vmatpush1.xpose.msra.mxu0 0.0
  %1319 = vmatprep.subr.mxu0 0.0
  %1320 = vmatpush1.xpose.msra.mxu0 0.0
  %1321 = vmatprep.subr.mxu0 0.0
  %1322 = vmatpush1.xpose.msra.mxu0 0.0
  %1323 = vmatprep.subr.mxu0 0.0
  %1324 = vmatpush1.xpose.msra.mxu0 0.0
  %1325 = vmatprep.subr.mxu0 0.0
  %1326 = vmatpush1.xpose.msra.mxu0 0.0
  %1327 = vmatprep.subr.mxu0 0.0
  %1328 = vmatpush1.xpose.msra.mxu0 0.0
  %1329 = vmatprep.subr.mxu0 0.0
  %1330 = vmatpush1.xpose.msra.mxu0 0.0
  %1331 = vmatprep.subr.mxu0 0.0
  %1332 = vmatpush1.xpose.msra.mxu0 0.0
  %1333 = vmatprep.subr.mxu0 0.0
  %1334 = vmatpush1.xpose.msra.mxu0 0.0
  %1335 = vmatprep.subr.mxu0 0.0
  %1336 = vmatpush1.xpose.msra.mxu0 0.0
  %1337 = vmatprep.subr.mxu0 0.0
  %1338 = vmatpush1.xpose.msra.mxu0 0.0
  %1339 = vmatprep.subr.mxu0 0.0
  %1340 = vmatpush1.xpose.msra.mxu0 0.0
  %1341 = vmatprep.mubr.f32.mxu0 0.0
  %1342 = vmatmul.mubr.f32.gmra.mrb[0].mxu0 %v1273
  %v1343 = vpop.f32.mrb[0].mxu0
  %v1344 = vadd.f32 0.0, %v1343
  %v1345 = vpop.f32.mrb[0].mxu0
  %1346 = vdwg.mxu0
  %1347 = vrot.lane.b32.xlu0 %v327, 96
  %v1348 = vpop.permute.xlu0 %1347
  %v1350 = vsel %vm424, %v402, 0
  %v1352 = vsel %vm424, %v1348, 0
  %1354 = vmatprep.subr.mxu0 0.0
  %1355 = vmatpush1.xpose.msra.mxu0 %v1352
  %1356 = vmatprep.subr.mxu0 0.0
  %1357 = vmatpush1.xpose.msra.mxu0 0.0
  %1358 = vmatprep.subr.mxu0 0.0
  %1359 = vmatpush1.xpose.msra.mxu0 0.0
  %1360 = vmatprep.subr.mxu0 0.0
  %1361 = vmatpush1.xpose.msra.mxu0 0.0
  %1362 = vmatprep.subr.mxu0 0.0
  %1363 = vmatpush1.xpose.msra.mxu0 0.0
  %1364 = vmatprep.subr.mxu0 0.0
  %1365 = vmatpush1.xpose.msra.mxu0 0.0
  %1366 = vmatprep.subr.mxu0 0.0
  %1367 = vmatpush1.xpose.msra.mxu0 0.0
  %1368 = vmatprep.subr.mxu0 0.0
  %1369 = vmatpush1.xpose.msra.mxu0 0.0
  %1370 = vmatprep.subr.mxu0 0.0
  %1371 = vmatpush1.xpose.msra.mxu0 0.0
  %1372 = vmatprep.subr.mxu0 0.0
  %1373 = vmatpush1.xpose.msra.mxu0 0.0
  %1374 = vmatprep.subr.mxu0 0.0
  %1375 = vmatpush1.xpose.msra.mxu0 0.0
  %1376 = vmatprep.subr.mxu0 0.0
  %1377 = vmatpush1.xpose.msra.mxu0 0.0
  %1378 = vmatprep.subr.mxu0 0.0
  %1379 = vmatpush1.xpose.msra.mxu0 0.0
  %1380 = vmatprep.subr.mxu0 0.0
  %1381 = vmatpush1.xpose.msra.mxu0 0.0
  %1382 = vmatprep.subr.mxu0 0.0
  %1383 = vmatpush1.xpose.msra.mxu0 0.0
  %1384 = vmatprep.subr.mxu0 0.0
  %1385 = vmatpush1.xpose.msra.mxu0 0.0
  %1386 = vmatprep.subr.mxu0 0.0
  %1387 = vmatpush1.xpose.msra.mxu0 0.0
  %1388 = vmatprep.subr.mxu0 0.0
  %1389 = vmatpush1.xpose.msra.mxu0 0.0
  %1390 = vmatprep.subr.mxu0 0.0
  %1391 = vmatpush1.xpose.msra.mxu0 0.0
  %1392 = vmatprep.subr.mxu0 0.0
  %1393 = vmatpush1.xpose.msra.mxu0 0.0
  %1394 = vmatprep.subr.mxu0 0.0
  %1395 = vmatpush1.xpose.msra.mxu0 0.0
  %1396 = vmatprep.subr.mxu0 0.0
  %1397 = vmatpush1.xpose.msra.mxu0 0.0
  %1398 = vmatprep.subr.mxu0 0.0
  %1399 = vmatpush1.xpose.msra.mxu0 0.0
  %1400 = vmatprep.subr.mxu0 0.0
  %1401 = vmatpush1.xpose.msra.mxu0 0.0
  %1402 = vmatprep.subr.mxu0 0.0
  %1403 = vmatpush1.xpose.msra.mxu0 0.0
  %1404 = vmatprep.subr.mxu0 0.0
  %1405 = vmatpush1.xpose.msra.mxu0 0.0
  %1406 = vmatprep.subr.mxu0 0.0
  %1407 = vmatpush1.xpose.msra.mxu0 0.0
  %1408 = vmatprep.subr.mxu0 0.0
  %1409 = vmatpush1.xpose.msra.mxu0 0.0
  %1410 = vmatprep.subr.mxu0 0.0
  %1411 = vmatpush1.xpose.msra.mxu0 0.0
  %1412 = vmatprep.subr.mxu0 0.0
  %1413 = vmatpush1.xpose.msra.mxu0 0.0
  %1414 = vmatprep.subr.mxu0 0.0
  %1415 = vmatpush1.xpose.msra.mxu0 0.0
  %1416 = vmatprep.subr.mxu0 0.0
  %1417 = vmatpush1.xpose.msra.mxu0 0.0
  %1418 = vmatprep.mubr.f32.mxu0 0.0
  %1419 = vmatmul.mubr.f32.gmra.mrb[0].mxu0 %v1350
  %v1420 = vpop.f32.mrb[0].mxu0
  %v1421 = vadd.f32 0.0, %v1420
  %v1422 = vpop.f32.mrb[0].mxu0
  %1423 = vdwg.mxu0
  %1424 = vrot.lane.b32.xlu0 %v329, 96
  %v1425 = vpop.permute.xlu0 %1424
  %v1427 = vsel %vm424, %v403, 0
  %v1429 = vsel %vm424, %v1425, 0
  %1431 = vmatprep.subr.mxu0 0.0
  %1432 = vmatpush1.xpose.msra.mxu0 %v1429
  %1433 = vmatprep.subr.mxu0 0.0
  %1434 = vmatpush1.xpose.msra.mxu0 0.0
  %1435 = vmatprep.subr.mxu0 0.0
  %1436 = vmatpush1.xpose.msra.mxu0 0.0
  %1437 = vmatprep.subr.mxu0 0.0
  %1438 = vmatpush1.xpose.msra.mxu0 0.0
  %1439 = vmatprep.subr.mxu0 0.0
  %1440 = vmatpush1.xpose.msra.mxu0 0.0
  %1441 = vmatprep.subr.mxu0 0.0
  %1442 = vmatpush1.xpose.msra.mxu0 0.0
  %1443 = vmatprep.subr.mxu0 0.0
  %1444 = vmatpush1.xpose.msra.mxu0 0.0
  %1445 = vmatprep.subr.mxu0 0.0
  %1446 = vmatpush1.xpose.msra.mxu0 0.0
  %1447 = vmatprep.subr.mxu0 0.0
  %1448 = vmatpush1.xpose.msra.mxu0 0.0
  %1449 = vmatprep.subr.mxu0 0.0
  %1450 = vmatpush1.xpose.msra.mxu0 0.0
  %1451 = vmatprep.subr.mxu0 0.0
  %1452 = vmatpush1.xpose.msra.mxu0 0.0
  %1453 = vmatprep.subr.mxu0 0.0
  %1454 = vmatpush1.xpose.msra.mxu0 0.0
  %1455 = vmatprep.subr.mxu0 0.0
  %1456 = vmatpush1.xpose.msra.mxu0 0.0
  %1457 = vmatprep.subr.mxu0 0.0
  %1458 = vmatpush1.xpose.msra.mxu0 0.0
  %1459 = vmatprep.subr.mxu0 0.0
  %1460 = vmatpush1.xpose.msra.mxu0 0.0
  %1461 = vmatprep.subr.mxu0 0.0
  %1462 = vmatpush1.xpose.msra.mxu0 0.0
  %1463 = vmatprep.subr.mxu0 0.0
  %1464 = vmatpush1.xpose.msra.mxu0 0.0
  %1465 = vmatprep.subr.mxu0 0.0
  %1466 = vmatpush1.xpose.msra.mxu0 0.0
  %1467 = vmatprep.subr.mxu0 0.0
  %1468 = vmatpush1.xpose.msra.mxu0 0.0
  %1469 = vmatprep.subr.mxu0 0.0
  %1470 = vmatpush1.xpose.msra.mxu0 0.0
  %1471 = vmatprep.subr.mxu0 0.0
  %1472 = vmatpush1.xpose.msra.mxu0 0.0
  %1473 = vmatprep.subr.mxu0 0.0
  %1474 = vmatpush1.xpose.msra.mxu0 0.0
  %1475 = vmatprep.subr.mxu0 0.0
  %1476 = vmatpush1.xpose.msra.mxu0 0.0
  %1477 = vmatprep.subr.mxu0 0.0
  %1478 = vmatpush1.xpose.msra.mxu0 0.0
  %1479 = vmatprep.subr.mxu0 0.0
  %1480 = vmatpush1.xpose.msra.mxu0 0.0
  %1481 = vmatprep.subr.mxu0 0.0
  %1482 = vmatpush1.xpose.msra.mxu0 0.0
  %1483 = vmatprep.subr.mxu0 0.0
  %1484 = vmatpush1.xpose.msra.mxu0 0.0
  %1485 = vmatprep.subr.mxu0 0.0
  %1486 = vmatpush1.xpose.msra.mxu0 0.0
  %1487 = vmatprep.subr.mxu0 0.0
  %1488 = vmatpush1.xpose.msra.mxu0 0.0
  %1489 = vmatprep.subr.mxu0 0.0
  %1490 = vmatpush1.xpose.msra.mxu0 0.0
  %1491 = vmatprep.subr.mxu0 0.0
  %1492 = vmatpush1.xpose.msra.mxu0 0.0
  %1493 = vmatprep.subr.mxu0 0.0
  %1494 = vmatpush1.xpose.msra.mxu0 0.0
  %1495 = vmatprep.mubr.f32.mxu0 0.0
  %1496 = vmatmul.mubr.f32.gmra.mrb[0].mxu0 %v1427
  %v1497 = vpop.f32.mrb[0].mxu0
  %v1498 = vadd.f32 0.0, %v1497
  %v1499 = vpop.f32.mrb[0].mxu0
  %1500 = vdwg.mxu0
  %1501 = vrot.lane.b32.xlu0 %v331, 96
  %v1502 = vpop.permute.xlu0 %1501
  %v1504 = vsel %vm424, %v404, 0
  %v1506 = vsel %vm424, %v1502, 0
  %1508 = vmatprep.subr.mxu0 0.0
  %1509 = vmatpush1.xpose.msra.mxu0 %v1506
  %1510 = vmatprep.subr.mxu0 0.0
  %1511 = vmatpush1.xpose.msra.mxu0 0.0
  %1512 = vmatprep.subr.mxu0 0.0
  %1513 = vmatpush1.xpose.msra.mxu0 0.0
  %1514 = vmatprep.subr.mxu0 0.0
  %1515 = vmatpush1.xpose.msra.mxu0 0.0
  %1516 = vmatprep.subr.mxu0 0.0
  %1517 = vmatpush1.xpose.msra.mxu0 0.0
  %1518 = vmatprep.subr.mxu0 0.0
  %1519 = vmatpush1.xpose.msra.mxu0 0.0
  %1520 = vmatprep.subr.mxu0 0.0
  %1521 = vmatpush1.xpose.msra.mxu0 0.0
  %1522 = vmatprep.subr.mxu0 0.0
  %1523 = vmatpush1.xpose.msra.mxu0 0.0
  %1524 = vmatprep.subr.mxu0 0.0
  %1525 = vmatpush1.xpose.msra.mxu0 0.0
  %1526 = vmatprep.subr.mxu0 0.0
  %1527 = vmatpush1.xpose.msra.mxu0 0.0
  %1528 = vmatprep.subr.mxu0 0.0
  %1529 = vmatpush1.xpose.msra.mxu0 0.0
  %1530 = vmatprep.subr.mxu0 0.0
  %1531 = vmatpush1.xpose.msra.mxu0 0.0
  %1532 = vmatprep.subr.mxu0 0.0
  %1533 = vmatpush1.xpose.msra.mxu0 0.0
  %1534 = vmatprep.subr.mxu0 0.0
  %1535 = vmatpush1.xpose.msra.mxu0 0.0
  %1536 = vmatprep.subr.mxu0 0.0
  %1537 = vmatpush1.xpose.msra.mxu0 0.0
  %1538 = vmatprep.subr.mxu0 0.0
  %1539 = vmatpush1.xpose.msra.mxu0 0.0
  %1540 = vmatprep.subr.mxu0 0.0
  %1541 = vmatpush1.xpose.msra.mxu0 0.0
  %1542 = vmatprep.subr.mxu0 0.0
  %1543 = vmatpush1.xpose.msra.mxu0 0.0
  %1544 = vmatprep.subr.mxu0 0.0
  %1545 = vmatpush1.xpose.msra.mxu0 0.0
  %1546 = vmatprep.subr.mxu0 0.0
  %1547 = vmatpush1.xpose.msra.mxu0 0.0
  %1548 = vmatprep.subr.mxu0 0.0
  %1549 = vmatpush1.xpose.msra.mxu0 0.0
  %1550 = vmatprep.subr.mxu0 0.0
  %1551 = vmatpush1.xpose.msra.mxu0 0.0
  %1552 = vmatprep.subr.mxu0 0.0
  %1553 = vmatpush1.xpose.msra.mxu0 0.0
  %1554 = vmatprep.subr.mxu0 0.0
  %1555 = vmatpush1.xpose.msra.mxu0 0.0
  %1556 = vmatprep.subr.mxu0 0.0
  %1557 = vmatpush1.xpose.msra.mxu0 0.0
  %1558 = vmatprep.subr.mxu0 0.0
  %1559 = vmatpush1.xpose.msra.mxu0 0.0
  %1560 = vmatprep.subr.mxu0 0.0
  %1561 = vmatpush1.xpose.msra.mxu0 0.0
  %1562 = vmatprep.subr.mxu0 0.0
  %1563 = vmatpush1.xpose.msra.mxu0 0.0
  %1564 = vmatprep.subr.mxu0 0.0
  %1565 = vmatpush1.xpose.msra.mxu0 0.0
  %1566 = vmatprep.subr.mxu0 0.0
  %1567 = vmatpush1.xpose.msra.mxu0 0.0
  %1568 = vmatprep.subr.mxu0 0.0
  %1569 = vmatpush1.xpose.msra.mxu0 0.0
  %1570 = vmatprep.subr.mxu0 0.0
  %1571 = vmatpush1.xpose.msra.mxu0 0.0
  %1572 = vmatprep.mubr.f32.mxu0 0.0
  %1573 = vmatmul.mubr.f32.gmra.mrb[0].mxu0 %v1504
  %v1574 = vpop.f32.mrb[0].mxu0
  %v1575 = vadd.f32 0.0, %v1574
  %v1576 = vpop.f32.mrb[0].mxu0
  %1577 = vdwg.mxu0
  %1578 = vrot.lane.b32.xlu0 %v333, 96
  %v1579 = vpop.permute.xlu0 %1578
  %v1581 = vsel %vm424, %v405, 0
  %v1583 = vsel %vm424, %v1579, 0
  %1585 = vmatprep.subr.mxu0 0.0
  %1586 = vmatpush1.xpose.msra.mxu0 %v1583
  %1587 = vmatprep.subr.mxu0 0.0
  %1588 = vmatpush1.xpose.msra.mxu0 0.0
  %1589 = vmatprep.subr.mxu0 0.0
  %1590 = vmatpush1.xpose.msra.mxu0 0.0
  %1591 = vmatprep.subr.mxu0 0.0
  %1592 = vmatpush1.xpose.msra.mxu0 0.0
  %1593 = vmatprep.subr.mxu0 0.0
  %1594 = vmatpush1.xpose.msra.mxu0 0.0
  %1595 = vmatprep.subr.mxu0 0.0
  %1596 = vmatpush1.xpose.msra.mxu0 0.0
  %1597 = vmatprep.subr.mxu0 0.0
  %1598 = vmatpush1.xpose.msra.mxu0 0.0
  %1599 = vmatprep.subr.mxu0 0.0
  %1600 = vmatpush1.xpose.msra.mxu0 0.0
  %1601 = vmatprep.subr.mxu0 0.0
  %1602 = vmatpush1.xpose.msra.mxu0 0.0
  %1603 = vmatprep.subr.mxu0 0.0
  %1604 = vmatpush1.xpose.msra.mxu0 0.0
  %1605 = vmatprep.subr.mxu0 0.0
  %1606 = vmatpush1.xpose.msra.mxu0 0.0
  %1607 = vmatprep.subr.mxu0 0.0
  %1608 = vmatpush1.xpose.msra.mxu0 0.0
  %1609 = vmatprep.subr.mxu0 0.0
  %1610 = vmatpush1.xpose.msra.mxu0 0.0
  %1611 = vmatprep.subr.mxu0 0.0
  %1612 = vmatpush1.xpose.msra.mxu0 0.0
  %1613 = vmatprep.subr.mxu0 0.0
  %1614 = vmatpush1.xpose.msra.mxu0 0.0
  %1615 = vmatprep.subr.mxu0 0.0
  %1616 = vmatpush1.xpose.msra.mxu0 0.0
  %1617 = vmatprep.subr.mxu0 0.0
  %1618 = vmatpush1.xpose.msra.mxu0 0.0
  %1619 = vmatprep.subr.mxu0 0.0
  %1620 = vmatpush1.xpose.msra.mxu0 0.0
  %1621 = vmatprep.subr.mxu0 0.0
  %1622 = vmatpush1.xpose.msra.mxu0 0.0
  %1623 = vmatprep.subr.mxu0 0.0
  %1624 = vmatpush1.xpose.msra.mxu0 0.0
  %1625 = vmatprep.subr.mxu0 0.0
  %1626 = vmatpush1.xpose.msra.mxu0 0.0
  %1627 = vmatprep.subr.mxu0 0.0
  %1628 = vmatpush1.xpose.msra.mxu0 0.0
  %1629 = vmatprep.subr.mxu0 0.0
  %1630 = vmatpush1.xpose.msra.mxu0 0.0
  %1631 = vmatprep.subr.mxu0 0.0
  %1632 = vmatpush1.xpose.msra.mxu0 0.0
  %1633 = vmatprep.subr.mxu0 0.0
  %1634 = vmatpush1.xpose.msra.mxu0 0.0
  %1635 = vmatprep.subr.mxu0 0.0
  %1636 = vmatpush1.xpose.msra.mxu0 0.0
  %1637 = vmatprep.subr.mxu0 0.0
  %1638 = vmatpush1.xpose.msra.mxu0 0.0
  %1639 = vmatprep.subr.mxu0 0.0
  %1640 = vmatpush1.xpose.msra.mxu0 0.0
  %1641 = vmatprep.subr.mxu0 0.0
  %1642 = vmatpush1.xpose.msra.mxu0 0.0
  %1643 = vmatprep.subr.mxu0 0.0
  %1644 = vmatpush1.xpose.msra.mxu0 0.0
  %1645 = vmatprep.subr.mxu0 0.0
  %1646 = vmatpush1.xpose.msra.mxu0 0.0
  %1647 = vmatprep.subr.mxu0 0.0
  %1648 = vmatpush1.xpose.msra.mxu0 0.0
  %1649 = vmatprep.mubr.f32.mxu0 0.0
  %1650 = vmatmul.mubr.f32.gmra.mrb[0].mxu0 %v1581
  %v1651 = vpop.f32.mrb[0].mxu0
  %v1652 = vadd.f32 0.0, %v1651
  %v1653 = vpop.f32.mrb[0].mxu0
  %1654 = vdwg.mxu0
  %1655 = vrot.lane.b32.xlu0 %v343, 96
  %v1656 = vpop.permute.xlu0 %1655
  %v1658 = vsel %vm424, %v406, 0
  %v1660 = vsel %vm424, %v1656, 0
  %1662 = vmatprep.subr.mxu0 0.0
  %1663 = vmatpush1.xpose.msra.mxu0 %v1660
  %1664 = vmatprep.subr.mxu0 0.0
  %1665 = vmatpush1.xpose.msra.mxu0 0.0
  %1666 = vmatprep.subr.mxu0 0.0
  %1667 = vmatpush1.xpose.msra.mxu0 0.0
  %1668 = vmatprep.subr.mxu0 0.0
  %1669 = vmatpush1.xpose.msra.mxu0 0.0
  %1670 = vmatprep.subr.mxu0 0.0
  %1671 = vmatpush1.xpose.msra.mxu0 0.0
  %1672 = vmatprep.subr.mxu0 0.0
  %1673 = vmatpush1.xpose.msra.mxu0 0.0
  %1674 = vmatprep.subr.mxu0 0.0
  %1675 = vmatpush1.xpose.msra.mxu0 0.0
  %1676 = vmatprep.subr.mxu0 0.0
  %1677 = vmatpush1.xpose.msra.mxu0 0.0
  %1678 = vmatprep.subr.mxu0 0.0
  %1679 = vmatpush1.xpose.msra.mxu0 0.0
  %1680 = vmatprep.subr.mxu0 0.0
  %1681 = vmatpush1.xpose.msra.mxu0 0.0
  %1682 = vmatprep.subr.mxu0 0.0
  %1683 = vmatpush1.xpose.msra.mxu0 0.0
  %1684 = vmatprep.subr.mxu0 0.0
  %1685 = vmatpush1.xpose.msra.mxu0 0.0
  %1686 = vmatprep.subr.mxu0 0.0
  %1687 = vmatpush1.xpose.msra.mxu0 0.0
  %1688 = vmatprep.subr.mxu0 0.0
  %1689 = vmatpush1.xpose.msra.mxu0 0.0
  %1690 = vmatprep.subr.mxu0 0.0
  %1691 = vmatpush1.xpose.msra.mxu0 0.0
  %1692 = vmatprep.subr.mxu0 0.0
  %1693 = vmatpush1.xpose.msra.mxu0 0.0
  %1694 = vmatprep.subr.mxu0 0.0
  %1695 = vmatpush1.xpose.msra.mxu0 0.0
  %1696 = vmatprep.subr.mxu0 0.0
  %1697 = vmatpush1.xpose.msra.mxu0 0.0
  %1698 = vmatprep.subr.mxu0 0.0
  %1699 = vmatpush1.xpose.msra.mxu0 0.0
  %1700 = vmatprep.subr.mxu0 0.0
  %1701 = vmatpush1.xpose.msra.mxu0 0.0
  %1702 = vmatprep.subr.mxu0 0.0
  %1703 = vmatpush1.xpose.msra.mxu0 0.0
  %1704 = vmatprep.subr.mxu0 0.0
  %1705 = vmatpush1.xpose.msra.mxu0 0.0
  %1706 = vmatprep.subr.mxu0 0.0
  %1707 = vmatpush1.xpose.msra.mxu0 0.0
  %1708 = vmatprep.subr.mxu0 0.0
  %1709 = vmatpush1.xpose.msra.mxu0 0.0
  %1710 = vmatprep.subr.mxu0 0.0
  %1711 = vmatpush1.xpose.msra.mxu0 0.0
  %1712 = vmatprep.subr.mxu0 0.0
  %1713 = vmatpush1.xpose.msra.mxu0 0.0
  %1714 = vmatprep.subr.mxu0 0.0
  %1715 = vmatpush1.xpose.msra.mxu0 0.0
  %1716 = vmatprep.subr.mxu0 0.0
  %1717 = vmatpush1.xpose.msra.mxu0 0.0
  %1718 = vmatprep.subr.mxu0 0.0
  %1719 = vmatpush1.xpose.msra.mxu0 0.0
  %1720 = vmatprep.subr.mxu0 0.0
  %1721 = vmatpush1.xpose.msra.mxu0 0.0
  %1722 = vmatprep.subr.mxu0 0.0
  %1723 = vmatpush1.xpose.msra.mxu0 0.0
  %1724 = vmatprep.subr.mxu0 0.0
  %1725 = vmatpush1.xpose.msra.mxu0 0.0
  %1726 = vmatprep.mubr.f32.mxu0 0.0
  %1727 = vmatmul.mubr.f32.gmra.mrb[0].mxu0 %v1658
  %v1728 = vpop.f32.mrb[0].mxu0
  %v1729 = vadd.f32 0.0, %v1728
  %v1730 = vpop.f32.mrb[0].mxu0
  %1731 = vdwg.mxu0
  %1732 = vrot.lane.b32.xlu0 %v345, 96
  %v1733 = vpop.permute.xlu0 %1732
  %v1735 = vsel %vm424, %v407, 0
  %v1737 = vsel %vm424, %v1733, 0
  %1739 = vmatprep.subr.mxu0 0.0
  %1740 = vmatpush1.xpose.msra.mxu0 %v1737
  %1741 = vmatprep.subr.mxu0 0.0
  %1742 = vmatpush1.xpose.msra.mxu0 0.0
  %1743 = vmatprep.subr.mxu0 0.0
  %1744 = vmatpush1.xpose.msra.mxu0 0.0
  %1745 = vmatprep.subr.mxu0 0.0
  %1746 = vmatpush1.xpose.msra.mxu0 0.0
  %1747 = vmatprep.subr.mxu0 0.0
  %1748 = vmatpush1.xpose.msra.mxu0 0.0
  %1749 = vmatprep.subr.mxu0 0.0
  %1750 = vmatpush1.xpose.msra.mxu0 0.0
  %1751 = vmatprep.subr.mxu0 0.0
  %1752 = vmatpush1.xpose.msra.mxu0 0.0
  %1753 = vmatprep.subr.mxu0 0.0
  %1754 = vmatpush1.xpose.msra.mxu0 0.0
  %1755 = vmatprep.subr.mxu0 0.0
  %1756 = vmatpush1.xpose.msra.mxu0 0.0
  %1757 = vmatprep.subr.mxu0 0.0
  %1758 = vmatpush1.xpose.msra.mxu0 0.0
  %1759 = vmatprep.subr.mxu0 0.0
  %1760 = vmatpush1.xpose.msra.mxu0 0.0
  %1761 = vmatprep.subr.mxu0 0.0
  %1762 = vmatpush1.xpose.msra.mxu0 0.0
  %1763 = vmatprep.subr.mxu0 0.0
  %1764 = vmatpush1.xpose.msra.mxu0 0.0
  %1765 = vmatprep.subr.mxu0 0.0
  %1766 = vmatpush1.xpose.msra.mxu0 0.0
  %1767 = vmatprep.subr.mxu0 0.0
  %1768 = vmatpush1.xpose.msra.mxu0 0.0
  %1769 = vmatprep.subr.mxu0 0.0
  %1770 = vmatpush1.xpose.msra.mxu0 0.0
  %1771 = vmatprep.subr.mxu0 0.0
  %1772 = vmatpush1.xpose.msra.mxu0 0.0
  %1773 = vmatprep.subr.mxu0 0.0
  %1774 = vmatpush1.xpose.msra.mxu0 0.0
  %1775 = vmatprep.subr.mxu0 0.0
  %1776 = vmatpush1.xpose.msra.mxu0 0.0
  %1777 = vmatprep.subr.mxu0 0.0
  %1778 = vmatpush1.xpose.msra.mxu0 0.0
  %1779 = vmatprep.subr.mxu0 0.0
  %1780 = vmatpush1.xpose.msra.mxu0 0.0
  %1781 = vmatprep.subr.mxu0 0.0
  %1782 = vmatpush1.xpose.msra.mxu0 0.0
  %1783 = vmatprep.subr.mxu0 0.0
  %1784 = vmatpush1.xpose.msra.mxu0 0.0
  %1785 = vmatprep.subr.mxu0 0.0
  %1786 = vmatpush1.xpose.msra.mxu0 0.0
  %1787 = vmatprep.subr.mxu0 0.0
  %1788 = vmatpush1.xpose.msra.mxu0 0.0
  %1789 = vmatprep.subr.mxu0 0.0
  %1790 = vmatpush1.xpose.msra.mxu0 0.0
  %1791 = vmatprep.subr.mxu0 0.0
  %1792 = vmatpush1.xpose.msra.mxu0 0.0
  %1793 = vmatprep.subr.mxu0 0.0
  %1794 = vmatpush1.xpose.msra.mxu0 0.0
  %1795 = vmatprep.subr.mxu0 0.0
  %1796 = vmatpush1.xpose.msra.mxu0 0.0
  %1797 = vmatprep.subr.mxu0 0.0
  %1798 = vmatpush1.xpose.msra.mxu0 0.0
  %1799 = vmatprep.subr.mxu0 0.0
  %1800 = vmatpush1.xpose.msra.mxu0 0.0
  %1801 = vmatprep.subr.mxu0 0.0
  %1802 = vmatpush1.xpose.msra.mxu0 0.0
  %1803 = vmatprep.mubr.f32.mxu0 0.0
  %1804 = vmatmul.mubr.f32.gmra.mrb[0].mxu0 %v1735
  %v1805 = vpop.f32.mrb[0].mxu0
  %v1806 = vadd.f32 0.0, %v1805
  %v1807 = vpop.f32.mrb[0].mxu0
  %1808 = vdwg.mxu0
  %1809 = vrot.lane.b32.xlu0 %v347, 96
  %v1810 = vpop.permute.xlu0 %1809
  %v1812 = vsel %vm424, %v408, 0
  %v1814 = vsel %vm424, %v1810, 0
  %1816 = vmatprep.subr.mxu0 0.0
  %1817 = vmatpush1.xpose.msra.mxu0 %v1814
  %1818 = vmatprep.subr.mxu0 0.0
  %1819 = vmatpush1.xpose.msra.mxu0 0.0
  %1820 = vmatprep.subr.mxu0 0.0
  %1821 = vmatpush1.xpose.msra.mxu0 0.0
  %1822 = vmatprep.subr.mxu0 0.0
  %1823 = vmatpush1.xpose.msra.mxu0 0.0
  %1824 = vmatprep.subr.mxu0 0.0
  %1825 = vmatpush1.xpose.msra.mxu0 0.0
  %1826 = vmatprep.subr.mxu0 0.0
  %1827 = vmatpush1.xpose.msra.mxu0 0.0
  %1828 = vmatprep.subr.mxu0 0.0
  %1829 = vmatpush1.xpose.msra.mxu0 0.0
  %1830 = vmatprep.subr.mxu0 0.0
  %1831 = vmatpush1.xpose.msra.mxu0 0.0
  %1832 = vmatprep.subr.mxu0 0.0
  %1833 = vmatpush1.xpose.msra.mxu0 0.0
  %1834 = vmatprep.subr.mxu0 0.0
  %1835 = vmatpush1.xpose.msra.mxu0 0.0
  %1836 = vmatprep.subr.mxu0 0.0
  %1837 = vmatpush1.xpose.msra.mxu0 0.0
  %1838 = vmatprep.subr.mxu0 0.0
  %1839 = vmatpush1.xpose.msra.mxu0 0.0
  %1840 = vmatprep.subr.mxu0 0.0
  %1841 = vmatpush1.xpose.msra.mxu0 0.0
  %1842 = vmatprep.subr.mxu0 0.0
  %1843 = vmatpush1.xpose.msra.mxu0 0.0
  %1844 = vmatprep.subr.mxu0 0.0
  %1845 = vmatpush1.xpose.msra.mxu0 0.0
  %1846 = vmatprep.subr.mxu0 0.0
  %1847 = vmatpush1.xpose.msra.mxu0 0.0
  %1848 = vmatprep.subr.mxu0 0.0
  %1849 = vmatpush1.xpose.msra.mxu0 0.0
  %1850 = vmatprep.subr.mxu0 0.0
  %1851 = vmatpush1.xpose.msra.mxu0 0.0
  %1852 = vmatprep.subr.mxu0 0.0
  %1853 = vmatpush1.xpose.msra.mxu0 0.0
  %1854 = vmatprep.subr.mxu0 0.0
  %1855 = vmatpush1.xpose.msra.mxu0 0.0
  %1856 = vmatprep.subr.mxu0 0.0
  %1857 = vmatpush1.xpose.msra.mxu0 0.0
  %1858 = vmatprep.subr.mxu0 0.0
  %1859 = vmatpush1.xpose.msra.mxu0 0.0
  %1860 = vmatprep.subr.mxu0 0.0
  %1861 = vmatpush1.xpose.msra.mxu0 0.0
  %1862 = vmatprep.subr.mxu0 0.0
  %1863 = vmatpush1.xpose.msra.mxu0 0.0
  %1864 = vmatprep.subr.mxu0 0.0
  %1865 = vmatpush1.xpose.msra.mxu0 0.0
  %1866 = vmatprep.subr.mxu0 0.0
  %1867 = vmatpush1.xpose.msra.mxu0 0.0
  %1868 = vmatprep.subr.mxu0 0.0
  %1869 = vmatpush1.xpose.msra.mxu0 0.0
  %1870 = vmatprep.subr.mxu0 0.0
  %1871 = vmatpush1.xpose.msra.mxu0 0.0
  %1872 = vmatprep.subr.mxu0 0.0
  %1873 = vmatpush1.xpose.msra.mxu0 0.0
  %1874 = vmatprep.subr.mxu0 0.0
  %1875 = vmatpush1.xpose.msra.mxu0 0.0
  %1876 = vmatprep.subr.mxu0 0.0
  %1877 = vmatpush1.xpose.msra.mxu0 0.0
  %1878 = vmatprep.subr.mxu0 0.0
  %1879 = vmatpush1.xpose.msra.mxu0 0.0
  %1880 = vmatprep.mubr.f32.mxu0 0.0
  %1881 = vmatmul.mubr.f32.gmra.mrb[0].mxu0 %v1812
  %v1882 = vpop.f32.mrb[0].mxu0
  %v1883 = vadd.f32 0.0, %v1882
  %v1884 = vpop.f32.mrb[0].mxu0
  %1885 = vdwg.mxu0
  %1886 = vrot.lane.b32.xlu0 %v349, 96
  %v1887 = vpop.permute.xlu0 %1886
  %v1889 = vsel %vm424, %v409, 0
  %v1891 = vsel %vm424, %v1887, 0
  %1893 = vmatprep.subr.mxu0 0.0
  %1894 = vmatpush1.xpose.msra.mxu0 %v1891
  %1895 = vmatprep.subr.mxu0 0.0
  %1896 = vmatpush1.xpose.msra.mxu0 0.0
  %1897 = vmatprep.subr.mxu0 0.0
  %1898 = vmatpush1.xpose.msra.mxu0 0.0
  %1899 = vmatprep.subr.mxu0 0.0
  %1900 = vmatpush1.xpose.msra.mxu0 0.0
  %1901 = vmatprep.subr.mxu0 0.0
  %1902 = vmatpush1.xpose.msra.mxu0 0.0
  %1903 = vmatprep.subr.mxu0 0.0
  %1904 = vmatpush1.xpose.msra.mxu0 0.0
  %1905 = vmatprep.subr.mxu0 0.0
  %1906 = vmatpush1.xpose.msra.mxu0 0.0
  %1907 = vmatprep.subr.mxu0 0.0
  %1908 = vmatpush1.xpose.msra.mxu0 0.0
  %1909 = vmatprep.subr.mxu0 0.0
  %1910 = vmatpush1.xpose.msra.mxu0 0.0
  %1911 = vmatprep.subr.mxu0 0.0
  %1912 = vmatpush1.xpose.msra.mxu0 0.0
  %1913 = vmatprep.subr.mxu0 0.0
  %1914 = vmatpush1.xpose.msra.mxu0 0.0
  %1915 = vmatprep.subr.mxu0 0.0
  %1916 = vmatpush1.xpose.msra.mxu0 0.0
  %1917 = vmatprep.subr.mxu0 0.0
  %1918 = vmatpush1.xpose.msra.mxu0 0.0
  %1919 = vmatprep.subr.mxu0 0.0
  %1920 = vmatpush1.xpose.msra.mxu0 0.0
  %1921 = vmatprep.subr.mxu0 0.0
  %1922 = vmatpush1.xpose.msra.mxu0 0.0
  %1923 = vmatprep.subr.mxu0 0.0
  %1924 = vmatpush1.xpose.msra.mxu0 0.0
  %1925 = vmatprep.subr.mxu0 0.0
  %1926 = vmatpush1.xpose.msra.mxu0 0.0
  %1927 = vmatprep.subr.mxu0 0.0
  %1928 = vmatpush1.xpose.msra.mxu0 0.0
  %1929 = vmatprep.subr.mxu0 0.0
  %1930 = vmatpush1.xpose.msra.mxu0 0.0
  %1931 = vmatprep.subr.mxu0 0.0
  %1932 = vmatpush1.xpose.msra.mxu0 0.0
  %1933 = vmatprep.subr.mxu0 0.0
  %1934 = vmatpush1.xpose.msra.mxu0 0.0
  %1935 = vmatprep.subr.mxu0 0.0
  %1936 = vmatpush1.xpose.msra.mxu0 0.0
  %1937 = vmatprep.subr.mxu0 0.0
  %1938 = vmatpush1.xpose.msra.mxu0 0.0
  %1939 = vmatprep.subr.mxu0 0.0
  %1940 = vmatpush1.xpose.msra.mxu0 0.0
  %1941 = vmatprep.subr.mxu0 0.0
  %1942 = vmatpush1.xpose.msra.mxu0 0.0
  %1943 = vmatprep.subr.mxu0 0.0
  %1944 = vmatpush1.xpose.msra.mxu0 0.0
  %1945 = vmatprep.subr.mxu0 0.0
  %1946 = vmatpush1.xpose.msra.mxu0 0.0
  %1947 = vmatprep.subr.mxu0 0.0
  %1948 = vmatpush1.xpose.msra.mxu0 0.0
  %1949 = vmatprep.subr.mxu0 0.0
  %1950 = vmatpush1.xpose.msra.mxu0 0.0
  %1951 = vmatprep.subr.mxu0 0.0
  %1952 = vmatpush1.xpose.msra.mxu0 0.0
  %1953 = vmatprep.subr.mxu0 0.0
  %1954 = vmatpush1.xpose.msra.mxu0 0.0
  %1955 = vmatprep.subr.mxu0 0.0
  %1956 = vmatpush1.xpose.msra.mxu0 0.0
  %1957 = vmatprep.mubr.f32.mxu0 0.0
  %1958 = vmatmul.mubr.f32.gmra.mrb[0].mxu0 %v1889
  %v1959 = vpop.f32.mrb[0].mxu0
  %v1960 = vadd.f32 0.0, %v1959
  %v1961 = vpop.f32.mrb[0].mxu0
  %1962 = vdwg.mxu0
  %1963 = vrot.lane.b32.xlu0 %v351, 96
  %v1964 = vpop.permute.xlu0 %1963
  %v1966 = vsel %vm424, %v410, 0
  %v1968 = vsel %vm424, %v1964, 0
  %1970 = vmatprep.subr.mxu0 0.0
  %1971 = vmatpush1.xpose.msra.mxu0 %v1968
  %1972 = vmatprep.subr.mxu0 0.0
  %1973 = vmatpush1.xpose.msra.mxu0 0.0
  %1974 = vmatprep.subr.mxu0 0.0
  %1975 = vmatpush1.xpose.msra.mxu0 0.0
  %1976 = vmatprep.subr.mxu0 0.0
  %1977 = vmatpush1.xpose.msra.mxu0 0.0
  %1978 = vmatprep.subr.mxu0 0.0
  %1979 = vmatpush1.xpose.msra.mxu0 0.0
  %1980 = vmatprep.subr.mxu0 0.0
  %1981 = vmatpush1.xpose.msra.mxu0 0.0
  %1982 = vmatprep.subr.mxu0 0.0
  %1983 = vmatpush1.xpose.msra.mxu0 0.0
  %1984 = vmatprep.subr.mxu0 0.0
  %1985 = vmatpush1.xpose.msra.mxu0 0.0
  %1986 = vmatprep.subr.mxu0 0.0
  %1987 = vmatpush1.xpose.msra.mxu0 0.0
  %1988 = vmatprep.subr.mxu0 0.0
  %1989 = vmatpush1.xpose.msra.mxu0 0.0
  %1990 = vmatprep.subr.mxu0 0.0
  %1991 = vmatpush1.xpose.msra.mxu0 0.0
  %1992 = vmatprep.subr.mxu0 0.0
  %1993 = vmatpush1.xpose.msra.mxu0 0.0
  %1994 = vmatprep.subr.mxu0 0.0
  %1995 = vmatpush1.xpose.msra.mxu0 0.0
  %1996 = vmatprep.subr.mxu0 0.0
  %1997 = vmatpush1.xpose.msra.mxu0 0.0
  %1998 = vmatprep.subr.mxu0 0.0
  %1999 = vmatpush1.xpose.msra.mxu0 0.0
  %2000 = vmatprep.subr.mxu0 0.0
  %2001 = vmatpush1.xpose.msra.mxu0 0.0
  %2002 = vmatprep.subr.mxu0 0.0
  %2003 = vmatpush1.xpose.msra.mxu0 0.0
  %2004 = vmatprep.subr.mxu0 0.0
  %2005 = vmatpush1.xpose.msra.mxu0 0.0
  %2006 = vmatprep.subr.mxu0 0.0
  %2007 = vmatpush1.xpose.msra.mxu0 0.0
  %2008 = vmatprep.subr.mxu0 0.0
  %2009 = vmatpush1.xpose.msra.mxu0 0.0
  %2010 = vmatprep.subr.mxu0 0.0
  %2011 = vmatpush1.xpose.msra.mxu0 0.0
  %2012 = vmatprep.subr.mxu0 0.0
  %2013 = vmatpush1.xpose.msra.mxu0 0.0
  %2014 = vmatprep.subr.mxu0 0.0
  %2015 = vmatpush1.xpose.msra.mxu0 0.0
  %2016 = vmatprep.subr.mxu0 0.0
  %2017 = vmatpush1.xpose.msra.mxu0 0.0
  %2018 = vmatprep.subr.mxu0 0.0
  %2019 = vmatpush1.xpose.msra.mxu0 0.0
  %2020 = vmatprep.subr.mxu0 0.0
  %2021 = vmatpush1.xpose.msra.mxu0 0.0
  %2022 = vmatprep.subr.mxu0 0.0
  %2023 = vmatpush1.xpose.msra.mxu0 0.0
  %2024 = vmatprep.subr.mxu0 0.0
  %2025 = vmatpush1.xpose.msra.mxu0 0.0
  %2026 = vmatprep.subr.mxu0 0.0
  %2027 = vmatpush1.xpose.msra.mxu0 0.0
  %2028 = vmatprep.subr.mxu0 0.0
  %2029 = vmatpush1.xpose.msra.mxu0 0.0
  %2030 = vmatprep.subr.mxu0 0.0
  %2031 = vmatpush1.xpose.msra.mxu0 0.0
  %2032 = vmatprep.subr.mxu0 0.0
  %2033 = vmatpush1.xpose.msra.mxu0 0.0
  %2034 = vmatprep.mubr.f32.mxu0 0.0
  %2035 = vmatmul.mubr.f32.gmra.mrb[0].mxu0 %v1966
  %v2036 = vpop.f32.mrb[0].mxu0
  %v2037 = vadd.f32 0.0, %v2036
  %v2038 = vpop.f32.mrb[0].mxu0
  %2039 = vdwg.mxu0
  %2040 = vrot.lane.b32.xlu0 %v353, 96
  %v2041 = vpop.permute.xlu0 %2040
  %v2043 = vsel %vm424, %v411, 0
  %v2045 = vsel %vm424, %v2041, 0
  %2047 = vmatprep.subr.mxu0 0.0
  %2048 = vmatpush1.xpose.msra.mxu0 %v2045
  %2049 = vmatprep.subr.mxu0 0.0
  %2050 = vmatpush1.xpose.msra.mxu0 0.0
  %2051 = vmatprep.subr.mxu0 0.0
  %2052 = vmatpush1.xpose.msra.mxu0 0.0
  %2053 = vmatprep.subr.mxu0 0.0
  %2054 = vmatpush1.xpose.msra.mxu0 0.0
  %2055 = vmatprep.subr.mxu0 0.0
  %2056 = vmatpush1.xpose.msra.mxu0 0.0
  %2057 = vmatprep.subr.mxu0 0.0
  %2058 = vmatpush1.xpose.msra.mxu0 0.0
  %2059 = vmatprep.subr.mxu0 0.0
  %2060 = vmatpush1.xpose.msra.mxu0 0.0
  %2061 = vmatprep.subr.mxu0 0.0
  %2062 = vmatpush1.xpose.msra.mxu0 0.0
  %2063 = vmatprep.subr.mxu0 0.0
  %2064 = vmatpush1.xpose.msra.mxu0 0.0
  %2065 = vmatprep.subr.mxu0 0.0
  %2066 = vmatpush1.xpose.msra.mxu0 0.0
  %2067 = vmatprep.subr.mxu0 0.0
  %2068 = vmatpush1.xpose.msra.mxu0 0.0
  %2069 = vmatprep.subr.mxu0 0.0
  %2070 = vmatpush1.xpose.msra.mxu0 0.0
  %2071 = vmatprep.subr.mxu0 0.0
  %2072 = vmatpush1.xpose.msra.mxu0 0.0
  %2073 = vmatprep.subr.mxu0 0.0
  %2074 = vmatpush1.xpose.msra.mxu0 0.0
  %2075 = vmatprep.subr.mxu0 0.0
  %2076 = vmatpush1.xpose.msra.mxu0 0.0
  %2077 = vmatprep.subr.mxu0 0.0
  %2078 = vmatpush1.xpose.msra.mxu0 0.0
  %2079 = vmatprep.subr.mxu0 0.0
  %2080 = vmatpush1.xpose.msra.mxu0 0.0
  %2081 = vmatprep.subr.mxu0 0.0
  %2082 = vmatpush1.xpose.msra.mxu0 0.0
  %2083 = vmatprep.subr.mxu0 0.0
  %2084 = vmatpush1.xpose.msra.mxu0 0.0
  %2085 = vmatprep.subr.mxu0 0.0
  %2086 = vmatpush1.xpose.msra.mxu0 0.0
  %2087 = vmatprep.subr.mxu0 0.0
  %2088 = vmatpush1.xpose.msra.mxu0 0.0
  %2089 = vmatprep.subr.mxu0 0.0
  %2090 = vmatpush1.xpose.msra.mxu0 0.0
  %2091 = vmatprep.subr.mxu0 0.0
  %2092 = vmatpush1.xpose.msra.mxu0 0.0
  %2093 = vmatprep.subr.mxu0 0.0
  %2094 = vmatpush1.xpose.msra.mxu0 0.0
  %2095 = vmatprep.subr.mxu0 0.0
  %2096 = vmatpush1.xpose.msra.mxu0 0.0
  %2097 = vmatprep.subr.mxu0 0.0
  %2098 = vmatpush1.xpose.msra.mxu0 0.0
  %2099 = vmatprep.subr.mxu0 0.0
  %2100 = vmatpush1.xpose.msra.mxu0 0.0
  %2101 = vmatprep.subr.mxu0 0.0
  %2102 = vmatpush1.xpose.msra.mxu0 0.0
  %2103 = vmatprep.subr.mxu0 0.0
  %2104 = vmatpush1.xpose.msra.mxu0 0.0
  %2105 = vmatprep.subr.mxu0 0.0
  %2106 = vmatpush1.xpose.msra.mxu0 0.0
  %2107 = vmatprep.subr.mxu0 0.0
  %2108 = vmatpush1.xpose.msra.mxu0 0.0
  %2109 = vmatprep.subr.mxu0 0.0
  %2110 = vmatpush1.xpose.msra.mxu0 0.0
  %2111 = vmatprep.mubr.f32.mxu0 0.0
  %2112 = vmatmul.mubr.f32.gmra.mrb[0].mxu0 %v2043
  %v2113 = vpop.f32.mrb[0].mxu0
  %v2114 = vadd.f32 0.0, %v2113
  %v2115 = vpop.f32.mrb[0].mxu0
  %2116 = vdwg.mxu0
  %2117 = vrot.lane.b32.xlu0 %v355, 96
  %v2118 = vpop.permute.xlu0 %2117
  %v2120 = vsel %vm424, %v412, 0
  %v2122 = vsel %vm424, %v2118, 0
  %2124 = vmatprep.subr.mxu0 0.0
  %2125 = vmatpush1.xpose.msra.mxu0 %v2122
  %2126 = vmatprep.subr.mxu0 0.0
  %2127 = vmatpush1.xpose.msra.mxu0 0.0
  %2128 = vmatprep.subr.mxu0 0.0
  %2129 = vmatpush1.xpose.msra.mxu0 0.0
  %2130 = vmatprep.subr.mxu0 0.0
  %2131 = vmatpush1.xpose.msra.mxu0 0.0
  %2132 = vmatprep.subr.mxu0 0.0
  %2133 = vmatpush1.xpose.msra.mxu0 0.0
  %2134 = vmatprep.subr.mxu0 0.0
  %2135 = vmatpush1.xpose.msra.mxu0 0.0
  %2136 = vmatprep.subr.mxu0 0.0
  %2137 = vmatpush1.xpose.msra.mxu0 0.0
  %2138 = vmatprep.subr.mxu0 0.0
  %2139 = vmatpush1.xpose.msra.mxu0 0.0
  %2140 = vmatprep.subr.mxu0 0.0
  %2141 = vmatpush1.xpose.msra.mxu0 0.0
  %2142 = vmatprep.subr.mxu0 0.0
  %2143 = vmatpush1.xpose.msra.mxu0 0.0
  %2144 = vmatprep.subr.mxu0 0.0
  %2145 = vmatpush1.xpose.msra.mxu0 0.0
  %2146 = vmatprep.subr.mxu0 0.0
  %2147 = vmatpush1.xpose.msra.mxu0 0.0
  %2148 = vmatprep.subr.mxu0 0.0
  %2149 = vmatpush1.xpose.msra.mxu0 0.0
  %2150 = vmatprep.subr.mxu0 0.0
  %2151 = vmatpush1.xpose.msra.mxu0 0.0
  %2152 = vmatprep.subr.mxu0 0.0
  %2153 = vmatpush1.xpose.msra.mxu0 0.0
  %2154 = vmatprep.subr.mxu0 0.0
  %2155 = vmatpush1.xpose.msra.mxu0 0.0
  %2156 = vmatprep.subr.mxu0 0.0
  %2157 = vmatpush1.xpose.msra.mxu0 0.0
  %2158 = vmatprep.subr.mxu0 0.0
  %2159 = vmatpush1.xpose.msra.mxu0 0.0
  %2160 = vmatprep.subr.mxu0 0.0
  %2161 = vmatpush1.xpose.msra.mxu0 0.0
  %2162 = vmatprep.subr.mxu0 0.0
  %2163 = vmatpush1.xpose.msra.mxu0 0.0
  %2164 = vmatprep.subr.mxu0 0.0
  %2165 = vmatpush1.xpose.msra.mxu0 0.0
  %2166 = vmatprep.subr.mxu0 0.0
  %2167 = vmatpush1.xpose.msra.mxu0 0.0
  %2168 = vmatprep.subr.mxu0 0.0
  %2169 = vmatpush1.xpose.msra.mxu0 0.0
  %2170 = vmatprep.subr.mxu0 0.0
  %2171 = vmatpush1.xpose.msra.mxu0 0.0
  %2172 = vmatprep.subr.mxu0 0.0
  %2173 = vmatpush1.xpose.msra.mxu0 0.0
  %2174 = vmatprep.subr.mxu0 0.0
  %2175 = vmatpush1.xpose.msra.mxu0 0.0
  %2176 = vmatprep.subr.mxu0 0.0
  %2177 = vmatpush1.xpose.msra.mxu0 0.0
  %2178 = vmatprep.subr.mxu0 0.0
  %2179 = vmatpush1.xpose.msra.mxu0 0.0
  %2180 = vmatprep.subr.mxu0 0.0
  %2181 = vmatpush1.xpose.msra.mxu0 0.0
  %2182 = vmatprep.subr.mxu0 0.0
  %2183 = vmatpush1.xpose.msra.mxu0 0.0
  %2184 = vmatprep.subr.mxu0 0.0
  %2185 = vmatpush1.xpose.msra.mxu0 0.0
  %2186 = vmatprep.subr.mxu0 0.0
  %2187 = vmatpush1.xpose.msra.mxu0 0.0
  %2188 = vmatprep.mubr.f32.mxu0 0.0
  %2189 = vmatmul.mubr.f32.gmra.mrb[0].mxu0 %v2120
  %v2190 = vpop.f32.mrb[0].mxu0
  %v2191 = vadd.f32 0.0, %v2190
  %v2192 = vpop.f32.mrb[0].mxu0
  %2193 = vdwg.mxu0
  %2194 = vrot.lane.b32.xlu0 %v357, 96
  %v2195 = vpop.permute.xlu0 %2194
  %v2197 = vsel %vm424, %v413, 0
  %v2199 = vsel %vm424, %v2195, 0
  %2201 = vmatprep.subr.mxu0 0.0
  %2202 = vmatpush1.xpose.msra.mxu0 %v2199
  %2203 = vmatprep.subr.mxu0 0.0
  %2204 = vmatpush1.xpose.msra.mxu0 0.0
  %2205 = vmatprep.subr.mxu0 0.0
  %2206 = vmatpush1.xpose.msra.mxu0 0.0
  %2207 = vmatprep.subr.mxu0 0.0
  %2208 = vmatpush1.xpose.msra.mxu0 0.0
  %2209 = vmatprep.subr.mxu0 0.0
  %2210 = vmatpush1.xpose.msra.mxu0 0.0
  %2211 = vmatprep.subr.mxu0 0.0
  %2212 = vmatpush1.xpose.msra.mxu0 0.0
  %2213 = vmatprep.subr.mxu0 0.0
  %2214 = vmatpush1.xpose.msra.mxu0 0.0
  %2215 = vmatprep.subr.mxu0 0.0
  %2216 = vmatpush1.xpose.msra.mxu0 0.0
  %2217 = vmatprep.subr.mxu0 0.0
  %2218 = vmatpush1.xpose.msra.mxu0 0.0
  %2219 = vmatprep.subr.mxu0 0.0
  %2220 = vmatpush1.xpose.msra.mxu0 0.0
  %2221 = vmatprep.subr.mxu0 0.0
  %2222 = vmatpush1.xpose.msra.mxu0 0.0
  %2223 = vmatprep.subr.mxu0 0.0
  %2224 = vmatpush1.xpose.msra.mxu0 0.0
  %2225 = vmatprep.subr.mxu0 0.0
  %2226 = vmatpush1.xpose.msra.mxu0 0.0
  %2227 = vmatprep.subr.mxu0 0.0
  %2228 = vmatpush1.xpose.msra.mxu0 0.0
  %2229 = vmatprep.subr.mxu0 0.0
  %2230 = vmatpush1.xpose.msra.mxu0 0.0
  %2231 = vmatprep.subr.mxu0 0.0
  %2232 = vmatpush1.xpose.msra.mxu0 0.0
  %2233 = vmatprep.subr.mxu0 0.0
  %2234 = vmatpush1.xpose.msra.mxu0 0.0
  %2235 = vmatprep.subr.mxu0 0.0
  %2236 = vmatpush1.xpose.msra.mxu0 0.0
  %2237 = vmatprep.subr.mxu0 0.0
  %2238 = vmatpush1.xpose.msra.mxu0 0.0
  %2239 = vmatprep.subr.mxu0 0.0
  %2240 = vmatpush1.xpose.msra.mxu0 0.0
  %2241 = vmatprep.subr.mxu0 0.0
  %2242 = vmatpush1.xpose.msra.mxu0 0.0
  %2243 = vmatprep.subr.mxu0 0.0
  %2244 = vmatpush1.xpose.msra.mxu0 0.0
  %2245 = vmatprep.subr.mxu0 0.0
  %2246 = vmatpush1.xpose.msra.mxu0 0.0
  %2247 = vmatprep.subr.mxu0 0.0
  %2248 = vmatpush1.xpose.msra.mxu0 0.0
  %2249 = vmatprep.subr.mxu0 0.0
  %2250 = vmatpush1.xpose.msra.mxu0 0.0
  %2251 = vmatprep.subr.mxu0 0.0
  %2252 = vmatpush1.xpose.msra.mxu0 0.0
  %2253 = vmatprep.subr.mxu0 0.0
  %2254 = vmatpush1.xpose.msra.mxu0 0.0
  %2255 = vmatprep.subr.mxu0 0.0
  %2256 = vmatpush1.xpose.msra.mxu0 0.0
  %2257 = vmatprep.subr.mxu0 0.0
  %2258 = vmatpush1.xpose.msra.mxu0 0.0
  %2259 = vmatprep.subr.mxu0 0.0
  %2260 = vmatpush1.xpose.msra.mxu0 0.0
  %2261 = vmatprep.subr.mxu0 0.0
  %2262 = vmatpush1.xpose.msra.mxu0 0.0
  %2263 = vmatprep.subr.mxu0 0.0
  %2264 = vmatpush1.xpose.msra.mxu0 0.0
  %2265 = vmatprep.mubr.f32.mxu0 0.0
  %2266 = vmatmul.mubr.f32.gmra.mrb[0].mxu0 %v2197
  %v2267 = vpop.f32.mrb[0].mxu0
  %v2268 = vadd.f32 0.0, %v2267
  %v2269 = vpop.f32.mrb[0].mxu0
  %2270 = vdwg.mxu0
  %2271 = vrot.lane.b32.xlu0 %v367, 96
  %v2272 = vpop.permute.xlu0 %2271
  %v2274 = vsel %vm424, %v414, 0
  %v2276 = vsel %vm424, %v2272, 0
  %2278 = vmatprep.subr.mxu0 0.0
  %2279 = vmatpush1.xpose.msra.mxu0 %v2276
  %2280 = vmatprep.subr.mxu0 0.0
  %2281 = vmatpush1.xpose.msra.mxu0 0.0
  %2282 = vmatprep.subr.mxu0 0.0
  %2283 = vmatpush1.xpose.msra.mxu0 0.0
  %2284 = vmatprep.subr.mxu0 0.0
  %2285 = vmatpush1.xpose.msra.mxu0 0.0
  %2286 = vmatprep.subr.mxu0 0.0
  %2287 = vmatpush1.xpose.msra.mxu0 0.0
  %2288 = vmatprep.subr.mxu0 0.0
  %2289 = vmatpush1.xpose.msra.mxu0 0.0
  %2290 = vmatprep.subr.mxu0 0.0
  %2291 = vmatpush1.xpose.msra.mxu0 0.0
  %2292 = vmatprep.subr.mxu0 0.0
  %2293 = vmatpush1.xpose.msra.mxu0 0.0
  %2294 = vmatprep.subr.mxu0 0.0
  %2295 = vmatpush1.xpose.msra.mxu0 0.0
  %2296 = vmatprep.subr.mxu0 0.0
  %2297 = vmatpush1.xpose.msra.mxu0 0.0
  %2298 = vmatprep.subr.mxu0 0.0
  %2299 = vmatpush1.xpose.msra.mxu0 0.0
  %2300 = vmatprep.subr.mxu0 0.0
  %2301 = vmatpush1.xpose.msra.mxu0 0.0
  %2302 = vmatprep.subr.mxu0 0.0
  %2303 = vmatpush1.xpose.msra.mxu0 0.0
  %2304 = vmatprep.subr.mxu0 0.0
  %2305 = vmatpush1.xpose.msra.mxu0 0.0
  %2306 = vmatprep.subr.mxu0 0.0
  %2307 = vmatpush1.xpose.msra.mxu0 0.0
  %2308 = vmatprep.subr.mxu0 0.0
  %2309 = vmatpush1.xpose.msra.mxu0 0.0
  %2310 = vmatprep.subr.mxu0 0.0
  %2311 = vmatpush1.xpose.msra.mxu0 0.0
  %2312 = vmatprep.subr.mxu0 0.0
  %2313 = vmatpush1.xpose.msra.mxu0 0.0
  %2314 = vmatprep.subr.mxu0 0.0
  %2315 = vmatpush1.xpose.msra.mxu0 0.0
  %2316 = vmatprep.subr.mxu0 0.0
  %2317 = vmatpush1.xpose.msra.mxu0 0.0
  %2318 = vmatprep.subr.mxu0 0.0
  %2319 = vmatpush1.xpose.msra.mxu0 0.0
  %2320 = vmatprep.subr.mxu0 0.0
  %2321 = vmatpush1.xpose.msra.mxu0 0.0
  %2322 = vmatprep.subr.mxu0 0.0
  %2323 = vmatpush1.xpose.msra.mxu0 0.0
  %2324 = vmatprep.subr.mxu0 0.0
  %2325 = vmatpush1.xpose.msra.mxu0 0.0
  %2326 = vmatprep.subr.mxu0 0.0
  %2327 = vmatpush1.xpose.msra.mxu0 0.0
  %2328 = vmatprep.subr.mxu0 0.0
  %2329 = vmatpush1.xpose.msra.mxu0 0.0
  %2330 = vmatprep.subr.mxu0 0.0
  %2331 = vmatpush1.xpose.msra.mxu0 0.0
  %2332 = vmatprep.subr.mxu0 0.0
  %2333 = vmatpush1.xpose.msra.mxu0 0.0
  %2334 = vmatprep.subr.mxu0 0.0
  %2335 = vmatpush1.xpose.msra.mxu0 0.0
  %2336 = vmatprep.subr.mxu0 0.0
  %2337 = vmatpush1.xpose.msra.mxu0 0.0
  %2338 = vmatprep.subr.mxu0 0.0
  %2339 = vmatpush1.xpose.msra.mxu0 0.0
  %2340 = vmatprep.subr.mxu0 0.0
  %2341 = vmatpush1.xpose.msra.mxu0 0.0
  %2342 = vmatprep.mubr.f32.mxu0 0.0
  %2343 = vmatmul.mubr.f32.gmra.mrb[0].mxu0 %v2274
  %v2344 = vpop.f32.mrb[0].mxu0
  %v2345 = vadd.f32 0.0, %v2344
  %v2346 = vpop.f32.mrb[0].mxu0
  %2347 = vdwg.mxu0
  %2348 = vrot.lane.b32.xlu0 %v369, 96
  %v2349 = vpop.permute.xlu0 %2348
  %v2351 = vsel %vm424, %v415, 0
  %v2353 = vsel %vm424, %v2349, 0
  %2355 = vmatprep.subr.mxu0 0.0
  %2356 = vmatpush1.xpose.msra.mxu0 %v2353
  %2357 = vmatprep.subr.mxu0 0.0
  %2358 = vmatpush1.xpose.msra.mxu0 0.0
  %2359 = vmatprep.subr.mxu0 0.0
  %2360 = vmatpush1.xpose.msra.mxu0 0.0
  %2361 = vmatprep.subr.mxu0 0.0
  %2362 = vmatpush1.xpose.msra.mxu0 0.0
  %2363 = vmatprep.subr.mxu0 0.0
  %2364 = vmatpush1.xpose.msra.mxu0 0.0
  %2365 = vmatprep.subr.mxu0 0.0
  %2366 = vmatpush1.xpose.msra.mxu0 0.0
  %2367 = vmatprep.subr.mxu0 0.0
  %2368 = vmatpush1.xpose.msra.mxu0 0.0
  %2369 = vmatprep.subr.mxu0 0.0
  %2370 = vmatpush1.xpose.msra.mxu0 0.0
  %2371 = vmatprep.subr.mxu0 0.0
  %2372 = vmatpush1.xpose.msra.mxu0 0.0
  %2373 = vmatprep.subr.mxu0 0.0
  %2374 = vmatpush1.xpose.msra.mxu0 0.0
  %2375 = vmatprep.subr.mxu0 0.0
  %2376 = vmatpush1.xpose.msra.mxu0 0.0
  %2377 = vmatprep.subr.mxu0 0.0
  %2378 = vmatpush1.xpose.msra.mxu0 0.0
  %2379 = vmatprep.subr.mxu0 0.0
  %2380 = vmatpush1.xpose.msra.mxu0 0.0
  %2381 = vmatprep.subr.mxu0 0.0
  %2382 = vmatpush1.xpose.msra.mxu0 0.0
  %2383 = vmatprep.subr.mxu0 0.0
  %2384 = vmatpush1.xpose.msra.mxu0 0.0
  %2385 = vmatprep.subr.mxu0 0.0
  %2386 = vmatpush1.xpose.msra.mxu0 0.0
  %2387 = vmatprep.subr.mxu0 0.0
  %2388 = vmatpush1.xpose.msra.mxu0 0.0
  %2389 = vmatprep.subr.mxu0 0.0
  %2390 = vmatpush1.xpose.msra.mxu0 0.0
  %2391 = vmatprep.subr.mxu0 0.0
  %2392 = vmatpush1.xpose.msra.mxu0 0.0
  %2393 = vmatprep.subr.mxu0 0.0
  %2394 = vmatpush1.xpose.msra.mxu0 0.0
  %2395 = vmatprep.subr.mxu0 0.0
  %2396 = vmatpush1.xpose.msra.mxu0 0.0
  %2397 = vmatprep.subr.mxu0 0.0
  %2398 = vmatpush1.xpose.msra.mxu0 0.0
  %2399 = vmatprep.subr.mxu0 0.0
  %2400 = vmatpush1.xpose.msra.mxu0 0.0
  %2401 = vmatprep.subr.mxu0 0.0
  %2402 = vmatpush1.xpose.msra.mxu0 0.0
  %2403 = vmatprep.subr.mxu0 0.0
  %2404 = vmatpush1.xpose.msra.mxu0 0.0
  %2405 = vmatprep.subr.mxu0 0.0
  %2406 = vmatpush1.xpose.msra.mxu0 0.0
  %2407 = vmatprep.subr.mxu0 0.0
  %2408 = vmatpush1.xpose.msra.mxu0 0.0
  %2409 = vmatprep.subr.mxu0 0.0
  %2410 = vmatpush1.xpose.msra.mxu0 0.0
  %2411 = vmatprep.subr.mxu0 0.0
  %2412 = vmatpush1.xpose.msra.mxu0 0.0
  %2413 = vmatprep.subr.mxu0 0.0
  %2414 = vmatpush1.xpose.msra.mxu0 0.0
  %2415 = vmatprep.subr.mxu0 0.0
  %2416 = vmatpush1.xpose.msra.mxu0 0.0
  %2417 = vmatprep.subr.mxu0 0.0
  %2418 = vmatpush1.xpose.msra.mxu0 0.0
  %2419 = vmatprep.mubr.f32.mxu0 0.0
  %2420 = vmatmul.mubr.f32.gmra.mrb[0].mxu0 %v2351
  %v2421 = vpop.f32.mrb[0].mxu0
  %v2422 = vadd.f32 0.0, %v2421
  %v2423 = vpop.f32.mrb[0].mxu0
  %2424 = vdwg.mxu0
  %2425 = vrot.lane.b32.xlu0 %v371, 96
  %v2426 = vpop.permute.xlu0 %2425
  %v2428 = vsel %vm424, %v416, 0
  %v2430 = vsel %vm424, %v2426, 0
  %2432 = vmatprep.subr.mxu0 0.0
  %2433 = vmatpush1.xpose.msra.mxu0 %v2430
  %2434 = vmatprep.subr.mxu0 0.0
  %2435 = vmatpush1.xpose.msra.mxu0 0.0
  %2436 = vmatprep.subr.mxu0 0.0
  %2437 = vmatpush1.xpose.msra.mxu0 0.0
  %2438 = vmatprep.subr.mxu0 0.0
  %2439 = vmatpush1.xpose.msra.mxu0 0.0
  %2440 = vmatprep.subr.mxu0 0.0
  %2441 = vmatpush1.xpose.msra.mxu0 0.0
  %2442 = vmatprep.subr.mxu0 0.0
  %2443 = vmatpush1.xpose.msra.mxu0 0.0
  %2444 = vmatprep.subr.mxu0 0.0
  %2445 = vmatpush1.xpose.msra.mxu0 0.0
  %2446 = vmatprep.subr.mxu0 0.0
  %2447 = vmatpush1.xpose.msra.mxu0 0.0
  %2448 = vmatprep.subr.mxu0 0.0
  %2449 = vmatpush1.xpose.msra.mxu0 0.0
  %2450 = vmatprep.subr.mxu0 0.0
  %2451 = vmatpush1.xpose.msra.mxu0 0.0
  %2452 = vmatprep.subr.mxu0 0.0
  %2453 = vmatpush1.xpose.msra.mxu0 0.0
  %2454 = vmatprep.subr.mxu0 0.0
  %2455 = vmatpush1.xpose.msra.mxu0 0.0
  %2456 = vmatprep.subr.mxu0 0.0
  %2457 = vmatpush1.xpose.msra.mxu0 0.0
  %2458 = vmatprep.subr.mxu0 0.0
  %2459 = vmatpush1.xpose.msra.mxu0 0.0
  %2460 = vmatprep.subr.mxu0 0.0
  %2461 = vmatpush1.xpose.msra.mxu0 0.0
  %2462 = vmatprep.subr.mxu0 0.0
  %2463 = vmatpush1.xpose.msra.mxu0 0.0
  %2464 = vmatprep.subr.mxu0 0.0
  %2465 = vmatpush1.xpose.msra.mxu0 0.0
  %2466 = vmatprep.subr.mxu0 0.0
  %2467 = vmatpush1.xpose.msra.mxu0 0.0
  %2468 = vmatprep.subr.mxu0 0.0
  %2469 = vmatpush1.xpose.msra.mxu0 0.0
  %2470 = vmatprep.subr.mxu0 0.0
  %2471 = vmatpush1.xpose.msra.mxu0 0.0
  %2472 = vmatprep.subr.mxu0 0.0
  %2473 = vmatpush1.xpose.msra.mxu0 0.0
  %2474 = vmatprep.subr.mxu0 0.0
  %2475 = vmatpush1.xpose.msra.mxu0 0.0
  %2476 = vmatprep.subr.mxu0 0.0
  %2477 = vmatpush1.xpose.msra.mxu0 0.0
  %2478 = vmatprep.subr.mxu0 0.0
  %2479 = vmatpush1.xpose.msra.mxu0 0.0
  %2480 = vmatprep.subr.mxu0 0.0
  %2481 = vmatpush1.xpose.msra.mxu0 0.0
  %2482 = vmatprep.subr.mxu0 0.0
  %2483 = vmatpush1.xpose.msra.mxu0 0.0
  %2484 = vmatprep.subr.mxu0 0.0
  %2485 = vmatpush1.xpose.msra.mxu0 0.0
  %2486 = vmatprep.subr.mxu0 0.0
  %2487 = vmatpush1.xpose.msra.mxu0 0.0
  %2488 = vmatprep.subr.mxu0 0.0
  %2489 = vmatpush1.xpose.msra.mxu0 0.0
  %2490 = vmatprep.subr.mxu0 0.0
  %2491 = vmatpush1.xpose.msra.mxu0 0.0
  %2492 = vmatprep.subr.mxu0 0.0
  %2493 = vmatpush1.xpose.msra.mxu0 0.0
  %2494 = vmatprep.subr.mxu0 0.0
  %2495 = vmatpush1.xpose.msra.mxu0 0.0
  %2496 = vmatprep.mubr.f32.mxu0 0.0
  %2497 = vmatmul.mubr.f32.gmra.mrb[0].mxu0 %v2428
  %v2498 = vpop.f32.mrb[0].mxu0
  %v2499 = vadd.f32 0.0, %v2498
  %v2500 = vpop.f32.mrb[0].mxu0
  %2501 = vdwg.mxu0
  %2502 = vrot.lane.b32.xlu0 %v373, 96
  %v2503 = vpop.permute.xlu0 %2502
  %v2505 = vsel %vm424, %v417, 0
  %v2507 = vsel %vm424, %v2503, 0
  %2509 = vmatprep.subr.mxu0 0.0
  %2510 = vmatpush1.xpose.msra.mxu0 %v2507
  %2511 = vmatprep.subr.mxu0 0.0
  %2512 = vmatpush1.xpose.msra.mxu0 0.0
  %2513 = vmatprep.subr.mxu0 0.0
  %2514 = vmatpush1.xpose.msra.mxu0 0.0
  %2515 = vmatprep.subr.mxu0 0.0
  %2516 = vmatpush1.xpose.msra.mxu0 0.0
  %2517 = vmatprep.subr.mxu0 0.0
  %2518 = vmatpush1.xpose.msra.mxu0 0.0
  %2519 = vmatprep.subr.mxu0 0.0
  %2520 = vmatpush1.xpose.msra.mxu0 0.0
  %2521 = vmatprep.subr.mxu0 0.0
  %2522 = vmatpush1.xpose.msra.mxu0 0.0
  %2523 = vmatprep.subr.mxu0 0.0
  %2524 = vmatpush1.xpose.msra.mxu0 0.0
  %2525 = vmatprep.subr.mxu0 0.0
  %2526 = vmatpush1.xpose.msra.mxu0 0.0
  %2527 = vmatprep.subr.mxu0 0.0
  %2528 = vmatpush1.xpose.msra.mxu0 0.0
  %2529 = vmatprep.subr.mxu0 0.0
  %2530 = vmatpush1.xpose.msra.mxu0 0.0
  %2531 = vmatprep.subr.mxu0 0.0
  %2532 = vmatpush1.xpose.msra.mxu0 0.0
  %2533 = vmatprep.subr.mxu0 0.0
  %2534 = vmatpush1.xpose.msra.mxu0 0.0
  %2535 = vmatprep.subr.mxu0 0.0
  %2536 = vmatpush1.xpose.msra.mxu0 0.0
  %2537 = vmatprep.subr.mxu0 0.0
  %2538 = vmatpush1.xpose.msra.mxu0 0.0
  %2539 = vmatprep.subr.mxu0 0.0
  %2540 = vmatpush1.xpose.msra.mxu0 0.0
  %2541 = vmatprep.subr.mxu0 0.0
  %2542 = vmatpush1.xpose.msra.mxu0 0.0
  %2543 = vmatprep.subr.mxu0 0.0
  %2544 = vmatpush1.xpose.msra.mxu0 0.0
  %2545 = vmatprep.subr.mxu0 0.0
  %2546 = vmatpush1.xpose.msra.mxu0 0.0
  %2547 = vmatprep.subr.mxu0 0.0
  %2548 = vmatpush1.xpose.msra.mxu0 0.0
  %2549 = vmatprep.subr.mxu0 0.0
  %2550 = vmatpush1.xpose.msra.mxu0 0.0
  %2551 = vmatprep.subr.mxu0 0.0
  %2552 = vmatpush1.xpose.msra.mxu0 0.0
  %2553 = vmatprep.subr.mxu0 0.0
  %2554 = vmatpush1.xpose.msra.mxu0 0.0
  %2555 = vmatprep.subr.mxu0 0.0
  %2556 = vmatpush1.xpose.msra.mxu0 0.0
  %2557 = vmatprep.subr.mxu0 0.0
  %2558 = vmatpush1.xpose.msra.mxu0 0.0
  %2559 = vmatprep.subr.mxu0 0.0
  %2560 = vmatpush1.xpose.msra.mxu0 0.0
  %2561 = vmatprep.subr.mxu0 0.0
  %2562 = vmatpush1.xpose.msra.mxu0 0.0
  %2563 = vmatprep.subr.mxu0 0.0
  %2564 = vmatpush1.xpose.msra.mxu0 0.0
  %2565 = vmatprep.subr.mxu0 0.0
  %2566 = vmatpush1.xpose.msra.mxu0 0.0
  %2567 = vmatprep.subr.mxu0 0.0
  %2568 = vmatpush1.xpose.msra.mxu0 0.0
  %2569 = vmatprep.subr.mxu0 0.0
  %2570 = vmatpush1.xpose.msra.mxu0 0.0
  %2571 = vmatprep.subr.mxu0 0.0
  %2572 = vmatpush1.xpose.msra.mxu0 0.0
  %2573 = vmatprep.mubr.f32.mxu0 0.0
  %2574 = vmatmul.mubr.f32.gmra.mrb[0].mxu0 %v2505
  %v2575 = vpop.f32.mrb[0].mxu0
  %v2576 = vadd.f32 0.0, %v2575
  %v2577 = vpop.f32.mrb[0].mxu0
  %2578 = vdwg.mxu0
  %2579 = vrot.lane.b32.xlu0 %v375, 96
  %v2580 = vpop.permute.xlu0 %2579
  %v2582 = vsel %vm424, %v418, 0
  %v2584 = vsel %vm424, %v2580, 0
  %2586 = vmatprep.subr.mxu0 0.0
  %2587 = vmatpush1.xpose.msra.mxu0 %v2584
  %2588 = vmatprep.subr.mxu0 0.0
  %2589 = vmatpush1.xpose.msra.mxu0 0.0
  %2590 = vmatprep.subr.mxu0 0.0
  %2591 = vmatpush1.xpose.msra.mxu0 0.0
  %2592 = vmatprep.subr.mxu0 0.0
  %2593 = vmatpush1.xpose.msra.mxu0 0.0
  %2594 = vmatprep.subr.mxu0 0.0
  %2595 = vmatpush1.xpose.msra.mxu0 0.0
  %2596 = vmatprep.subr.mxu0 0.0
  %2597 = vmatpush1.xpose.msra.mxu0 0.0
  %2598 = vmatprep.subr.mxu0 0.0
  %2599 = vmatpush1.xpose.msra.mxu0 0.0
  %2600 = vmatprep.subr.mxu0 0.0
  %2601 = vmatpush1.xpose.msra.mxu0 0.0
  %2602 = vmatprep.subr.mxu0 0.0
  %2603 = vmatpush1.xpose.msra.mxu0 0.0
  %2604 = vmatprep.subr.mxu0 0.0
  %2605 = vmatpush1.xpose.msra.mxu0 0.0
  %2606 = vmatprep.subr.mxu0 0.0
  %2607 = vmatpush1.xpose.msra.mxu0 0.0
  %2608 = vmatprep.subr.mxu0 0.0
  %2609 = vmatpush1.xpose.msra.mxu0 0.0
  %2610 = vmatprep.subr.mxu0 0.0
  %2611 = vmatpush1.xpose.msra.mxu0 0.0
  %2612 = vmatprep.subr.mxu0 0.0
  %2613 = vmatpush1.xpose.msra.mxu0 0.0
  %2614 = vmatprep.subr.mxu0 0.0
  %2615 = vmatpush1.xpose.msra.mxu0 0.0
  %2616 = vmatprep.subr.mxu0 0.0
  %2617 = vmatpush1.xpose.msra.mxu0 0.0
  %2618 = vmatprep.subr.mxu0 0.0
  %2619 = vmatpush1.xpose.msra.mxu0 0.0
  %2620 = vmatprep.subr.mxu0 0.0
  %2621 = vmatpush1.xpose.msra.mxu0 0.0
  %2622 = vmatprep.subr.mxu0 0.0
  %2623 = vmatpush1.xpose.msra.mxu0 0.0
  %2624 = vmatprep.subr.mxu0 0.0
  %2625 = vmatpush1.xpose.msra.mxu0 0.0
  %2626 = vmatprep.subr.mxu0 0.0
  %2627 = vmatpush1.xpose.msra.mxu0 0.0
  %2628 = vmatprep.subr.mxu0 0.0
  %2629 = vmatpush1.xpose.msra.mxu0 0.0
  %2630 = vmatprep.subr.mxu0 0.0
  %2631 = vmatpush1.xpose.msra.mxu0 0.0
  %2632 = vmatprep.subr.mxu0 0.0
  %2633 = vmatpush1.xpose.msra.mxu0 0.0
  %2634 = vmatprep.subr.mxu0 0.0
  %2635 = vmatpush1.xpose.msra.mxu0 0.0
  %2636 = vmatprep.subr.mxu0 0.0
  %2637 = vmatpush1.xpose.msra.mxu0 0.0
  %2638 = vmatprep.subr.mxu0 0.0
  %2639 = vmatpush1.xpose.msra.mxu0 0.0
  %2640 = vmatprep.subr.mxu0 0.0
  %2641 = vmatpush1.xpose.msra.mxu0 0.0
  %2642 = vmatprep.subr.mxu0 0.0
  %2643 = vmatpush1.xpose.msra.mxu0 0.0
  %2644 = vmatprep.subr.mxu0 0.0
  %2645 = vmatpush1.xpose.msra.mxu0 0.0
  %2646 = vmatprep.subr.mxu0 0.0
  %2647 = vmatpush1.xpose.msra.mxu0 0.0
  %2648 = vmatprep.subr.mxu0 0.0
  %2649 = vmatpush1.xpose.msra.mxu0 0.0
  %2650 = vmatprep.mubr.f32.mxu0 0.0
  %2651 = vmatmul.mubr.f32.gmra.mrb[0].mxu0 %v2582
  %v2652 = vpop.f32.mrb[0].mxu0
  %v2653 = vadd.f32 0.0, %v2652
  %v2654 = vpop.f32.mrb[0].mxu0
  %2655 = vdwg.mxu0
  %2656 = vrot.lane.b32.xlu0 %v377, 96
  %v2657 = vpop.permute.xlu0 %2656
  %v2659 = vsel %vm424, %v419, 0
  %v2661 = vsel %vm424, %v2657, 0
  %2663 = vmatprep.subr.mxu0 0.0
  %2664 = vmatpush1.xpose.msra.mxu0 %v2661
  %2665 = vmatprep.subr.mxu0 0.0
  %2666 = vmatpush1.xpose.msra.mxu0 0.0
  %2667 = vmatprep.subr.mxu0 0.0
  %2668 = vmatpush1.xpose.msra.mxu0 0.0
  %2669 = vmatprep.subr.mxu0 0.0
  %2670 = vmatpush1.xpose.msra.mxu0 0.0
  %2671 = vmatprep.subr.mxu0 0.0
  %2672 = vmatpush1.xpose.msra.mxu0 0.0
  %2673 = vmatprep.subr.mxu0 0.0
  %2674 = vmatpush1.xpose.msra.mxu0 0.0
  %2675 = vmatprep.subr.mxu0 0.0
  %2676 = vmatpush1.xpose.msra.mxu0 0.0
  %2677 = vmatprep.subr.mxu0 0.0
  %2678 = vmatpush1.xpose.msra.mxu0 0.0
  %2679 = vmatprep.subr.mxu0 0.0
  %2680 = vmatpush1.xpose.msra.mxu0 0.0
  %2681 = vmatprep.subr.mxu0 0.0
  %2682 = vmatpush1.xpose.msra.mxu0 0.0
  %2683 = vmatprep.subr.mxu0 0.0
  %2684 = vmatpush1.xpose.msra.mxu0 0.0
  %2685 = vmatprep.subr.mxu0 0.0
  %2686 = vmatpush1.xpose.msra.mxu0 0.0
  %2687 = vmatprep.subr.mxu0 0.0
  %2688 = vmatpush1.xpose.msra.mxu0 0.0
  %2689 = vmatprep.subr.mxu0 0.0
  %2690 = vmatpush1.xpose.msra.mxu0 0.0
  %2691 = vmatprep.subr.mxu0 0.0
  %2692 = vmatpush1.xpose.msra.mxu0 0.0
  %2693 = vmatprep.subr.mxu0 0.0
  %2694 = vmatpush1.xpose.msra.mxu0 0.0
  %2695 = vmatprep.subr.mxu0 0.0
  %2696 = vmatpush1.xpose.msra.mxu0 0.0
  %2697 = vmatprep.subr.mxu0 0.0
  %2698 = vmatpush1.xpose.msra.mxu0 0.0
  %2699 = vmatprep.subr.mxu0 0.0
  %2700 = vmatpush1.xpose.msra.mxu0 0.0
  %2701 = vmatprep.subr.mxu0 0.0
  %2702 = vmatpush1.xpose.msra.mxu0 0.0
  %2703 = vmatprep.subr.mxu0 0.0
  %2704 = vmatpush1.xpose.msra.mxu0 0.0
  %2705 = vmatprep.subr.mxu0 0.0
  %2706 = vmatpush1.xpose.msra.mxu0 0.0
  %2707 = vmatprep.subr.mxu0 0.0
  %2708 = vmatpush1.xpose.msra.mxu0 0.0
  %2709 = vmatprep.subr.mxu0 0.0
  %2710 = vmatpush1.xpose.msra.mxu0 0.0
  %2711 = vmatprep.subr.mxu0 0.0
  %2712 = vmatpush1.xpose.msra.mxu0 0.0
  %2713 = vmatprep.subr.mxu0 0.0
  %2714 = vmatpush1.xpose.msra.mxu0 0.0
  %2715 = vmatprep.subr.mxu0 0.0
  %2716 = vmatpush1.xpose.msra.mxu0 0.0
  %2717 = vmatprep.subr.mxu0 0.0
  %2718 = vmatpush1.xpose.msra.mxu0 0.0
  %2719 = vmatprep.subr.mxu0 0.0
  %2720 = vmatpush1.xpose.msra.mxu0 0.0
  %2721 = vmatprep.subr.mxu0 0.0
  %2722 = vmatpush1.xpose.msra.mxu0 0.0
  %2723 = vmatprep.subr.mxu0 0.0
  %2724 = vmatpush1.xpose.msra.mxu0 0.0
  %2725 = vmatprep.subr.mxu0 0.0
  %2726 = vmatpush1.xpose.msra.mxu0 0.0
  %2727 = vmatprep.mubr.f32.mxu0 0.0
  %2728 = vmatmul.mubr.f32.gmra.mrb[0].mxu0 %v2659
  %v2729 = vpop.f32.mrb[0].mxu0
  %v2730 = vadd.f32 0.0, %v2729
  %v2731 = vpop.f32.mrb[0].mxu0
  %2732 = vdwg.mxu0
  %2733 = vrot.lane.b32.xlu0 %v379, 96
  %v2734 = vpop.permute.xlu0 %2733
  %v2736 = vsel %vm424, %v420, 0
  %v2738 = vsel %vm424, %v2734, 0
  %2740 = vmatprep.subr.mxu0 0.0
  %2741 = vmatpush1.xpose.msra.mxu0 %v2738
  %2742 = vmatprep.subr.mxu0 0.0
  %2743 = vmatpush1.xpose.msra.mxu0 0.0
  %2744 = vmatprep.subr.mxu0 0.0
  %2745 = vmatpush1.xpose.msra.mxu0 0.0
  %2746 = vmatprep.subr.mxu0 0.0
  %2747 = vmatpush1.xpose.msra.mxu0 0.0
  %2748 = vmatprep.subr.mxu0 0.0
  %2749 = vmatpush1.xpose.msra.mxu0 0.0
  %2750 = vmatprep.subr.mxu0 0.0
  %2751 = vmatpush1.xpose.msra.mxu0 0.0
  %2752 = vmatprep.subr.mxu0 0.0
  %2753 = vmatpush1.xpose.msra.mxu0 0.0
  %2754 = vmatprep.subr.mxu0 0.0
  %2755 = vmatpush1.xpose.msra.mxu0 0.0
  %2756 = vmatprep.subr.mxu0 0.0
  %2757 = vmatpush1.xpose.msra.mxu0 0.0
  %2758 = vmatprep.subr.mxu0 0.0
  %2759 = vmatpush1.xpose.msra.mxu0 0.0
  %2760 = vmatprep.subr.mxu0 0.0
  %2761 = vmatpush1.xpose.msra.mxu0 0.0
  %2762 = vmatprep.subr.mxu0 0.0
  %2763 = vmatpush1.xpose.msra.mxu0 0.0
  %2764 = vmatprep.subr.mxu0 0.0
  %2765 = vmatpush1.xpose.msra.mxu0 0.0
  %2766 = vmatprep.subr.mxu0 0.0
  %2767 = vmatpush1.xpose.msra.mxu0 0.0
  %2768 = vmatprep.subr.mxu0 0.0
  %2769 = vmatpush1.xpose.msra.mxu0 0.0
  %2770 = vmatprep.subr.mxu0 0.0
  %2771 = vmatpush1.xpose.msra.mxu0 0.0
  %2772 = vmatprep.subr.mxu0 0.0
  %2773 = vmatpush1.xpose.msra.mxu0 0.0
  %2774 = vmatprep.subr.mxu0 0.0
  %2775 = vmatpush1.xpose.msra.mxu0 0.0
  %2776 = vmatprep.subr.mxu0 0.0
  %2777 = vmatpush1.xpose.msra.mxu0 0.0
  %2778 = vmatprep.subr.mxu0 0.0
  %2779 = vmatpush1.xpose.msra.mxu0 0.0
  %2780 = vmatprep.subr.mxu0 0.0
  %2781 = vmatpush1.xpose.msra.mxu0 0.0
  %2782 = vmatprep.subr.mxu0 0.0
  %2783 = vmatpush1.xpose.msra.mxu0 0.0
  %2784 = vmatprep.subr.mxu0 0.0
  %2785 = vmatpush1.xpose.msra.mxu0 0.0
  %2786 = vmatprep.subr.mxu0 0.0
  %2787 = vmatpush1.xpose.msra.mxu0 0.0
  %2788 = vmatprep.subr.mxu0 0.0
  %2789 = vmatpush1.xpose.msra.mxu0 0.0
  %2790 = vmatprep.subr.mxu0 0.0
  %2791 = vmatpush1.xpose.msra.mxu0 0.0
  %2792 = vmatprep.subr.mxu0 0.0
  %2793 = vmatpush1.xpose.msra.mxu0 0.0
  %2794 = vmatprep.subr.mxu0 0.0
  %2795 = vmatpush1.xpose.msra.mxu0 0.0
  %2796 = vmatprep.subr.mxu0 0.0
  %2797 = vmatpush1.xpose.msra.mxu0 0.0
  %2798 = vmatprep.subr.mxu0 0.0
  %2799 = vmatpush1.xpose.msra.mxu0 0.0
  %2800 = vmatprep.subr.mxu0 0.0
  %2801 = vmatpush1.xpose.msra.mxu0 0.0
  %2802 = vmatprep.subr.mxu0 0.0
  %2803 = vmatpush1.xpose.msra.mxu0 0.0
  %2804 = vmatprep.mubr.f32.mxu0 0.0
  %2805 = vmatmul.mubr.f32.gmra.mrb[0].mxu0 %v2736
  %v2806 = vpop.f32.mrb[0].mxu0
  %v2807 = vadd.f32 0.0, %v2806
  %v2808 = vpop.f32.mrb[0].mxu0
  %2809 = vdwg.mxu0
  %2810 = vrot.lane.b32.xlu0 %v381, 96
  %v2811 = vpop.permute.xlu0 %2810
  %v2813 = vsel %vm424, %v421, 0
  %v2815 = vsel %vm424, %v2811, 0
  %2817 = vmatprep.subr.mxu0 0.0
  %2818 = vmatpush1.xpose.msra.mxu0 %v2815
  %2819 = vmatprep.subr.mxu0 0.0
  %2820 = vmatpush1.xpose.msra.mxu0 0.0
  %2821 = vmatprep.subr.mxu0 0.0
  %2822 = vmatpush1.xpose.msra.mxu0 0.0
  %2823 = vmatprep.subr.mxu0 0.0
  %2824 = vmatpush1.xpose.msra.mxu0 0.0
  %2825 = vmatprep.subr.mxu0 0.0
  %2826 = vmatpush1.xpose.msra.mxu0 0.0
  %2827 = vmatprep.subr.mxu0 0.0
  %2828 = vmatpush1.xpose.msra.mxu0 0.0
  %2829 = vmatprep.subr.mxu0 0.0
  %2830 = vmatpush1.xpose.msra.mxu0 0.0
  %2831 = vmatprep.subr.mxu0 0.0
  %2832 = vmatpush1.xpose.msra.mxu0 0.0
  %2833 = vmatprep.subr.mxu0 0.0
  %2834 = vmatpush1.xpose.msra.mxu0 0.0
  %2835 = vmatprep.subr.mxu0 0.0
  %2836 = vmatpush1.xpose.msra.mxu0 0.0
  %2837 = vmatprep.subr.mxu0 0.0
  %2838 = vmatpush1.xpose.msra.mxu0 0.0
  %2839 = vmatprep.subr.mxu0 0.0
  %2840 = vmatpush1.xpose.msra.mxu0 0.0
  %2841 = vmatprep.subr.mxu0 0.0
  %2842 = vmatpush1.xpose.msra.mxu0 0.0
  %2843 = vmatprep.subr.mxu0 0.0
  %2844 = vmatpush1.xpose.msra.mxu0 0.0
  %2845 = vmatprep.subr.mxu0 0.0
  %2846 = vmatpush1.xpose.msra.mxu0 0.0
  %2847 = vmatprep.subr.mxu0 0.0
  %2848 = vmatpush1.xpose.msra.mxu0 0.0
  %2849 = vmatprep.subr.mxu0 0.0
  %2850 = vmatpush1.xpose.msra.mxu0 0.0
  %2851 = vmatprep.subr.mxu0 0.0
  %2852 = vmatpush1.xpose.msra.mxu0 0.0
  %2853 = vmatprep.subr.mxu0 0.0
  %2854 = vmatpush1.xpose.msra.mxu0 0.0
  %2855 = vmatprep.subr.mxu0 0.0
  %2856 = vmatpush1.xpose.msra.mxu0 0.0
  %2857 = vmatprep.subr.mxu0 0.0
  %2858 = vmatpush1.xpose.msra.mxu0 0.0
  %2859 = vmatprep.subr.mxu0 0.0
  %2860 = vmatpush1.xpose.msra.mxu0 0.0
  %2861 = vmatprep.subr.mxu0 0.0
  %2862 = vmatpush1.xpose.msra.mxu0 0.0
  %2863 = vmatprep.subr.mxu0 0.0
  %2864 = vmatpush1.xpose.msra.mxu0 0.0
  %2865 = vmatprep.subr.mxu0 0.0
  %2866 = vmatpush1.xpose.msra.mxu0 0.0
  %2867 = vmatprep.subr.mxu0 0.0
  %2868 = vmatpush1.xpose.msra.mxu0 0.0
  %2869 = vmatprep.subr.mxu0 0.0
  %2870 = vmatpush1.xpose.msra.mxu0 0.0
  %2871 = vmatprep.subr.mxu0 0.0
  %2872 = vmatpush1.xpose.msra.mxu0 0.0
  %2873 = vmatprep.subr.mxu0 0.0
  %2874 = vmatpush1.xpose.msra.mxu0 0.0
  %2875 = vmatprep.subr.mxu0 0.0
  %2876 = vmatpush1.xpose.msra.mxu0 0.0
  %2877 = vmatprep.subr.mxu0 0.0
  %2878 = vmatpush1.xpose.msra.mxu0 0.0
  %2879 = vmatprep.subr.mxu0 0.0
  %2880 = vmatpush1.xpose.msra.mxu0 0.0
  %2881 = vmatprep.mubr.f32.mxu0 0.0
  %2882 = vmatmul.mubr.f32.gmra.mrb[0].mxu0 %v2813
  %v2883 = vpop.f32.mrb[0].mxu0
  %v2884 = vadd.f32 0.0, %v2883
  %v2885 = vpop.f32.mrb[0].mxu0
  %2886 = vdwg.mxu0
  %v2887 = vsel %vm424, %v497, -inf
  %2888 = vmax.xlane.f32.xlu0 %v2887
  %v2889 = vpop.xlane.xlu0 %2888
  %v2890 = vsel %vm424, %v574, -inf
  %2891 = vmax.xlane.f32.xlu0 %v2890
  %v2892 = vpop.xlane.xlu0 %2891
  %v2893 = vsel %vm424, %v651, -inf
  %2894 = vmax.xlane.f32.xlu0 %v2893
  %v2895 = vpop.xlane.xlu0 %2894
  %v2896 = vsel %vm424, %v728, -inf
  %2897 = vmax.xlane.f32.xlu0 %v2896
  %v2898 = vpop.xlane.xlu0 %2897
  %v2899 = vsel %vm424, %v805, -inf
  %2900 = vmax.xlane.f32.xlu0 %v2899
  %v2901 = vpop.xlane.xlu0 %2900
  %v2902 = vsel %vm424, %v882, -inf
  %2903 = vmax.xlane.f32.xlu0 %v2902
  %v2904 = vpop.xlane.xlu0 %2903
  %v2905 = vsel %vm424, %v959, -inf
  %2906 = vmax.xlane.f32.xlu0 %v2905
  %v2907 = vpop.xlane.xlu0 %2906
  %v2908 = vsel %vm424, %v1036, -inf
  %2909 = vmax.xlane.f32.xlu0 %v2908
  %v2910 = vpop.xlane.xlu0 %2909
  %v2911 = vsel %vm424, %v1113, -inf
  %2912 = vmax.xlane.f32.xlu0 %v2911
  %v2913 = vpop.xlane.xlu0 %2912
  %v2914 = vsel %vm424, %v1190, -inf
  %2915 = vmax.xlane.f32.xlu0 %v2914
  %v2916 = vpop.xlane.xlu0 %2915
  %v2917 = vsel %vm424, %v1267, -inf
  %2918 = vmax.xlane.f32.xlu0 %v2917
  %v2919 = vpop.xlane.xlu0 %2918
  %v2920 = vsel %vm424, %v1344, -inf
  %2921 = vmax.xlane.f32.xlu0 %v2920
  %v2922 = vpop.xlane.xlu0 %2921
  %v2923 = vsel %vm424, %v1421, -inf
  %2924 = vmax.xlane.f32.xlu0 %v2923
  %v2925 = vpop.xlane.xlu0 %2924
  %v2926 = vsel %vm424, %v1498, -inf
  %2927 = vmax.xlane.f32.xlu0 %v2926
  %v2928 = vpop.xlane.xlu0 %2927
  %v2929 = vsel %vm424, %v1575, -inf
  %2930 = vmax.xlane.f32.xlu0 %v2929
  %v2931 = vpop.xlane.xlu0 %2930
  %v2932 = vsel %vm424, %v1652, -inf
  %2933 = vmax.xlane.f32.xlu0 %v2932
  %v2934 = vpop.xlane.xlu0 %2933
  %v2935 = vsel %vm424, %v1729, -inf
  %2936 = vmax.xlane.f32.xlu0 %v2935
  %v2937 = vpop.xlane.xlu0 %2936
  %v2938 = vsel %vm424, %v1806, -inf
  %2939 = vmax.xlane.f32.xlu0 %v2938
  %v2940 = vpop.xlane.xlu0 %2939
  %v2941 = vsel %vm424, %v1883, -inf
  %2942 = vmax.xlane.f32.xlu0 %v2941
  %v2943 = vpop.xlane.xlu0 %2942
  %v2944 = vsel %vm424, %v1960, -inf
  %2945 = vmax.xlane.f32.xlu0 %v2944
  %v2946 = vpop.xlane.xlu0 %2945
  %v2947 = vsel %vm424, %v2037, -inf
  %2948 = vmax.xlane.f32.xlu0 %v2947
  %v2949 = vpop.xlane.xlu0 %2948
  %v2950 = vsel %vm424, %v2114, -inf
  %2951 = vmax.xlane.f32.xlu0 %v2950
  %v2952 = vpop.xlane.xlu0 %2951
  %v2953 = vsel %vm424, %v2191, -inf
  %2954 = vmax.xlane.f32.xlu0 %v2953
  %v2955 = vpop.xlane.xlu0 %2954
  %v2956 = vsel %vm424, %v2268, -inf
  %2957 = vmax.xlane.f32.xlu0 %v2956
  %v2958 = vpop.xlane.xlu0 %2957
  %v2959 = vsel %vm424, %v2345, -inf
  %2960 = vmax.xlane.f32.xlu0 %v2959
  %v2961 = vpop.xlane.xlu0 %2960
  %v2962 = vsel %vm424, %v2422, -inf
  %2963 = vmax.xlane.f32.xlu0 %v2962
  %v2964 = vpop.xlane.xlu0 %2963
  %v2965 = vsel %vm424, %v2499, -inf
  %2966 = vmax.xlane.f32.xlu0 %v2965
  %v2967 = vpop.xlane.xlu0 %2966
  %v2968 = vsel %vm424, %v2576, -inf
  %2969 = vmax.xlane.f32.xlu0 %v2968
  %v2970 = vpop.xlane.xlu0 %2969
  %v2971 = vsel %vm424, %v2653, -inf
  %2972 = vmax.xlane.f32.xlu0 %v2971
  %v2973 = vpop.xlane.xlu0 %2972
  %v2974 = vsel %vm424, %v2730, -inf
  %2975 = vmax.xlane.f32.xlu0 %v2974
  %v2976 = vpop.xlane.xlu0 %2975
  %v2977 = vsel %vm424, %v2807, -inf
  %2978 = vmax.xlane.f32.xlu0 %v2977
  %v2979 = vpop.xlane.xlu0 %2978
  %v2980 = vsel %vm424, %v2884, -inf
  %2981 = vmax.xlane.f32.xlu0 %v2980
  %v2982 = vpop.xlane.xlu0 %2981
  %v2983 = vsub.f32 %v497, %v2889
  %v2984 = vsub.f32 %v574, %v2892
  %v2985 = vsub.f32 %v651, %v2895
  %v2986 = vsub.f32 %v728, %v2898
  %v2987 = vsub.f32 %v805, %v2901
  %v2988 = vsub.f32 %v882, %v2904
  %v2989 = vsub.f32 %v959, %v2907
  %v2990 = vsub.f32 %v1036, %v2910
  %v2991 = vsub.f32 %v1113, %v2913
  %v2992 = vsub.f32 %v1190, %v2916
  %v2993 = vsub.f32 %v1267, %v2919
  %v2994 = vsub.f32 %v1344, %v2922
  %v2995 = vsub.f32 %v1421, %v2925
  %v2996 = vsub.f32 %v1498, %v2928
  %v2997 = vsub.f32 %v1575, %v2931
  %v2998 = vsub.f32 %v1652, %v2934
  %v2999 = vsub.f32 %v1729, %v2937
  %v3000 = vsub.f32 %v1806, %v2940
  %v3001 = vsub.f32 %v1883, %v2943
  %v3002 = vsub.f32 %v1960, %v2946
  %v3003 = vsub.f32 %v2037, %v2949
  %v3004 = vsub.f32 %v2114, %v2952
  %v3005 = vsub.f32 %v2191, %v2955
  %v3006 = vsub.f32 %v2268, %v2958
  %v3007 = vsub.f32 %v2345, %v2961
  %v3008 = vsub.f32 %v2422, %v2964
  %v3009 = vsub.f32 %v2499, %v2967
  %v3010 = vsub.f32 %v2576, %v2970
  %v3011 = vsub.f32 %v2653, %v2973
  %v3012 = vsub.f32 %v2730, %v2976
  %v3013 = vsub.f32 %v2807, %v2979
  %v3014 = vsub.f32 %v2884, %v2982
  %v3015 = vmul.f32 %v2983, 1.442695
  %v3016 = vpow.pop %v3015
  %v3017 = vmul.f32 %v2984, 1.442695
  %v3018 = vpow.pop %v3017
  %v3019 = vmul.f32 %v2985, 1.442695
  %v3020 = vpow.pop %v3019
  %v3021 = vmul.f32 %v2986, 1.442695
  %v3022 = vpow.pop %v3021
  %v3023 = vmul.f32 %v2987, 1.442695
  %v3024 = vpow.pop %v3023
  %v3025 = vmul.f32 %v2988, 1.442695
  %v3026 = vpow.pop %v3025
  %v3027 = vmul.f32 %v2989, 1.442695
  %v3028 = vpow.pop %v3027
  %v3029 = vmul.f32 %v2990, 1.442695
  %v3030 = vpow.pop %v3029
  %v3031 = vmul.f32 %v2991, 1.442695
  %v3032 = vpow.pop %v3031
  %v3033 = vmul.f32 %v2992, 1.442695
  %v3034 = vpow.pop %v3033
  %v3035 = vmul.f32 %v2993, 1.442695
  %v3036 = vpow.pop %v3035
  %v3037 = vmul.f32 %v2994, 1.442695
  %v3038 = vpow.pop %v3037
  %v3039 = vmul.f32 %v2995, 1.442695
  %v3040 = vpow.pop %v3039
  %v3041 = vmul.f32 %v2996, 1.442695
  %v3042 = vpow.pop %v3041
  %v3043 = vmul.f32 %v2997, 1.442695
  %v3044 = vpow.pop %v3043
  %v3045 = vmul.f32 %v2998, 1.442695
  %v3046 = vpow.pop %v3045
  %v3047 = vmul.f32 %v2999, 1.442695
  %v3048 = vpow.pop %v3047
  %v3049 = vmul.f32 %v3000, 1.442695
  %v3050 = vpow.pop %v3049
  %v3051 = vmul.f32 %v3001, 1.442695
  %v3052 = vpow.pop %v3051
  %v3053 = vmul.f32 %v3002, 1.442695
  %v3054 = vpow.pop %v3053
  %v3055 = vmul.f32 %v3003, 1.442695
  %v3056 = vpow.pop %v3055
  %v3057 = vmul.f32 %v3004, 1.442695
  %v3058 = vpow.pop %v3057
  %v3059 = vmul.f32 %v3005, 1.442695
  %v3060 = vpow.pop %v3059
  %v3061 = vmul.f32 %v3006, 1.442695
  %v3062 = vpow.pop %v3061
  %v3063 = vmul.f32 %v3007, 1.442695
  %v3064 = vpow.pop %v3063
  %v3065 = vmul.f32 %v3008, 1.442695
  %v3066 = vpow.pop %v3065
  %v3067 = vmul.f32 %v3009, 1.442695
  %v3068 = vpow.pop %v3067
  %v3069 = vmul.f32 %v3010, 1.442695
  %v3070 = vpow.pop %v3069
  %v3071 = vmul.f32 %v3011, 1.442695
  %v3072 = vpow.pop %v3071
  %v3073 = vmul.f32 %v3012, 1.442695
  %v3074 = vpow.pop %v3073
  %v3075 = vmul.f32 %v3013, 1.442695
  %v3076 = vpow.pop %v3075
  %v3077 = vmul.f32 %v3014, 1.442695
  %v3078 = vpow.pop %v3077
  %v3079 = vsel %vm424, %v3016, 0.0
  %3080 = vadd.xlane.f32.xlu0 %v3079
  %v3081 = vpop.xlane.xlu0 %3080
  %v3082 = vsel %vm424, %v3018, 0.0
  %3083 = vadd.xlane.f32.xlu0 %v3082
  %v3084 = vpop.xlane.xlu0 %3083
  %v3085 = vsel %vm424, %v3020, 0.0
  %3086 = vadd.xlane.f32.xlu0 %v3085
  %v3087 = vpop.xlane.xlu0 %3086
  %v3088 = vsel %vm424, %v3022, 0.0
  %3089 = vadd.xlane.f32.xlu0 %v3088
  %v3090 = vpop.xlane.xlu0 %3089
  %v3091 = vsel %vm424, %v3024, 0.0
  %3092 = vadd.xlane.f32.xlu0 %v3091
  %v3093 = vpop.xlane.xlu0 %3092
  %v3094 = vsel %vm424, %v3026, 0.0
  %3095 = vadd.xlane.f32.xlu0 %v3094
  %v3096 = vpop.xlane.xlu0 %3095
  %v3097 = vsel %vm424, %v3028, 0.0
  %3098 = vadd.xlane.f32.xlu0 %v3097
  %v3099 = vpop.xlane.xlu0 %3098
  %v3100 = vsel %vm424, %v3030, 0.0
  %3101 = vadd.xlane.f32.xlu0 %v3100
  %v3102 = vpop.xlane.xlu0 %3101
  %v3103 = vsel %vm424, %v3032, 0.0
  %3104 = vadd.xlane.f32.xlu0 %v3103
  %v3105 = vpop.xlane.xlu0 %3104
  %v3106 = vsel %vm424, %v3034, 0.0
  %3107 = vadd.xlane.f32.xlu0 %v3106
  %v3108 = vpop.xlane.xlu0 %3107
  %v3109 = vsel %vm424, %v3036, 0.0
  %3110 = vadd.xlane.f32.xlu0 %v3109
  %v3111 = vpop.xlane.xlu0 %3110
  %v3112 = vsel %vm424, %v3038, 0.0
  %3113 = vadd.xlane.f32.xlu0 %v3112
  %v3114 = vpop.xlane.xlu0 %3113
  %v3115 = vsel %vm424, %v3040, 0.0
  %3116 = vadd.xlane.f32.xlu0 %v3115
  %v3117 = vpop.xlane.xlu0 %3116
  %v3118 = vsel %vm424, %v3042, 0.0
  %3119 = vadd.xlane.f32.xlu0 %v3118
  %v3120 = vpop.xlane.xlu0 %3119
  %v3121 = vsel %vm424, %v3044, 0.0
  %3122 = vadd.xlane.f32.xlu0 %v3121
  %v3123 = vpop.xlane.xlu0 %3122
  %v3124 = vsel %vm424, %v3046, 0.0
  %3125 = vadd.xlane.f32.xlu0 %v3124
  %v3126 = vpop.xlane.xlu0 %3125
  %v3127 = vsel %vm424, %v3048, 0.0
  %3128 = vadd.xlane.f32.xlu0 %v3127
  %v3129 = vpop.xlane.xlu0 %3128
  %v3130 = vsel %vm424, %v3050, 0.0
  %3131 = vadd.xlane.f32.xlu0 %v3130
  %v3132 = vpop.xlane.xlu0 %3131
  %v3133 = vsel %vm424, %v3052, 0.0
  %3134 = vadd.xlane.f32.xlu0 %v3133
  %v3135 = vpop.xlane.xlu0 %3134
  %v3136 = vsel %vm424, %v3054, 0.0
  %3137 = vadd.xlane.f32.xlu0 %v3136
  %v3138 = vpop.xlane.xlu0 %3137
  %v3139 = vsel %vm424, %v3056, 0.0
  %3140 = vadd.xlane.f32.xlu0 %v3139
  %v3141 = vpop.xlane.xlu0 %3140
  %v3142 = vsel %vm424, %v3058, 0.0
  %3143 = vadd.xlane.f32.xlu0 %v3142
  %v3144 = vpop.xlane.xlu0 %3143
  %v3145 = vsel %vm424, %v3060, 0.0
  %3146 = vadd.xlane.f32.xlu0 %v3145
  %v3147 = vpop.xlane.xlu0 %3146
  %v3148 = vsel %vm424, %v3062, 0.0
  %3149 = vadd.xlane.f32.xlu0 %v3148
  %v3150 = vpop.xlane.xlu0 %3149
  %v3151 = vsel %vm424, %v3064, 0.0
  %3152 = vadd.xlane.f32.xlu0 %v3151
  %v3153 = vpop.xlane.xlu0 %3152
  %v3154 = vsel %vm424, %v3066, 0.0
  %3155 = vadd.xlane.f32.xlu0 %v3154
  %v3156 = vpop.xlane.xlu0 %3155
  %v3157 = vsel %vm424, %v3068, 0.0
  %3158 = vadd.xlane.f32.xlu0 %v3157
  %v3159 = vpop.xlane.xlu0 %3158
  %v3160 = vsel %vm424, %v3070, 0.0
  %3161 = vadd.xlane.f32.xlu0 %v3160
  %v3162 = vpop.xlane.xlu0 %3161
  %v3163 = vsel %vm424, %v3072, 0.0
  %3164 = vadd.xlane.f32.xlu0 %v3163
  %v3165 = vpop.xlane.xlu0 %3164
  %v3166 = vsel %vm424, %v3074, 0.0
  %3167 = vadd.xlane.f32.xlu0 %v3166
  %v3168 = vpop.xlane.xlu0 %3167
  %v3169 = vsel %vm424, %v3076, 0.0
  %3170 = vadd.xlane.f32.xlu0 %v3169
  %v3171 = vpop.xlane.xlu0 %3170
  %v3172 = vsel %vm424, %v3078, 0.0
  %3173 = vadd.xlane.f32.xlu0 %v3172
  %v3174 = vpop.xlane.xlu0 %3173
  %v3175 = vrcp.pop %v3081
  %v3176 = vrcp.pop %v3084
  %v3177 = vrcp.pop %v3087
  %v3178 = vrcp.pop %v3090
  %v3179 = vrcp.pop %v3093
  %v3180 = vrcp.pop %v3096
  %v3181 = vrcp.pop %v3099
  %v3182 = vrcp.pop %v3102
  %v3183 = vrcp.pop %v3105
  %v3184 = vrcp.pop %v3108
  %v3185 = vrcp.pop %v3111
  %v3186 = vrcp.pop %v3114
  %v3187 = vrcp.pop %v3117
  %v3188 = vrcp.pop %v3120
  %v3189 = vrcp.pop %v3123
  %v3190 = vrcp.pop %v3126
  %v3191 = vrcp.pop %v3129
  %v3192 = vrcp.pop %v3132
  %v3193 = vrcp.pop %v3135
  %v3194 = vrcp.pop %v3138
  %v3195 = vrcp.pop %v3141
  %v3196 = vrcp.pop %v3144
  %v3197 = vrcp.pop %v3147
  %v3198 = vrcp.pop %v3150
  %v3199 = vrcp.pop %v3153
  %v3200 = vrcp.pop %v3156
  %v3201 = vrcp.pop %v3159
  %v3202 = vrcp.pop %v3162
  %v3203 = vrcp.pop %v3165
  %v3204 = vrcp.pop %v3168
  %v3205 = vrcp.pop %v3171
  %v3206 = vrcp.pop %v3174
  %v3207 = vmul.f32 %v3016, %v3175
  %v3208 = vmul.f32 %v3018, %v3176
  %v3209 = vmul.f32 %v3020, %v3177
  %v3210 = vmul.f32 %v3022, %v3178
  %v3211 = vmul.f32 %v3024, %v3179
  %v3212 = vmul.f32 %v3026, %v3180
  %v3213 = vmul.f32 %v3028, %v3181
  %v3214 = vmul.f32 %v3030, %v3182
  %v3215 = vmul.f32 %v3032, %v3183
  %v3216 = vmul.f32 %v3034, %v3184
  %v3217 = vmul.f32 %v3036, %v3185
  %v3218 = vmul.f32 %v3038, %v3186
  %v3219 = vmul.f32 %v3040, %v3187
  %v3220 = vmul.f32 %v3042, %v3188
  %v3221 = vmul.f32 %v3044, %v3189
  %v3222 = vmul.f32 %v3046, %v3190
  %v3223 = vmul.f32 %v3048, %v3191
  %v3224 = vmul.f32 %v3050, %v3192
  %v3225 = vmul.f32 %v3052, %v3193
  %v3226 = vmul.f32 %v3054, %v3194
  %v3227 = vmul.f32 %v3056, %v3195
  %v3228 = vmul.f32 %v3058, %v3196
  %v3229 = vmul.f32 %v3060, %v3197
  %v3230 = vmul.f32 %v3062, %v3198
  %v3231 = vmul.f32 %v3064, %v3199
  %v3232 = vmul.f32 %v3066, %v3200
  %v3233 = vmul.f32 %v3068, %v3201
  %v3234 = vmul.f32 %v3070, %v3202
  %v3235 = vmul.f32 %v3072, %v3203
  %v3236 = vmul.f32 %v3074, %v3204
  %v3237 = vmul.f32 %v3076, %v3205
  %v3238 = vmul.f32 %v3078, %v3206
  %3239 = vrot.lane.b32.xlu0 %v272, 64
  %v3240 = vpop.permute.xlu0 %3239
  %v3243 = vsel %vm424, %v3207, 0
  %3245 = vmatprep.subr.mxu0 0.0
  %3246 = vmatpush1.msra.mxu0 %v3240
  %3247 = vmatprep.subr.mxu0 0.0
  %3248 = vmatpush1.msra.mxu0 0.0
  %3249 = vmatprep.subr.mxu0 0.0
  %3250 = vmatpush1.msra.mxu0 0.0
  %3251 = vmatprep.subr.mxu0 0.0
  %3252 = vmatpush1.msra.mxu0 0.0
  %3253 = vmatprep.subr.mxu0 0.0
  %3254 = vmatpush1.msra.mxu0 0.0
  %3255 = vmatprep.subr.mxu0 0.0
  %3256 = vmatpush1.msra.mxu0 0.0
  %3257 = vmatprep.subr.mxu0 0.0
  %3258 = vmatpush1.msra.mxu0 0.0
  %3259 = vmatprep.subr.mxu0 0.0
  %3260 = vmatpush1.msra.mxu0 0.0
  %3261 = vmatprep.subr.mxu0 0.0
  %3262 = vmatpush1.msra.mxu0 0.0
  %3263 = vmatprep.subr.mxu0 0.0
  %3264 = vmatpush1.msra.mxu0 0.0
  %3265 = vmatprep.subr.mxu0 0.0
  %3266 = vmatpush1.msra.mxu0 0.0
  %3267 = vmatprep.subr.mxu0 0.0
  %3268 = vmatpush1.msra.mxu0 0.0
  %3269 = vmatprep.subr.mxu0 0.0
  %3270 = vmatpush1.msra.mxu0 0.0
  %3271 = vmatprep.subr.mxu0 0.0
  %3272 = vmatpush1.msra.mxu0 0.0
  %3273 = vmatprep.subr.mxu0 0.0
  %3274 = vmatpush1.msra.mxu0 0.0
  %3275 = vmatprep.subr.mxu0 0.0
  %3276 = vmatpush1.msra.mxu0 0.0
  %3277 = vmatprep.subr.mxu0 0.0
  %3278 = vmatpush1.msra.mxu0 0.0
  %3279 = vmatprep.subr.mxu0 0.0
  %3280 = vmatpush1.msra.mxu0 0.0
  %3281 = vmatprep.subr.mxu0 0.0
  %3282 = vmatpush1.msra.mxu0 0.0
  %3283 = vmatprep.subr.mxu0 0.0
  %3284 = vmatpush1.msra.mxu0 0.0
  %3285 = vmatprep.subr.mxu0 0.0
  %3286 = vmatpush1.msra.mxu0 0.0
  %3287 = vmatprep.subr.mxu0 0.0
  %3288 = vmatpush1.msra.mxu0 0.0
  %3289 = vmatprep.subr.mxu0 0.0
  %3290 = vmatpush1.msra.mxu0 0.0
  %3291 = vmatprep.subr.mxu0 0.0
  %3292 = vmatpush1.msra.mxu0 0.0
  %3293 = vmatprep.subr.mxu0 0.0
  %3294 = vmatpush1.msra.mxu0 0.0
  %3295 = vmatprep.subr.mxu0 0.0
  %3296 = vmatpush1.msra.mxu0 0.0
  %3297 = vmatprep.subr.mxu0 0.0
  %3298 = vmatpush1.msra.mxu0 0.0
  %3299 = vmatprep.subr.mxu0 0.0
  %3300 = vmatpush1.msra.mxu0 0.0
  %3301 = vmatprep.subr.mxu0 0.0
  %3302 = vmatpush1.msra.mxu0 0.0
  %3303 = vmatprep.subr.mxu0 0.0
  %3304 = vmatpush1.msra.mxu0 0.0
  %3305 = vmatprep.subr.mxu0 0.0
  %3306 = vmatpush1.msra.mxu0 0.0
  %3307 = vmatprep.subr.mxu0 0.0
  %3308 = vmatpush1.msra.mxu0 0.0
  %3309 = vmatprep.mubr.f32.mxu0 0.0
  %3310 = vmatmul.mubr.f32.gmra.mrb[0].mxu0 %v3243
  %v3311 = vpop.f32.mrb[0].mxu0
  %v3312 = vadd.f32 0.0, %v3311
  %v3313 = vpop.f32.mrb[0].mxu0
  %3314 = vdwg.mxu0
  %3315 = vrot.lane.b32.xlu0 %v277, 64
  %v3316 = vpop.permute.xlu0 %3315
  %v3319 = vsel %vm424, %v3208, 0
  %3321 = vmatprep.subr.mxu0 0.0
  %3322 = vmatpush1.msra.mxu0 %v3316
  %3323 = vmatprep.subr.mxu0 0.0
  %3324 = vmatpush1.msra.mxu0 0.0
  %3325 = vmatprep.subr.mxu0 0.0
  %3326 = vmatpush1.msra.mxu0 0.0
  %3327 = vmatprep.subr.mxu0 0.0
  %3328 = vmatpush1.msra.mxu0 0.0
  %3329 = vmatprep.subr.mxu0 0.0
  %3330 = vmatpush1.msra.mxu0 0.0
  %3331 = vmatprep.subr.mxu0 0.0
  %3332 = vmatpush1.msra.mxu0 0.0
  %3333 = vmatprep.subr.mxu0 0.0
  %3334 = vmatpush1.msra.mxu0 0.0
  %3335 = vmatprep.subr.mxu0 0.0
  %3336 = vmatpush1.msra.mxu0 0.0
  %3337 = vmatprep.subr.mxu0 0.0
  %3338 = vmatpush1.msra.mxu0 0.0
  %3339 = vmatprep.subr.mxu0 0.0
  %3340 = vmatpush1.msra.mxu0 0.0
  %3341 = vmatprep.subr.mxu0 0.0
  %3342 = vmatpush1.msra.mxu0 0.0
  %3343 = vmatprep.subr.mxu0 0.0
  %3344 = vmatpush1.msra.mxu0 0.0
  %3345 = vmatprep.subr.mxu0 0.0
  %3346 = vmatpush1.msra.mxu0 0.0
  %3347 = vmatprep.subr.mxu0 0.0
  %3348 = vmatpush1.msra.mxu0 0.0
  %3349 = vmatprep.subr.mxu0 0.0
  %3350 = vmatpush1.msra.mxu0 0.0
  %3351 = vmatprep.subr.mxu0 0.0
  %3352 = vmatpush1.msra.mxu0 0.0
  %3353 = vmatprep.subr.mxu0 0.0
  %3354 = vmatpush1.msra.mxu0 0.0
  %3355 = vmatprep.subr.mxu0 0.0
  %3356 = vmatpush1.msra.mxu0 0.0
  %3357 = vmatprep.subr.mxu0 0.0
  %3358 = vmatpush1.msra.mxu0 0.0
  %3359 = vmatprep.subr.mxu0 0.0
  %3360 = vmatpush1.msra.mxu0 0.0
  %3361 = vmatprep.subr.mxu0 0.0
  %3362 = vmatpush1.msra.mxu0 0.0
  %3363 = vmatprep.subr.mxu0 0.0
  %3364 = vmatpush1.msra.mxu0 0.0
  %3365 = vmatprep.subr.mxu0 0.0
  %3366 = vmatpush1.msra.mxu0 0.0
  %3367 = vmatprep.subr.mxu0 0.0
  %3368 = vmatpush1.msra.mxu0 0.0
  %3369 = vmatprep.subr.mxu0 0.0
  %3370 = vmatpush1.msra.mxu0 0.0
  %3371 = vmatprep.subr.mxu0 0.0
  %3372 = vmatpush1.msra.mxu0 0.0
  %3373 = vmatprep.subr.mxu0 0.0
  %3374 = vmatpush1.msra.mxu0 0.0
  %3375 = vmatprep.subr.mxu0 0.0
  %3376 = vmatpush1.msra.mxu0 0.0
  %3377 = vmatprep.subr.mxu0 0.0
  %3378 = vmatpush1.msra.mxu0 0.0
  %3379 = vmatprep.subr.mxu0 0.0
  %3380 = vmatpush1.msra.mxu0 0.0
  %3381 = vmatprep.subr.mxu0 0.0
  %3382 = vmatpush1.msra.mxu0 0.0
  %3383 = vmatprep.subr.mxu0 0.0
  %3384 = vmatpush1.msra.mxu0 0.0
  %3385 = vmatprep.mubr.f32.mxu0 0.0
  %3386 = vmatmul.mubr.f32.gmra.mrb[0].mxu0 %v3319
  %v3387 = vpop.f32.mrb[0].mxu0
  %v3388 = vadd.f32 0.0, %v3387
  %v3389 = vpop.f32.mrb[0].mxu0
  %3390 = vdwg.mxu0
  %3391 = vrot.lane.b32.xlu0 %v282, 64
  %v3392 = vpop.permute.xlu0 %3391
  %v3395 = vsel %vm424, %v3209, 0
  %3397 = vmatprep.subr.mxu0 0.0
  %3398 = vmatpush1.msra.mxu0 %v3392
  %3399 = vmatprep.subr.mxu0 0.0
  %3400 = vmatpush1.msra.mxu0 0.0
  %3401 = vmatprep.subr.mxu0 0.0
  %3402 = vmatpush1.msra.mxu0 0.0
  %3403 = vmatprep.subr.mxu0 0.0
  %3404 = vmatpush1.msra.mxu0 0.0
  %3405 = vmatprep.subr.mxu0 0.0
  %3406 = vmatpush1.msra.mxu0 0.0
  %3407 = vmatprep.subr.mxu0 0.0
  %3408 = vmatpush1.msra.mxu0 0.0
  %3409 = vmatprep.subr.mxu0 0.0
  %3410 = vmatpush1.msra.mxu0 0.0
  %3411 = vmatprep.subr.mxu0 0.0
  %3412 = vmatpush1.msra.mxu0 0.0
  %3413 = vmatprep.subr.mxu0 0.0
  %3414 = vmatpush1.msra.mxu0 0.0
  %3415 = vmatprep.subr.mxu0 0.0
  %3416 = vmatpush1.msra.mxu0 0.0
  %3417 = vmatprep.subr.mxu0 0.0
  %3418 = vmatpush1.msra.mxu0 0.0
  %3419 = vmatprep.subr.mxu0 0.0
  %3420 = vmatpush1.msra.mxu0 0.0
  %3421 = vmatprep.subr.mxu0 0.0
  %3422 = vmatpush1.msra.mxu0 0.0
  %3423 = vmatprep.subr.mxu0 0.0
  %3424 = vmatpush1.msra.mxu0 0.0
  %3425 = vmatprep.subr.mxu0 0.0
  %3426 = vmatpush1.msra.mxu0 0.0
  %3427 = vmatprep.subr.mxu0 0.0
  %3428 = vmatpush1.msra.mxu0 0.0
  %3429 = vmatprep.subr.mxu0 0.0
  %3430 = vmatpush1.msra.mxu0 0.0
  %3431 = vmatprep.subr.mxu0 0.0
  %3432 = vmatpush1.msra.mxu0 0.0
  %3433 = vmatprep.subr.mxu0 0.0
  %3434 = vmatpush1.msra.mxu0 0.0
  %3435 = vmatprep.subr.mxu0 0.0
  %3436 = vmatpush1.msra.mxu0 0.0
  %3437 = vmatprep.subr.mxu0 0.0
  %3438 = vmatpush1.msra.mxu0 0.0
  %3439 = vmatprep.subr.mxu0 0.0
  %3440 = vmatpush1.msra.mxu0 0.0
  %3441 = vmatprep.subr.mxu0 0.0
  %3442 = vmatpush1.msra.mxu0 0.0
  %3443 = vmatprep.subr.mxu0 0.0
  %3444 = vmatpush1.msra.mxu0 0.0
  %3445 = vmatprep.subr.mxu0 0.0
  %3446 = vmatpush1.msra.mxu0 0.0
  %3447 = vmatprep.subr.mxu0 0.0
  %3448 = vmatpush1.msra.mxu0 0.0
  %3449 = vmatprep.subr.mxu0 0.0
  %3450 = vmatpush1.msra.mxu0 0.0
  %3451 = vmatprep.subr.mxu0 0.0
  %3452 = vmatpush1.msra.mxu0 0.0
  %3453 = vmatprep.subr.mxu0 0.0
  %3454 = vmatpush1.msra.mxu0 0.0
  %3455 = vmatprep.subr.mxu0 0.0
  %3456 = vmatpush1.msra.mxu0 0.0
  %3457 = vmatprep.subr.mxu0 0.0
  %3458 = vmatpush1.msra.mxu0 0.0
  %3459 = vmatprep.subr.mxu0 0.0
  %3460 = vmatpush1.msra.mxu0 0.0
  %3461 = vmatprep.mubr.f32.mxu0 0.0
  %3462 = vmatmul.mubr.f32.gmra.mrb[0].mxu0 %v3395
  %v3463 = vpop.f32.mrb[0].mxu0
  %v3464 = vadd.f32 0.0, %v3463
  %v3465 = vpop.f32.mrb[0].mxu0
  %3466 = vdwg.mxu0
  %3467 = vrot.lane.b32.xlu0 %v287, 64
  %v3468 = vpop.permute.xlu0 %3467
  %v3471 = vsel %vm424, %v3210, 0
  %3473 = vmatprep.subr.mxu0 0.0
  %3474 = vmatpush1.msra.mxu0 %v3468
  %3475 = vmatprep.subr.mxu0 0.0
  %3476 = vmatpush1.msra.mxu0 0.0
  %3477 = vmatprep.subr.mxu0 0.0
  %3478 = vmatpush1.msra.mxu0 0.0
  %3479 = vmatprep.subr.mxu0 0.0
  %3480 = vmatpush1.msra.mxu0 0.0
  %3481 = vmatprep.subr.mxu0 0.0
  %3482 = vmatpush1.msra.mxu0 0.0
  %3483 = vmatprep.subr.mxu0 0.0
  %3484 = vmatpush1.msra.mxu0 0.0
  %3485 = vmatprep.subr.mxu0 0.0
  %3486 = vmatpush1.msra.mxu0 0.0
  %3487 = vmatprep.subr.mxu0 0.0
  %3488 = vmatpush1.msra.mxu0 0.0
  %3489 = vmatprep.subr.mxu0 0.0
  %3490 = vmatpush1.msra.mxu0 0.0
  %3491 = vmatprep.subr.mxu0 0.0
  %3492 = vmatpush1.msra.mxu0 0.0
  %3493 = vmatprep.subr.mxu0 0.0
  %3494 = vmatpush1.msra.mxu0 0.0
  %3495 = vmatprep.subr.mxu0 0.0
  %3496 = vmatpush1.msra.mxu0 0.0
  %3497 = vmatprep.subr.mxu0 0.0
  %3498 = vmatpush1.msra.mxu0 0.0
  %3499 = vmatprep.subr.mxu0 0.0
  %3500 = vmatpush1.msra.mxu0 0.0
  %3501 = vmatprep.subr.mxu0 0.0
  %3502 = vmatpush1.msra.mxu0 0.0
  %3503 = vmatprep.subr.mxu0 0.0
  %3504 = vmatpush1.msra.mxu0 0.0
  %3505 = vmatprep.subr.mxu0 0.0
  %3506 = vmatpush1.msra.mxu0 0.0
  %3507 = vmatprep.subr.mxu0 0.0
  %3508 = vmatpush1.msra.mxu0 0.0
  %3509 = vmatprep.subr.mxu0 0.0
  %3510 = vmatpush1.msra.mxu0 0.0
  %3511 = vmatprep.subr.mxu0 0.0
  %3512 = vmatpush1.msra.mxu0 0.0
  %3513 = vmatprep.subr.mxu0 0.0
  %3514 = vmatpush1.msra.mxu0 0.0
  %3515 = vmatprep.subr.mxu0 0.0
  %3516 = vmatpush1.msra.mxu0 0.0
  %3517 = vmatprep.subr.mxu0 0.0
  %3518 = vmatpush1.msra.mxu0 0.0
  %3519 = vmatprep.subr.mxu0 0.0
  %3520 = vmatpush1.msra.mxu0 0.0
  %3521 = vmatprep.subr.mxu0 0.0
  %3522 = vmatpush1.msra.mxu0 0.0
  %3523 = vmatprep.subr.mxu0 0.0
  %3524 = vmatpush1.msra.mxu0 0.0
  %3525 = vmatprep.subr.mxu0 0.0
  %3526 = vmatpush1.msra.mxu0 0.0
  %3527 = vmatprep.subr.mxu0 0.0
  %3528 = vmatpush1.msra.mxu0 0.0
  %3529 = vmatprep.subr.mxu0 0.0
  %3530 = vmatpush1.msra.mxu0 0.0
  %3531 = vmatprep.subr.mxu0 0.0
  %3532 = vmatpush1.msra.mxu0 0.0
  %3533 = vmatprep.subr.mxu0 0.0
  %3534 = vmatpush1.msra.mxu0 0.0
  %3535 = vmatprep.subr.mxu0 0.0
  %3536 = vmatpush1.msra.mxu0 0.0
  %3537 = vmatprep.mubr.f32.mxu0 0.0
  %3538 = vmatmul.mubr.f32.gmra.mrb[0].mxu0 %v3471
  %v3539 = vpop.f32.mrb[0].mxu0
  %v3540 = vadd.f32 0.0, %v3539
  %v3541 = vpop.f32.mrb[0].mxu0
  %3542 = vdwg.mxu0
  %3543 = vrot.lane.b32.xlu0 %v292, 64
  %v3544 = vpop.permute.xlu0 %3543
  %v3547 = vsel %vm424, %v3211, 0
  %3549 = vmatprep.subr.mxu0 0.0
  %3550 = vmatpush1.msra.mxu0 %v3544
  %3551 = vmatprep.subr.mxu0 0.0
  %3552 = vmatpush1.msra.mxu0 0.0
  %3553 = vmatprep.subr.mxu0 0.0
  %3554 = vmatpush1.msra.mxu0 0.0
  %3555 = vmatprep.subr.mxu0 0.0
  %3556 = vmatpush1.msra.mxu0 0.0
  %3557 = vmatprep.subr.mxu0 0.0
  %3558 = vmatpush1.msra.mxu0 0.0
  %3559 = vmatprep.subr.mxu0 0.0
  %3560 = vmatpush1.msra.mxu0 0.0
  %3561 = vmatprep.subr.mxu0 0.0
  %3562 = vmatpush1.msra.mxu0 0.0
  %3563 = vmatprep.subr.mxu0 0.0
  %3564 = vmatpush1.msra.mxu0 0.0
  %3565 = vmatprep.subr.mxu0 0.0
  %3566 = vmatpush1.msra.mxu0 0.0
  %3567 = vmatprep.subr.mxu0 0.0
  %3568 = vmatpush1.msra.mxu0 0.0
  %3569 = vmatprep.subr.mxu0 0.0
  %3570 = vmatpush1.msra.mxu0 0.0
  %3571 = vmatprep.subr.mxu0 0.0
  %3572 = vmatpush1.msra.mxu0 0.0
  %3573 = vmatprep.subr.mxu0 0.0
  %3574 = vmatpush1.msra.mxu0 0.0
  %3575 = vmatprep.subr.mxu0 0.0
  %3576 = vmatpush1.msra.mxu0 0.0
  %3577 = vmatprep.subr.mxu0 0.0
  %3578 = vmatpush1.msra.mxu0 0.0
  %3579 = vmatprep.subr.mxu0 0.0
  %3580 = vmatpush1.msra.mxu0 0.0
  %3581 = vmatprep.subr.mxu0 0.0
  %3582 = vmatpush1.msra.mxu0 0.0
  %3583 = vmatprep.subr.mxu0 0.0
  %3584 = vmatpush1.msra.mxu0 0.0
  %3585 = vmatprep.subr.mxu0 0.0
  %3586 = vmatpush1.msra.mxu0 0.0
  %3587 = vmatprep.subr.mxu0 0.0
  %3588 = vmatpush1.msra.mxu0 0.0
  %3589 = vmatprep.subr.mxu0 0.0
  %3590 = vmatpush1.msra.mxu0 0.0
  %3591 = vmatprep.subr.mxu0 0.0
  %3592 = vmatpush1.msra.mxu0 0.0
  %3593 = vmatprep.subr.mxu0 0.0
  %3594 = vmatpush1.msra.mxu0 0.0
  %3595 = vmatprep.subr.mxu0 0.0
  %3596 = vmatpush1.msra.mxu0 0.0
  %3597 = vmatprep.subr.mxu0 0.0
  %3598 = vmatpush1.msra.mxu0 0.0
  %3599 = vmatprep.subr.mxu0 0.0
  %3600 = vmatpush1.msra.mxu0 0.0
  %3601 = vmatprep.subr.mxu0 0.0
  %3602 = vmatpush1.msra.mxu0 0.0
  %3603 = vmatprep.subr.mxu0 0.0
  %3604 = vmatpush1.msra.mxu0 0.0
  %3605 = vmatprep.subr.mxu0 0.0
  %3606 = vmatpush1.msra.mxu0 0.0
  %3607 = vmatprep.subr.mxu0 0.0
  %3608 = vmatpush1.msra.mxu0 0.0
  %3609 = vmatprep.subr.mxu0 0.0
  %3610 = vmatpush1.msra.mxu0 0.0
  %3611 = vmatprep.subr.mxu0 0.0
  %3612 = vmatpush1.msra.mxu0 0.0
  %3613 = vmatprep.mubr.f32.mxu0 0.0
  %3614 = vmatmul.mubr.f32.gmra.mrb[0].mxu0 %v3547
  %v3615 = vpop.f32.mrb[0].mxu0
  %v3616 = vadd.f32 0.0, %v3615
  %v3617 = vpop.f32.mrb[0].mxu0
  %3618 = vdwg.mxu0
  %3619 = vrot.lane.b32.xlu0 %v297, 64
  %v3620 = vpop.permute.xlu0 %3619
  %v3623 = vsel %vm424, %v3212, 0
  %3625 = vmatprep.subr.mxu0 0.0
  %3626 = vmatpush1.msra.mxu0 %v3620
  %3627 = vmatprep.subr.mxu0 0.0
  %3628 = vmatpush1.msra.mxu0 0.0
  %3629 = vmatprep.subr.mxu0 0.0
  %3630 = vmatpush1.msra.mxu0 0.0
  %3631 = vmatprep.subr.mxu0 0.0
  %3632 = vmatpush1.msra.mxu0 0.0
  %3633 = vmatprep.subr.mxu0 0.0
  %3634 = vmatpush1.msra.mxu0 0.0
  %3635 = vmatprep.subr.mxu0 0.0
  %3636 = vmatpush1.msra.mxu0 0.0
  %3637 = vmatprep.subr.mxu0 0.0
  %3638 = vmatpush1.msra.mxu0 0.0
  %3639 = vmatprep.subr.mxu0 0.0
  %3640 = vmatpush1.msra.mxu0 0.0
  %3641 = vmatprep.subr.mxu0 0.0
  %3642 = vmatpush1.msra.mxu0 0.0
  %3643 = vmatprep.subr.mxu0 0.0
  %3644 = vmatpush1.msra.mxu0 0.0
  %3645 = vmatprep.subr.mxu0 0.0
  %3646 = vmatpush1.msra.mxu0 0.0
  %3647 = vmatprep.subr.mxu0 0.0
  %3648 = vmatpush1.msra.mxu0 0.0
  %3649 = vmatprep.subr.mxu0 0.0
  %3650 = vmatpush1.msra.mxu0 0.0
  %3651 = vmatprep.subr.mxu0 0.0
  %3652 = vmatpush1.msra.mxu0 0.0
  %3653 = vmatprep.subr.mxu0 0.0
  %3654 = vmatpush1.msra.mxu0 0.0
  %3655 = vmatprep.subr.mxu0 0.0
  %3656 = vmatpush1.msra.mxu0 0.0
  %3657 = vmatprep.subr.mxu0 0.0
  %3658 = vmatpush1.msra.mxu0 0.0
  %3659 = vmatprep.subr.mxu0 0.0
  %3660 = vmatpush1.msra.mxu0 0.0
  %3661 = vmatprep.subr.mxu0 0.0
  %3662 = vmatpush1.msra.mxu0 0.0
  %3663 = vmatprep.subr.mxu0 0.0
  %3664 = vmatpush1.msra.mxu0 0.0
  %3665 = vmatprep.subr.mxu0 0.0
  %3666 = vmatpush1.msra.mxu0 0.0
  %3667 = vmatprep.subr.mxu0 0.0
  %3668 = vmatpush1.msra.mxu0 0.0
  %3669 = vmatprep.subr.mxu0 0.0
  %3670 = vmatpush1.msra.mxu0 0.0
  %3671 = vmatprep.subr.mxu0 0.0
  %3672 = vmatpush1.msra.mxu0 0.0
  %3673 = vmatprep.subr.mxu0 0.0
  %3674 = vmatpush1.msra.mxu0 0.0
  %3675 = vmatprep.subr.mxu0 0.0
  %3676 = vmatpush1.msra.mxu0 0.0
  %3677 = vmatprep.subr.mxu0 0.0
  %3678 = vmatpush1.msra.mxu0 0.0
  %3679 = vmatprep.subr.mxu0 0.0
  %3680 = vmatpush1.msra.mxu0 0.0
  %3681 = vmatprep.subr.mxu0 0.0
  %3682 = vmatpush1.msra.mxu0 0.0
  %3683 = vmatprep.subr.mxu0 0.0
  %3684 = vmatpush1.msra.mxu0 0.0
  %3685 = vmatprep.subr.mxu0 0.0
  %3686 = vmatpush1.msra.mxu0 0.0
  %3687 = vmatprep.subr.mxu0 0.0
  %3688 = vmatpush1.msra.mxu0 0.0
  %3689 = vmatprep.mubr.f32.mxu0 0.0
  %3690 = vmatmul.mubr.f32.gmra.mrb[0].mxu0 %v3623
  %v3691 = vpop.f32.mrb[0].mxu0
  %v3692 = vadd.f32 0.0, %v3691
  %v3693 = vpop.f32.mrb[0].mxu0
  %3694 = vdwg.mxu0
  %3695 = vrot.lane.b32.xlu0 %v302, 64
  %v3696 = vpop.permute.xlu0 %3695
  %v3699 = vsel %vm424, %v3213, 0
  %3701 = vmatprep.subr.mxu0 0.0
  %3702 = vmatpush1.msra.mxu0 %v3696
  %3703 = vmatprep.subr.mxu0 0.0
  %3704 = vmatpush1.msra.mxu0 0.0
  %3705 = vmatprep.subr.mxu0 0.0
  %3706 = vmatpush1.msra.mxu0 0.0
  %3707 = vmatprep.subr.mxu0 0.0
  %3708 = vmatpush1.msra.mxu0 0.0
  %3709 = vmatprep.subr.mxu0 0.0
  %3710 = vmatpush1.msra.mxu0 0.0
  %3711 = vmatprep.subr.mxu0 0.0
  %3712 = vmatpush1.msra.mxu0 0.0
  %3713 = vmatprep.subr.mxu0 0.0
  %3714 = vmatpush1.msra.mxu0 0.0
  %3715 = vmatprep.subr.mxu0 0.0
  %3716 = vmatpush1.msra.mxu0 0.0
  %3717 = vmatprep.subr.mxu0 0.0
  %3718 = vmatpush1.msra.mxu0 0.0
  %3719 = vmatprep.subr.mxu0 0.0
  %3720 = vmatpush1.msra.mxu0 0.0
  %3721 = vmatprep.subr.mxu0 0.0
  %3722 = vmatpush1.msra.mxu0 0.0
  %3723 = vmatprep.subr.mxu0 0.0
  %3724 = vmatpush1.msra.mxu0 0.0
  %3725 = vmatprep.subr.mxu0 0.0
  %3726 = vmatpush1.msra.mxu0 0.0
  %3727 = vmatprep.subr.mxu0 0.0
  %3728 = vmatpush1.msra.mxu0 0.0
  %3729 = vmatprep.subr.mxu0 0.0
  %3730 = vmatpush1.msra.mxu0 0.0
  %3731 = vmatprep.subr.mxu0 0.0
  %3732 = vmatpush1.msra.mxu0 0.0
  %3733 = vmatprep.subr.mxu0 0.0
  %3734 = vmatpush1.msra.mxu0 0.0
  %3735 = vmatprep.subr.mxu0 0.0
  %3736 = vmatpush1.msra.mxu0 0.0
  %3737 = vmatprep.subr.mxu0 0.0
  %3738 = vmatpush1.msra.mxu0 0.0
  %3739 = vmatprep.subr.mxu0 0.0
  %3740 = vmatpush1.msra.mxu0 0.0
  %3741 = vmatprep.subr.mxu0 0.0
  %3742 = vmatpush1.msra.mxu0 0.0
  %3743 = vmatprep.subr.mxu0 0.0
  %3744 = vmatpush1.msra.mxu0 0.0
  %3745 = vmatprep.subr.mxu0 0.0
  %3746 = vmatpush1.msra.mxu0 0.0
  %3747 = vmatprep.subr.mxu0 0.0
  %3748 = vmatpush1.msra.mxu0 0.0
  %3749 = vmatprep.subr.mxu0 0.0
  %3750 = vmatpush1.msra.mxu0 0.0
  %3751 = vmatprep.subr.mxu0 0.0
  %3752 = vmatpush1.msra.mxu0 0.0
  %3753 = vmatprep.subr.mxu0 0.0
  %3754 = vmatpush1.msra.mxu0 0.0
  %3755 = vmatprep.subr.mxu0 0.0
  %3756 = vmatpush1.msra.mxu0 0.0
  %3757 = vmatprep.subr.mxu0 0.0
  %3758 = vmatpush1.msra.mxu0 0.0
  %3759 = vmatprep.subr.mxu0 0.0
  %3760 = vmatpush1.msra.mxu0 0.0
  %3761 = vmatprep.subr.mxu0 0.0
  %3762 = vmatpush1.msra.mxu0 0.0
  %3763 = vmatprep.subr.mxu0 0.0
  %3764 = vmatpush1.msra.mxu0 0.0
  %3765 = vmatprep.mubr.f32.mxu0 0.0
  %3766 = vmatmul.mubr.f32.gmra.mrb[0].mxu0 %v3699
  %v3767 = vpop.f32.mrb[0].mxu0
  %v3768 = vadd.f32 0.0, %v3767
  %v3769 = vpop.f32.mrb[0].mxu0
  %3770 = vdwg.mxu0
  %3771 = vrot.lane.b32.xlu0 %v307, 64
  %v3772 = vpop.permute.xlu0 %3771
  %v3775 = vsel %vm424, %v3214, 0
  %3777 = vmatprep.subr.mxu0 0.0
  %3778 = vmatpush1.msra.mxu0 %v3772
  %3779 = vmatprep.subr.mxu0 0.0
  %3780 = vmatpush1.msra.mxu0 0.0
  %3781 = vmatprep.subr.mxu0 0.0
  %3782 = vmatpush1.msra.mxu0 0.0
  %3783 = vmatprep.subr.mxu0 0.0
  %3784 = vmatpush1.msra.mxu0 0.0
  %3785 = vmatprep.subr.mxu0 0.0
  %3786 = vmatpush1.msra.mxu0 0.0
  %3787 = vmatprep.subr.mxu0 0.0
  %3788 = vmatpush1.msra.mxu0 0.0
  %3789 = vmatprep.subr.mxu0 0.0
  %3790 = vmatpush1.msra.mxu0 0.0
  %3791 = vmatprep.subr.mxu0 0.0
  %3792 = vmatpush1.msra.mxu0 0.0
  %3793 = vmatprep.subr.mxu0 0.0
  %3794 = vmatpush1.msra.mxu0 0.0
  %3795 = vmatprep.subr.mxu0 0.0
  %3796 = vmatpush1.msra.mxu0 0.0
  %3797 = vmatprep.subr.mxu0 0.0
  %3798 = vmatpush1.msra.mxu0 0.0
  %3799 = vmatprep.subr.mxu0 0.0
  %3800 = vmatpush1.msra.mxu0 0.0
  %3801 = vmatprep.subr.mxu0 0.0
  %3802 = vmatpush1.msra.mxu0 0.0
  %3803 = vmatprep.subr.mxu0 0.0
  %3804 = vmatpush1.msra.mxu0 0.0
  %3805 = vmatprep.subr.mxu0 0.0
  %3806 = vmatpush1.msra.mxu0 0.0
  %3807 = vmatprep.subr.mxu0 0.0
  %3808 = vmatpush1.msra.mxu0 0.0
  %3809 = vmatprep.subr.mxu0 0.0
  %3810 = vmatpush1.msra.mxu0 0.0
  %3811 = vmatprep.subr.mxu0 0.0
  %3812 = vmatpush1.msra.mxu0 0.0
  %3813 = vmatprep.subr.mxu0 0.0
  %3814 = vmatpush1.msra.mxu0 0.0
  %3815 = vmatprep.subr.mxu0 0.0
  %3816 = vmatpush1.msra.mxu0 0.0
  %3817 = vmatprep.subr.mxu0 0.0
  %3818 = vmatpush1.msra.mxu0 0.0
  %3819 = vmatprep.subr.mxu0 0.0
  %3820 = vmatpush1.msra.mxu0 0.0
  %3821 = vmatprep.subr.mxu0 0.0
  %3822 = vmatpush1.msra.mxu0 0.0
  %3823 = vmatprep.subr.mxu0 0.0
  %3824 = vmatpush1.msra.mxu0 0.0
  %3825 = vmatprep.subr.mxu0 0.0
  %3826 = vmatpush1.msra.mxu0 0.0
  %3827 = vmatprep.subr.mxu0 0.0
  %3828 = vmatpush1.msra.mxu0 0.0
  %3829 = vmatprep.subr.mxu0 0.0
  %3830 = vmatpush1.msra.mxu0 0.0
  %3831 = vmatprep.subr.mxu0 0.0
  %3832 = vmatpush1.msra.mxu0 0.0
  %3833 = vmatprep.subr.mxu0 0.0
  %3834 = vmatpush1.msra.mxu0 0.0
  %3835 = vmatprep.subr.mxu0 0.0
  %3836 = vmatpush1.msra.mxu0 0.0
  %3837 = vmatprep.subr.mxu0 0.0
  %3838 = vmatpush1.msra.mxu0 0.0
  %3839 = vmatprep.subr.mxu0 0.0
  %3840 = vmatpush1.msra.mxu0 0.0
  %3841 = vmatprep.mubr.f32.mxu0 0.0
  %3842 = vmatmul.mubr.f32.gmra.mrb[0].mxu0 %v3775
  %v3843 = vpop.f32.mrb[0].mxu0
  %v3844 = vadd.f32 0.0, %v3843
  %v3845 = vpop.f32.mrb[0].mxu0
  %3846 = vdwg.mxu0
  %3847 = vrot.lane.b32.xlu0 %v319, 64
  %v3848 = vpop.permute.xlu0 %3847
  %v3851 = vsel %vm424, %v3215, 0
  %3853 = vmatprep.subr.mxu0 0.0
  %3854 = vmatpush1.msra.mxu0 %v3848
  %3855 = vmatprep.subr.mxu0 0.0
  %3856 = vmatpush1.msra.mxu0 0.0
  %3857 = vmatprep.subr.mxu0 0.0
  %3858 = vmatpush1.msra.mxu0 0.0
  %3859 = vmatprep.subr.mxu0 0.0
  %3860 = vmatpush1.msra.mxu0 0.0
  %3861 = vmatprep.subr.mxu0 0.0
  %3862 = vmatpush1.msra.mxu0 0.0
  %3863 = vmatprep.subr.mxu0 0.0
  %3864 = vmatpush1.msra.mxu0 0.0
  %3865 = vmatprep.subr.mxu0 0.0
  %3866 = vmatpush1.msra.mxu0 0.0
  %3867 = vmatprep.subr.mxu0 0.0
  %3868 = vmatpush1.msra.mxu0 0.0
  %3869 = vmatprep.subr.mxu0 0.0
  %3870 = vmatpush1.msra.mxu0 0.0
  %3871 = vmatprep.subr.mxu0 0.0
  %3872 = vmatpush1.msra.mxu0 0.0
  %3873 = vmatprep.subr.mxu0 0.0
  %3874 = vmatpush1.msra.mxu0 0.0
  %3875 = vmatprep.subr.mxu0 0.0
  %3876 = vmatpush1.msra.mxu0 0.0
  %3877 = vmatprep.subr.mxu0 0.0
  %3878 = vmatpush1.msra.mxu0 0.0
  %3879 = vmatprep.subr.mxu0 0.0
  %3880 = vmatpush1.msra.mxu0 0.0
  %3881 = vmatprep.subr.mxu0 0.0
  %3882 = vmatpush1.msra.mxu0 0.0
  %3883 = vmatprep.subr.mxu0 0.0
  %3884 = vmatpush1.msra.mxu0 0.0
  %3885 = vmatprep.subr.mxu0 0.0
  %3886 = vmatpush1.msra.mxu0 0.0
  %3887 = vmatprep.subr.mxu0 0.0
  %3888 = vmatpush1.msra.mxu0 0.0
  %3889 = vmatprep.subr.mxu0 0.0
  %3890 = vmatpush1.msra.mxu0 0.0
  %3891 = vmatprep.subr.mxu0 0.0
  %3892 = vmatpush1.msra.mxu0 0.0
  %3893 = vmatprep.subr.mxu0 0.0
  %3894 = vmatpush1.msra.mxu0 0.0
  %3895 = vmatprep.subr.mxu0 0.0
  %3896 = vmatpush1.msra.mxu0 0.0
  %3897 = vmatprep.subr.mxu0 0.0
  %3898 = vmatpush1.msra.mxu0 0.0
  %3899 = vmatprep.subr.mxu0 0.0
  %3900 = vmatpush1.msra.mxu0 0.0
  %3901 = vmatprep.subr.mxu0 0.0
  %3902 = vmatpush1.msra.mxu0 0.0
  %3903 = vmatprep.subr.mxu0 0.0
  %3904 = vmatpush1.msra.mxu0 0.0
  %3905 = vmatprep.subr.mxu0 0.0
  %3906 = vmatpush1.msra.mxu0 0.0
  %3907 = vmatprep.subr.mxu0 0.0
  %3908 = vmatpush1.msra.mxu0 0.0
  %3909 = vmatprep.subr.mxu0 0.0
  %3910 = vmatpush1.msra.mxu0 0.0
  %3911 = vmatprep.subr.mxu0 0.0
  %3912 = vmatpush1.msra.mxu0 0.0
  %3913 = vmatprep.subr.mxu0 0.0
  %3914 = vmatpush1.msra.mxu0 0.0
  %3915 = vmatprep.subr.mxu0 0.0
  %3916 = vmatpush1.msra.mxu0 0.0
  %3917 = vmatprep.mubr.f32.mxu0 0.0
  %3918 = vmatmul.mubr.f32.gmra.mrb[0].mxu0 %v3851
  %v3919 = vpop.f32.mrb[0].mxu0
  %v3920 = vadd.f32 0.0, %v3919
  %v3921 = vpop.f32.mrb[0].mxu0
  %3922 = vdwg.mxu0
  %3923 = vrot.lane.b32.xlu0 %v321, 64
  %v3924 = vpop.permute.xlu0 %3923
  %v3927 = vsel %vm424, %v3216, 0
  %3929 = vmatprep.subr.mxu0 0.0
  %3930 = vmatpush1.msra.mxu0 %v3924
  %3931 = vmatprep.subr.mxu0 0.0
  %3932 = vmatpush1.msra.mxu0 0.0
  %3933 = vmatprep.subr.mxu0 0.0
  %3934 = vmatpush1.msra.mxu0 0.0
  %3935 = vmatprep.subr.mxu0 0.0
  %3936 = vmatpush1.msra.mxu0 0.0
  %3937 = vmatprep.subr.mxu0 0.0
  %3938 = vmatpush1.msra.mxu0 0.0
  %3939 = vmatprep.subr.mxu0 0.0
  %3940 = vmatpush1.msra.mxu0 0.0
  %3941 = vmatprep.subr.mxu0 0.0
  %3942 = vmatpush1.msra.mxu0 0.0
  %3943 = vmatprep.subr.mxu0 0.0
  %3944 = vmatpush1.msra.mxu0 0.0
  %3945 = vmatprep.subr.mxu0 0.0
  %3946 = vmatpush1.msra.mxu0 0.0
  %3947 = vmatprep.subr.mxu0 0.0
  %3948 = vmatpush1.msra.mxu0 0.0
  %3949 = vmatprep.subr.mxu0 0.0
  %3950 = vmatpush1.msra.mxu0 0.0
  %3951 = vmatprep.subr.mxu0 0.0
  %3952 = vmatpush1.msra.mxu0 0.0
  %3953 = vmatprep.subr.mxu0 0.0
  %3954 = vmatpush1.msra.mxu0 0.0
  %3955 = vmatprep.subr.mxu0 0.0
  %3956 = vmatpush1.msra.mxu0 0.0
  %3957 = vmatprep.subr.mxu0 0.0
  %3958 = vmatpush1.msra.mxu0 0.0
  %3959 = vmatprep.subr.mxu0 0.0
  %3960 = vmatpush1.msra.mxu0 0.0
  %3961 = vmatprep.subr.mxu0 0.0
  %3962 = vmatpush1.msra.mxu0 0.0
  %3963 = vmatprep.subr.mxu0 0.0
  %3964 = vmatpush1.msra.mxu0 0.0
  %3965 = vmatprep.subr.mxu0 0.0
  %3966 = vmatpush1.msra.mxu0 0.0
  %3967 = vmatprep.subr.mxu0 0.0
  %3968 = vmatpush1.msra.mxu0 0.0
  %3969 = vmatprep.subr.mxu0 0.0
  %3970 = vmatpush1.msra.mxu0 0.0
  %3971 = vmatprep.subr.mxu0 0.0
  %3972 = vmatpush1.msra.mxu0 0.0
  %3973 = vmatprep.subr.mxu0 0.0
  %3974 = vmatpush1.msra.mxu0 0.0
  %3975 = vmatprep.subr.mxu0 0.0
  %3976 = vmatpush1.msra.mxu0 0.0
  %3977 = vmatprep.subr.mxu0 0.0
  %3978 = vmatpush1.msra.mxu0 0.0
  %3979 = vmatprep.subr.mxu0 0.0
  %3980 = vmatpush1.msra.mxu0 0.0
  %3981 = vmatprep.subr.mxu0 0.0
  %3982 = vmatpush1.msra.mxu0 0.0
  %3983 = vmatprep.subr.mxu0 0.0
  %3984 = vmatpush1.msra.mxu0 0.0
  %3985 = vmatprep.subr.mxu0 0.0
  %3986 = vmatpush1.msra.mxu0 0.0
  %3987 = vmatprep.subr.mxu0 0.0
  %3988 = vmatpush1.msra.mxu0 0.0
  %3989 = vmatprep.subr.mxu0 0.0
  %3990 = vmatpush1.msra.mxu0 0.0
  %3991 = vmatprep.subr.mxu0 0.0
  %3992 = vmatpush1.msra.mxu0 0.0
  %3993 = vmatprep.mubr.f32.mxu0 0.0
  %3994 = vmatmul.mubr.f32.gmra.mrb[0].mxu0 %v3927
  %v3995 = vpop.f32.mrb[0].mxu0
  %v3996 = vadd.f32 0.0, %v3995
  %v3997 = vpop.f32.mrb[0].mxu0
  %3998 = vdwg.mxu0
  %3999 = vrot.lane.b32.xlu0 %v323, 64
  %v4000 = vpop.permute.xlu0 %3999
  %v4003 = vsel %vm424, %v3217, 0
  %4005 = vmatprep.subr.mxu0 0.0
  %4006 = vmatpush1.msra.mxu0 %v4000
  %4007 = vmatprep.subr.mxu0 0.0
  %4008 = vmatpush1.msra.mxu0 0.0
  %4009 = vmatprep.subr.mxu0 0.0
  %4010 = vmatpush1.msra.mxu0 0.0
  %4011 = vmatprep.subr.mxu0 0.0
  %4012 = vmatpush1.msra.mxu0 0.0
  %4013 = vmatprep.subr.mxu0 0.0
  %4014 = vmatpush1.msra.mxu0 0.0
  %4015 = vmatprep.subr.mxu0 0.0
  %4016 = vmatpush1.msra.mxu0 0.0
  %4017 = vmatprep.subr.mxu0 0.0
  %4018 = vmatpush1.msra.mxu0 0.0
  %4019 = vmatprep.subr.mxu0 0.0
  %4020 = vmatpush1.msra.mxu0 0.0
  %4021 = vmatprep.subr.mxu0 0.0
  %4022 = vmatpush1.msra.mxu0 0.0
  %4023 = vmatprep.subr.mxu0 0.0
  %4024 = vmatpush1.msra.mxu0 0.0
  %4025 = vmatprep.subr.mxu0 0.0
  %4026 = vmatpush1.msra.mxu0 0.0
  %4027 = vmatprep.subr.mxu0 0.0
  %4028 = vmatpush1.msra.mxu0 0.0
  %4029 = vmatprep.subr.mxu0 0.0
  %4030 = vmatpush1.msra.mxu0 0.0
  %4031 = vmatprep.subr.mxu0 0.0
  %4032 = vmatpush1.msra.mxu0 0.0
  %4033 = vmatprep.subr.mxu0 0.0
  %4034 = vmatpush1.msra.mxu0 0.0
  %4035 = vmatprep.subr.mxu0 0.0
  %4036 = vmatpush1.msra.mxu0 0.0
  %4037 = vmatprep.subr.mxu0 0.0
  %4038 = vmatpush1.msra.mxu0 0.0
  %4039 = vmatprep.subr.mxu0 0.0
  %4040 = vmatpush1.msra.mxu0 0.0
  %4041 = vmatprep.subr.mxu0 0.0
  %4042 = vmatpush1.msra.mxu0 0.0
  %4043 = vmatprep.subr.mxu0 0.0
  %4044 = vmatpush1.msra.mxu0 0.0
  %4045 = vmatprep.subr.mxu0 0.0
  %4046 = vmatpush1.msra.mxu0 0.0
  %4047 = vmatprep.subr.mxu0 0.0
  %4048 = vmatpush1.msra.mxu0 0.0
  %4049 = vmatprep.subr.mxu0 0.0
  %4050 = vmatpush1.msra.mxu0 0.0
  %4051 = vmatprep.subr.mxu0 0.0
  %4052 = vmatpush1.msra.mxu0 0.0
  %4053 = vmatprep.subr.mxu0 0.0
  %4054 = vmatpush1.msra.mxu0 0.0
  %4055 = vmatprep.subr.mxu0 0.0
  %4056 = vmatpush1.msra.mxu0 0.0
  %4057 = vmatprep.subr.mxu0 0.0
  %4058 = vmatpush1.msra.mxu0 0.0
  %4059 = vmatprep.subr.mxu0 0.0
  %4060 = vmatpush1.msra.mxu0 0.0
  %4061 = vmatprep.subr.mxu0 0.0
  %4062 = vmatpush1.msra.mxu0 0.0
  %4063 = vmatprep.subr.mxu0 0.0
  %4064 = vmatpush1.msra.mxu0 0.0
  %4065 = vmatprep.subr.mxu0 0.0
  %4066 = vmatpush1.msra.mxu0 0.0
  %4067 = vmatprep.subr.mxu0 0.0
  %4068 = vmatpush1.msra.mxu0 0.0
  %4069 = vmatprep.mubr.f32.mxu0 0.0
  %4070 = vmatmul.mubr.f32.gmra.mrb[0].mxu0 %v4003
  %v4071 = vpop.f32.mrb[0].mxu0
  %v4072 = vadd.f32 0.0, %v4071
  %v4073 = vpop.f32.mrb[0].mxu0
  %4074 = vdwg.mxu0
  %4075 = vrot.lane.b32.xlu0 %v325, 64
  %v4076 = vpop.permute.xlu0 %4075
  %v4079 = vsel %vm424, %v3218, 0
  %4081 = vmatprep.subr.mxu0 0.0
  %4082 = vmatpush1.msra.mxu0 %v4076
  %4083 = vmatprep.subr.mxu0 0.0
  %4084 = vmatpush1.msra.mxu0 0.0
  %4085 = vmatprep.subr.mxu0 0.0
  %4086 = vmatpush1.msra.mxu0 0.0
  %4087 = vmatprep.subr.mxu0 0.0
  %4088 = vmatpush1.msra.mxu0 0.0
  %4089 = vmatprep.subr.mxu0 0.0
  %4090 = vmatpush1.msra.mxu0 0.0
  %4091 = vmatprep.subr.mxu0 0.0
  %4092 = vmatpush1.msra.mxu0 0.0
  %4093 = vmatprep.subr.mxu0 0.0
  %4094 = vmatpush1.msra.mxu0 0.0
  %4095 = vmatprep.subr.mxu0 0.0
  %4096 = vmatpush1.msra.mxu0 0.0
  %4097 = vmatprep.subr.mxu0 0.0
  %4098 = vmatpush1.msra.mxu0 0.0
  %4099 = vmatprep.subr.mxu0 0.0
  %4100 = vmatpush1.msra.mxu0 0.0
  %4101 = vmatprep.subr.mxu0 0.0
  %4102 = vmatpush1.msra.mxu0 0.0
  %4103 = vmatprep.subr.mxu0 0.0
  %4104 = vmatpush1.msra.mxu0 0.0
  %4105 = vmatprep.subr.mxu0 0.0
  %4106 = vmatpush1.msra.mxu0 0.0
  %4107 = vmatprep.subr.mxu0 0.0
  %4108 = vmatpush1.msra.mxu0 0.0
  %4109 = vmatprep.subr.mxu0 0.0
  %4110 = vmatpush1.msra.mxu0 0.0
  %4111 = vmatprep.subr.mxu0 0.0
  %4112 = vmatpush1.msra.mxu0 0.0
  %4113 = vmatprep.subr.mxu0 0.0
  %4114 = vmatpush1.msra.mxu0 0.0
  %4115 = vmatprep.subr.mxu0 0.0
  %4116 = vmatpush1.msra.mxu0 0.0
  %4117 = vmatprep.subr.mxu0 0.0
  %4118 = vmatpush1.msra.mxu0 0.0
  %4119 = vmatprep.subr.mxu0 0.0
  %4120 = vmatpush1.msra.mxu0 0.0
  %4121 = vmatprep.subr.mxu0 0.0
  %4122 = vmatpush1.msra.mxu0 0.0
  %4123 = vmatprep.subr.mxu0 0.0
  %4124 = vmatpush1.msra.mxu0 0.0
  %4125 = vmatprep.subr.mxu0 0.0
  %4126 = vmatpush1.msra.mxu0 0.0
  %4127 = vmatprep.subr.mxu0 0.0
  %4128 = vmatpush1.msra.mxu0 0.0
  %4129 = vmatprep.subr.mxu0 0.0
  %4130 = vmatpush1.msra.mxu0 0.0
  %4131 = vmatprep.subr.mxu0 0.0
  %4132 = vmatpush1.msra.mxu0 0.0
  %4133 = vmatprep.subr.mxu0 0.0
  %4134 = vmatpush1.msra.mxu0 0.0
  %4135 = vmatprep.subr.mxu0 0.0
  %4136 = vmatpush1.msra.mxu0 0.0
  %4137 = vmatprep.subr.mxu0 0.0
  %4138 = vmatpush1.msra.mxu0 0.0
  %4139 = vmatprep.subr.mxu0 0.0
  %4140 = vmatpush1.msra.mxu0 0.0
  %4141 = vmatprep.subr.mxu0 0.0
  %4142 = vmatpush1.msra.mxu0 0.0
  %4143 = vmatprep.subr.mxu0 0.0
  %4144 = vmatpush1.msra.mxu0 0.0
  %4145 = vmatprep.mubr.f32.mxu0 0.0
  %4146 = vmatmul.mubr.f32.gmra.mrb[0].mxu0 %v4079
  %v4147 = vpop.f32.mrb[0].mxu0
  %v4148 = vadd.f32 0.0, %v4147
  %v4149 = vpop.f32.mrb[0].mxu0
  %4150 = vdwg.mxu0
  %4151 = vrot.lane.b32.xlu0 %v327, 64
  %v4152 = vpop.permute.xlu0 %4151
  %v4155 = vsel %vm424, %v3219, 0
  %4157 = vmatprep.subr.mxu0 0.0
  %4158 = vmatpush1.msra.mxu0 %v4152
  %4159 = vmatprep.subr.mxu0 0.0
  %4160 = vmatpush1.msra.mxu0 0.0
  %4161 = vmatprep.subr.mxu0 0.0
  %4162 = vmatpush1.msra.mxu0 0.0
  %4163 = vmatprep.subr.mxu0 0.0
  %4164 = vmatpush1.msra.mxu0 0.0
  %4165 = vmatprep.subr.mxu0 0.0
  %4166 = vmatpush1.msra.mxu0 0.0
  %4167 = vmatprep.subr.mxu0 0.0
  %4168 = vmatpush1.msra.mxu0 0.0
  %4169 = vmatprep.subr.mxu0 0.0
  %4170 = vmatpush1.msra.mxu0 0.0
  %4171 = vmatprep.subr.mxu0 0.0
  %4172 = vmatpush1.msra.mxu0 0.0
  %4173 = vmatprep.subr.mxu0 0.0
  %4174 = vmatpush1.msra.mxu0 0.0
  %4175 = vmatprep.subr.mxu0 0.0
  %4176 = vmatpush1.msra.mxu0 0.0
  %4177 = vmatprep.subr.mxu0 0.0
  %4178 = vmatpush1.msra.mxu0 0.0
  %4179 = vmatprep.subr.mxu0 0.0
  %4180 = vmatpush1.msra.mxu0 0.0
  %4181 = vmatprep.subr.mxu0 0.0
  %4182 = vmatpush1.msra.mxu0 0.0
  %4183 = vmatprep.subr.mxu0 0.0
  %4184 = vmatpush1.msra.mxu0 0.0
  %4185 = vmatprep.subr.mxu0 0.0
  %4186 = vmatpush1.msra.mxu0 0.0
  %4187 = vmatprep.subr.mxu0 0.0
  %4188 = vmatpush1.msra.mxu0 0.0
  %4189 = vmatprep.subr.mxu0 0.0
  %4190 = vmatpush1.msra.mxu0 0.0
  %4191 = vmatprep.subr.mxu0 0.0
  %4192 = vmatpush1.msra.mxu0 0.0
  %4193 = vmatprep.subr.mxu0 0.0
  %4194 = vmatpush1.msra.mxu0 0.0
  %4195 = vmatprep.subr.mxu0 0.0
  %4196 = vmatpush1.msra.mxu0 0.0
  %4197 = vmatprep.subr.mxu0 0.0
  %4198 = vmatpush1.msra.mxu0 0.0
  %4199 = vmatprep.subr.mxu0 0.0
  %4200 = vmatpush1.msra.mxu0 0.0
  %4201 = vmatprep.subr.mxu0 0.0
  %4202 = vmatpush1.msra.mxu0 0.0
  %4203 = vmatprep.subr.mxu0 0.0
  %4204 = vmatpush1.msra.mxu0 0.0
  %4205 = vmatprep.subr.mxu0 0.0
  %4206 = vmatpush1.msra.mxu0 0.0
  %4207 = vmatprep.subr.mxu0 0.0
  %4208 = vmatpush1.msra.mxu0 0.0
  %4209 = vmatprep.subr.mxu0 0.0
  %4210 = vmatpush1.msra.mxu0 0.0
  %4211 = vmatprep.subr.mxu0 0.0
  %4212 = vmatpush1.msra.mxu0 0.0
  %4213 = vmatprep.subr.mxu0 0.0
  %4214 = vmatpush1.msra.mxu0 0.0
  %4215 = vmatprep.subr.mxu0 0.0
  %4216 = vmatpush1.msra.mxu0 0.0
  %4217 = vmatprep.subr.mxu0 0.0
  %4218 = vmatpush1.msra.mxu0 0.0
  %4219 = vmatprep.subr.mxu0 0.0
  %4220 = vmatpush1.msra.mxu0 0.0
  %4221 = vmatprep.mubr.f32.mxu0 0.0
  %4222 = vmatmul.mubr.f32.gmra.mrb[0].mxu0 %v4155
  %v4223 = vpop.f32.mrb[0].mxu0
  %v4224 = vadd.f32 0.0, %v4223
  %v4225 = vpop.f32.mrb[0].mxu0
  %4226 = vdwg.mxu0
  %4227 = vrot.lane.b32.xlu0 %v329, 64
  %v4228 = vpop.permute.xlu0 %4227
  %v4231 = vsel %vm424, %v3220, 0
  %4233 = vmatprep.subr.mxu0 0.0
  %4234 = vmatpush1.msra.mxu0 %v4228
  %4235 = vmatprep.subr.mxu0 0.0
  %4236 = vmatpush1.msra.mxu0 0.0
  %4237 = vmatprep.subr.mxu0 0.0
  %4238 = vmatpush1.msra.mxu0 0.0
  %4239 = vmatprep.subr.mxu0 0.0
  %4240 = vmatpush1.msra.mxu0 0.0
  %4241 = vmatprep.subr.mxu0 0.0
  %4242 = vmatpush1.msra.mxu0 0.0
  %4243 = vmatprep.subr.mxu0 0.0
  %4244 = vmatpush1.msra.mxu0 0.0
  %4245 = vmatprep.subr.mxu0 0.0
  %4246 = vmatpush1.msra.mxu0 0.0
  %4247 = vmatprep.subr.mxu0 0.0
  %4248 = vmatpush1.msra.mxu0 0.0
  %4249 = vmatprep.subr.mxu0 0.0
  %4250 = vmatpush1.msra.mxu0 0.0
  %4251 = vmatprep.subr.mxu0 0.0
  %4252 = vmatpush1.msra.mxu0 0.0
  %4253 = vmatprep.subr.mxu0 0.0
  %4254 = vmatpush1.msra.mxu0 0.0
  %4255 = vmatprep.subr.mxu0 0.0
  %4256 = vmatpush1.msra.mxu0 0.0
  %4257 = vmatprep.subr.mxu0 0.0
  %4258 = vmatpush1.msra.mxu0 0.0
  %4259 = vmatprep.subr.mxu0 0.0
  %4260 = vmatpush1.msra.mxu0 0.0
  %4261 = vmatprep.subr.mxu0 0.0
  %4262 = vmatpush1.msra.mxu0 0.0
  %4263 = vmatprep.subr.mxu0 0.0
  %4264 = vmatpush1.msra.mxu0 0.0
  %4265 = vmatprep.subr.mxu0 0.0
  %4266 = vmatpush1.msra.mxu0 0.0
  %4267 = vmatprep.subr.mxu0 0.0
  %4268 = vmatpush1.msra.mxu0 0.0
  %4269 = vmatprep.subr.mxu0 0.0
  %4270 = vmatpush1.msra.mxu0 0.0
  %4271 = vmatprep.subr.mxu0 0.0
  %4272 = vmatpush1.msra.mxu0 0.0
  %4273 = vmatprep.subr.mxu0 0.0
  %4274 = vmatpush1.msra.mxu0 0.0
  %4275 = vmatprep.subr.mxu0 0.0
  %4276 = vmatpush1.msra.mxu0 0.0
  %4277 = vmatprep.subr.mxu0 0.0
  %4278 = vmatpush1.msra.mxu0 0.0
  %4279 = vmatprep.subr.mxu0 0.0
  %4280 = vmatpush1.msra.mxu0 0.0
  %4281 = vmatprep.subr.mxu0 0.0
  %4282 = vmatpush1.msra.mxu0 0.0
  %4283 = vmatprep.subr.mxu0 0.0
  %4284 = vmatpush1.msra.mxu0 0.0
  %4285 = vmatprep.subr.mxu0 0.0
  %4286 = vmatpush1.msra.mxu0 0.0
  %4287 = vmatprep.subr.mxu0 0.0
  %4288 = vmatpush1.msra.mxu0 0.0
  %4289 = vmatprep.subr.mxu0 0.0
  %4290 = vmatpush1.msra.mxu0 0.0
  %4291 = vmatprep.subr.mxu0 0.0
  %4292 = vmatpush1.msra.mxu0 0.0
  %4293 = vmatprep.subr.mxu0 0.0
  %4294 = vmatpush1.msra.mxu0 0.0
  %4295 = vmatprep.subr.mxu0 0.0
  %4296 = vmatpush1.msra.mxu0 0.0
  %4297 = vmatprep.mubr.f32.mxu0 0.0
  %4298 = vmatmul.mubr.f32.gmra.mrb[0].mxu0 %v4231
  %v4299 = vpop.f32.mrb[0].mxu0
  %v4300 = vadd.f32 0.0, %v4299
  %v4301 = vpop.f32.mrb[0].mxu0
  %4302 = vdwg.mxu0
  %4303 = vrot.lane.b32.xlu0 %v331, 64
  %v4304 = vpop.permute.xlu0 %4303
  %v4307 = vsel %vm424, %v3221, 0
  %4309 = vmatprep.subr.mxu0 0.0
  %4310 = vmatpush1.msra.mxu0 %v4304
  %4311 = vmatprep.subr.mxu0 0.0
  %4312 = vmatpush1.msra.mxu0 0.0
  %4313 = vmatprep.subr.mxu0 0.0
  %4314 = vmatpush1.msra.mxu0 0.0
  %4315 = vmatprep.subr.mxu0 0.0
  %4316 = vmatpush1.msra.mxu0 0.0
  %4317 = vmatprep.subr.mxu0 0.0
  %4318 = vmatpush1.msra.mxu0 0.0
  %4319 = vmatprep.subr.mxu0 0.0
  %4320 = vmatpush1.msra.mxu0 0.0
  %4321 = vmatprep.subr.mxu0 0.0
  %4322 = vmatpush1.msra.mxu0 0.0
  %4323 = vmatprep.subr.mxu0 0.0
  %4324 = vmatpush1.msra.mxu0 0.0
  %4325 = vmatprep.subr.mxu0 0.0
  %4326 = vmatpush1.msra.mxu0 0.0
  %4327 = vmatprep.subr.mxu0 0.0
  %4328 = vmatpush1.msra.mxu0 0.0
  %4329 = vmatprep.subr.mxu0 0.0
  %4330 = vmatpush1.msra.mxu0 0.0
  %4331 = vmatprep.subr.mxu0 0.0
  %4332 = vmatpush1.msra.mxu0 0.0
  %4333 = vmatprep.subr.mxu0 0.0
  %4334 = vmatpush1.msra.mxu0 0.0
  %4335 = vmatprep.subr.mxu0 0.0
  %4336 = vmatpush1.msra.mxu0 0.0
  %4337 = vmatprep.subr.mxu0 0.0
  %4338 = vmatpush1.msra.mxu0 0.0
  %4339 = vmatprep.subr.mxu0 0.0
  %4340 = vmatpush1.msra.mxu0 0.0
  %4341 = vmatprep.subr.mxu0 0.0
  %4342 = vmatpush1.msra.mxu0 0.0
  %4343 = vmatprep.subr.mxu0 0.0
  %4344 = vmatpush1.msra.mxu0 0.0
  %4345 = vmatprep.subr.mxu0 0.0
  %4346 = vmatpush1.msra.mxu0 0.0
  %4347 = vmatprep.subr.mxu0 0.0
  %4348 = vmatpush1.msra.mxu0 0.0
  %4349 = vmatprep.subr.mxu0 0.0
  %4350 = vmatpush1.msra.mxu0 0.0
  %4351 = vmatprep.subr.mxu0 0.0
  %4352 = vmatpush1.msra.mxu0 0.0
  %4353 = vmatprep.subr.mxu0 0.0
  %4354 = vmatpush1.msra.mxu0 0.0
  %4355 = vmatprep.subr.mxu0 0.0
  %4356 = vmatpush1.msra.mxu0 0.0
  %4357 = vmatprep.subr.mxu0 0.0
  %4358 = vmatpush1.msra.mxu0 0.0
  %4359 = vmatprep.subr.mxu0 0.0
  %4360 = vmatpush1.msra.mxu0 0.0
  %4361 = vmatprep.subr.mxu0 0.0
  %4362 = vmatpush1.msra.mxu0 0.0
  %4363 = vmatprep.subr.mxu0 0.0
  %4364 = vmatpush1.msra.mxu0 0.0
  %4365 = vmatprep.subr.mxu0 0.0
  %4366 = vmatpush1.msra.mxu0 0.0
  %4367 = vmatprep.subr.mxu0 0.0
  %4368 = vmatpush1.msra.mxu0 0.0
  %4369 = vmatprep.subr.mxu0 0.0
  %4370 = vmatpush1.msra.mxu0 0.0
  %4371 = vmatprep.subr.mxu0 0.0
  %4372 = vmatpush1.msra.mxu0 0.0
  %4373 = vmatprep.mubr.f32.mxu0 0.0
  %4374 = vmatmul.mubr.f32.gmra.mrb[0].mxu0 %v4307
  %v4375 = vpop.f32.mrb[0].mxu0
  %v4376 = vadd.f32 0.0, %v4375
  %v4377 = vpop.f32.mrb[0].mxu0
  %4378 = vdwg.mxu0
  %4379 = vrot.lane.b32.xlu0 %v333, 64
  %v4380 = vpop.permute.xlu0 %4379
  %v4383 = vsel %vm424, %v3222, 0
  %4385 = vmatprep.subr.mxu0 0.0
  %4386 = vmatpush1.msra.mxu0 %v4380
  %4387 = vmatprep.subr.mxu0 0.0
  %4388 = vmatpush1.msra.mxu0 0.0
  %4389 = vmatprep.subr.mxu0 0.0
  %4390 = vmatpush1.msra.mxu0 0.0
  %4391 = vmatprep.subr.mxu0 0.0
  %4392 = vmatpush1.msra.mxu0 0.0
  %4393 = vmatprep.subr.mxu0 0.0
  %4394 = vmatpush1.msra.mxu0 0.0
  %4395 = vmatprep.subr.mxu0 0.0
  %4396 = vmatpush1.msra.mxu0 0.0
  %4397 = vmatprep.subr.mxu0 0.0
  %4398 = vmatpush1.msra.mxu0 0.0
  %4399 = vmatprep.subr.mxu0 0.0
  %4400 = vmatpush1.msra.mxu0 0.0
  %4401 = vmatprep.subr.mxu0 0.0
  %4402 = vmatpush1.msra.mxu0 0.0
  %4403 = vmatprep.subr.mxu0 0.0
  %4404 = vmatpush1.msra.mxu0 0.0
  %4405 = vmatprep.subr.mxu0 0.0
  %4406 = vmatpush1.msra.mxu0 0.0
  %4407 = vmatprep.subr.mxu0 0.0
  %4408 = vmatpush1.msra.mxu0 0.0
  %4409 = vmatprep.subr.mxu0 0.0
  %4410 = vmatpush1.msra.mxu0 0.0
  %4411 = vmatprep.subr.mxu0 0.0
  %4412 = vmatpush1.msra.mxu0 0.0
  %4413 = vmatprep.subr.mxu0 0.0
  %4414 = vmatpush1.msra.mxu0 0.0
  %4415 = vmatprep.subr.mxu0 0.0
  %4416 = vmatpush1.msra.mxu0 0.0
  %4417 = vmatprep.subr.mxu0 0.0
  %4418 = vmatpush1.msra.mxu0 0.0
  %4419 = vmatprep.subr.mxu0 0.0
  %4420 = vmatpush1.msra.mxu0 0.0
  %4421 = vmatprep.subr.mxu0 0.0
  %4422 = vmatpush1.msra.mxu0 0.0
  %4423 = vmatprep.subr.mxu0 0.0
  %4424 = vmatpush1.msra.mxu0 0.0
  %4425 = vmatprep.subr.mxu0 0.0
  %4426 = vmatpush1.msra.mxu0 0.0
  %4427 = vmatprep.subr.mxu0 0.0
  %4428 = vmatpush1.msra.mxu0 0.0
  %4429 = vmatprep.subr.mxu0 0.0
  %4430 = vmatpush1.msra.mxu0 0.0
  %4431 = vmatprep.subr.mxu0 0.0
  %4432 = vmatpush1.msra.mxu0 0.0
  %4433 = vmatprep.subr.mxu0 0.0
  %4434 = vmatpush1.msra.mxu0 0.0
  %4435 = vmatprep.subr.mxu0 0.0
  %4436 = vmatpush1.msra.mxu0 0.0
  %4437 = vmatprep.subr.mxu0 0.0
  %4438 = vmatpush1.msra.mxu0 0.0
  %4439 = vmatprep.subr.mxu0 0.0
  %4440 = vmatpush1.msra.mxu0 0.0
  %4441 = vmatprep.subr.mxu0 0.0
  %4442 = vmatpush1.msra.mxu0 0.0
  %4443 = vmatprep.subr.mxu0 0.0
  %4444 = vmatpush1.msra.mxu0 0.0
  %4445 = vmatprep.subr.mxu0 0.0
  %4446 = vmatpush1.msra.mxu0 0.0
  %4447 = vmatprep.subr.mxu0 0.0
  %4448 = vmatpush1.msra.mxu0 0.0
  %4449 = vmatprep.mubr.f32.mxu0 0.0
  %4450 = vmatmul.mubr.f32.gmra.mrb[0].mxu0 %v4383
  %v4451 = vpop.f32.mrb[0].mxu0
  %v4452 = vadd.f32 0.0, %v4451
  %v4453 = vpop.f32.mrb[0].mxu0
  %4454 = vdwg.mxu0
  %4455 = vrot.lane.b32.xlu0 %v343, 64
  %v4456 = vpop.permute.xlu0 %4455
  %v4459 = vsel %vm424, %v3223, 0
  %4461 = vmatprep.subr.mxu0 0.0
  %4462 = vmatpush1.msra.mxu0 %v4456
  %4463 = vmatprep.subr.mxu0 0.0
  %4464 = vmatpush1.msra.mxu0 0.0
  %4465 = vmatprep.subr.mxu0 0.0
  %4466 = vmatpush1.msra.mxu0 0.0
  %4467 = vmatprep.subr.mxu0 0.0
  %4468 = vmatpush1.msra.mxu0 0.0
  %4469 = vmatprep.subr.mxu0 0.0
  %4470 = vmatpush1.msra.mxu0 0.0
  %4471 = vmatprep.subr.mxu0 0.0
  %4472 = vmatpush1.msra.mxu0 0.0
  %4473 = vmatprep.subr.mxu0 0.0
  %4474 = vmatpush1.msra.mxu0 0.0
  %4475 = vmatprep.subr.mxu0 0.0
  %4476 = vmatpush1.msra.mxu0 0.0
  %4477 = vmatprep.subr.mxu0 0.0
  %4478 = vmatpush1.msra.mxu0 0.0
  %4479 = vmatprep.subr.mxu0 0.0
  %4480 = vmatpush1.msra.mxu0 0.0
  %4481 = vmatprep.subr.mxu0 0.0
  %4482 = vmatpush1.msra.mxu0 0.0
  %4483 = vmatprep.subr.mxu0 0.0
  %4484 = vmatpush1.msra.mxu0 0.0
  %4485 = vmatprep.subr.mxu0 0.0
  %4486 = vmatpush1.msra.mxu0 0.0
  %4487 = vmatprep.subr.mxu0 0.0
  %4488 = vmatpush1.msra.mxu0 0.0
  %4489 = vmatprep.subr.mxu0 0.0
  %4490 = vmatpush1.msra.mxu0 0.0
  %4491 = vmatprep.subr.mxu0 0.0
  %4492 = vmatpush1.msra.mxu0 0.0
  %4493 = vmatprep.subr.mxu0 0.0
  %4494 = vmatpush1.msra.mxu0 0.0
  %4495 = vmatprep.subr.mxu0 0.0
  %4496 = vmatpush1.msra.mxu0 0.0
  %4497 = vmatprep.subr.mxu0 0.0
  %4498 = vmatpush1.msra.mxu0 0.0
  %4499 = vmatprep.subr.mxu0 0.0
  %4500 = vmatpush1.msra.mxu0 0.0
  %4501 = vmatprep.subr.mxu0 0.0
  %4502 = vmatpush1.msra.mxu0 0.0
  %4503 = vmatprep.subr.mxu0 0.0
  %4504 = vmatpush1.msra.mxu0 0.0
  %4505 = vmatprep.subr.mxu0 0.0
  %4506 = vmatpush1.msra.mxu0 0.0
  %4507 = vmatprep.subr.mxu0 0.0
  %4508 = vmatpush1.msra.mxu0 0.0
  %4509 = vmatprep.subr.mxu0 0.0
  %4510 = vmatpush1.msra.mxu0 0.0
  %4511 = vmatprep.subr.mxu0 0.0
  %4512 = vmatpush1.msra.mxu0 0.0
  %4513 = vmatprep.subr.mxu0 0.0
  %4514 = vmatpush1.msra.mxu0 0.0
  %4515 = vmatprep.subr.mxu0 0.0
  %4516 = vmatpush1.msra.mxu0 0.0
  %4517 = vmatprep.subr.mxu0 0.0
  %4518 = vmatpush1.msra.mxu0 0.0
  %4519 = vmatprep.subr.mxu0 0.0
  %4520 = vmatpush1.msra.mxu0 0.0
  %4521 = vmatprep.subr.mxu0 0.0
  %4522 = vmatpush1.msra.mxu0 0.0
  %4523 = vmatprep.subr.mxu0 0.0
  %4524 = vmatpush1.msra.mxu0 0.0
  %4525 = vmatprep.mubr.f32.mxu0 0.0
  %4526 = vmatmul.mubr.f32.gmra.mrb[0].mxu0 %v4459
  %v4527 = vpop.f32.mrb[0].mxu0
  %v4528 = vadd.f32 0.0, %v4527
  %v4529 = vpop.f32.mrb[0].mxu0
  %4530 = vdwg.mxu0
  %4531 = vrot.lane.b32.xlu0 %v345, 64
  %v4532 = vpop.permute.xlu0 %4531
  %v4535 = vsel %vm424, %v3224, 0
  %4537 = vmatprep.subr.mxu0 0.0
  %4538 = vmatpush1.msra.mxu0 %v4532
  %4539 = vmatprep.subr.mxu0 0.0
  %4540 = vmatpush1.msra.mxu0 0.0
  %4541 = vmatprep.subr.mxu0 0.0
  %4542 = vmatpush1.msra.mxu0 0.0
  %4543 = vmatprep.subr.mxu0 0.0
  %4544 = vmatpush1.msra.mxu0 0.0
  %4545 = vmatprep.subr.mxu0 0.0
  %4546 = vmatpush1.msra.mxu0 0.0
  %4547 = vmatprep.subr.mxu0 0.0
  %4548 = vmatpush1.msra.mxu0 0.0
  %4549 = vmatprep.subr.mxu0 0.0
  %4550 = vmatpush1.msra.mxu0 0.0
  %4551 = vmatprep.subr.mxu0 0.0
  %4552 = vmatpush1.msra.mxu0 0.0
  %4553 = vmatprep.subr.mxu0 0.0
  %4554 = vmatpush1.msra.mxu0 0.0
  %4555 = vmatprep.subr.mxu0 0.0
  %4556 = vmatpush1.msra.mxu0 0.0
  %4557 = vmatprep.subr.mxu0 0.0
  %4558 = vmatpush1.msra.mxu0 0.0
  %4559 = vmatprep.subr.mxu0 0.0
  %4560 = vmatpush1.msra.mxu0 0.0
  %4561 = vmatprep.subr.mxu0 0.0
  %4562 = vmatpush1.msra.mxu0 0.0
  %4563 = vmatprep.subr.mxu0 0.0
  %4564 = vmatpush1.msra.mxu0 0.0
  %4565 = vmatprep.subr.mxu0 0.0
  %4566 = vmatpush1.msra.mxu0 0.0
  %4567 = vmatprep.subr.mxu0 0.0
  %4568 = vmatpush1.msra.mxu0 0.0
  %4569 = vmatprep.subr.mxu0 0.0
  %4570 = vmatpush1.msra.mxu0 0.0
  %4571 = vmatprep.subr.mxu0 0.0
  %4572 = vmatpush1.msra.mxu0 0.0
  %4573 = vmatprep.subr.mxu0 0.0
  %4574 = vmatpush1.msra.mxu0 0.0
  %4575 = vmatprep.subr.mxu0 0.0
  %4576 = vmatpush1.msra.mxu0 0.0
  %4577 = vmatprep.subr.mxu0 0.0
  %4578 = vmatpush1.msra.mxu0 0.0
  %4579 = vmatprep.subr.mxu0 0.0
  %4580 = vmatpush1.msra.mxu0 0.0
  %4581 = vmatprep.subr.mxu0 0.0
  %4582 = vmatpush1.msra.mxu0 0.0
  %4583 = vmatprep.subr.mxu0 0.0
  %4584 = vmatpush1.msra.mxu0 0.0
  %4585 = vmatprep.subr.mxu0 0.0
  %4586 = vmatpush1.msra.mxu0 0.0
  %4587 = vmatprep.subr.mxu0 0.0
  %4588 = vmatpush1.msra.mxu0 0.0
  %4589 = vmatprep.subr.mxu0 0.0
  %4590 = vmatpush1.msra.mxu0 0.0
  %4591 = vmatprep.subr.mxu0 0.0
  %4592 = vmatpush1.msra.mxu0 0.0
  %4593 = vmatprep.subr.mxu0 0.0
  %4594 = vmatpush1.msra.mxu0 0.0
  %4595 = vmatprep.subr.mxu0 0.0
  %4596 = vmatpush1.msra.mxu0 0.0
  %4597 = vmatprep.subr.mxu0 0.0
  %4598 = vmatpush1.msra.mxu0 0.0
  %4599 = vmatprep.subr.mxu0 0.0
  %4600 = vmatpush1.msra.mxu0 0.0
  %4601 = vmatprep.mubr.f32.mxu0 0.0
  %4602 = vmatmul.mubr.f32.gmra.mrb[0].mxu0 %v4535
  %v4603 = vpop.f32.mrb[0].mxu0
  %v4604 = vadd.f32 0.0, %v4603
  %v4605 = vpop.f32.mrb[0].mxu0
  %4606 = vdwg.mxu0
  %4607 = vrot.lane.b32.xlu0 %v347, 64
  %v4608 = vpop.permute.xlu0 %4607
  %v4611 = vsel %vm424, %v3225, 0
  %4613 = vmatprep.subr.mxu0 0.0
  %4614 = vmatpush1.msra.mxu0 %v4608
  %4615 = vmatprep.subr.mxu0 0.0
  %4616 = vmatpush1.msra.mxu0 0.0
  %4617 = vmatprep.subr.mxu0 0.0
  %4618 = vmatpush1.msra.mxu0 0.0
  %4619 = vmatprep.subr.mxu0 0.0
  %4620 = vmatpush1.msra.mxu0 0.0
  %4621 = vmatprep.subr.mxu0 0.0
  %4622 = vmatpush1.msra.mxu0 0.0
  %4623 = vmatprep.subr.mxu0 0.0
  %4624 = vmatpush1.msra.mxu0 0.0
  %4625 = vmatprep.subr.mxu0 0.0
  %4626 = vmatpush1.msra.mxu0 0.0
  %4627 = vmatprep.subr.mxu0 0.0
  %4628 = vmatpush1.msra.mxu0 0.0
  %4629 = vmatprep.subr.mxu0 0.0
  %4630 = vmatpush1.msra.mxu0 0.0
  %4631 = vmatprep.subr.mxu0 0.0
  %4632 = vmatpush1.msra.mxu0 0.0
  %4633 = vmatprep.subr.mxu0 0.0
  %4634 = vmatpush1.msra.mxu0 0.0
  %4635 = vmatprep.subr.mxu0 0.0
  %4636 = vmatpush1.msra.mxu0 0.0
  %4637 = vmatprep.subr.mxu0 0.0
  %4638 = vmatpush1.msra.mxu0 0.0
  %4639 = vmatprep.subr.mxu0 0.0
  %4640 = vmatpush1.msra.mxu0 0.0
  %4641 = vmatprep.subr.mxu0 0.0
  %4642 = vmatpush1.msra.mxu0 0.0
  %4643 = vmatprep.subr.mxu0 0.0
  %4644 = vmatpush1.msra.mxu0 0.0
  %4645 = vmatprep.subr.mxu0 0.0
  %4646 = vmatpush1.msra.mxu0 0.0
  %4647 = vmatprep.subr.mxu0 0.0
  %4648 = vmatpush1.msra.mxu0 0.0
  %4649 = vmatprep.subr.mxu0 0.0
  %4650 = vmatpush1.msra.mxu0 0.0
  %4651 = vmatprep.subr.mxu0 0.0
  %4652 = vmatpush1.msra.mxu0 0.0
  %4653 = vmatprep.subr.mxu0 0.0
  %4654 = vmatpush1.msra.mxu0 0.0
  %4655 = vmatprep.subr.mxu0 0.0
  %4656 = vmatpush1.msra.mxu0 0.0
  %4657 = vmatprep.subr.mxu0 0.0
  %4658 = vmatpush1.msra.mxu0 0.0
  %4659 = vmatprep.subr.mxu0 0.0
  %4660 = vmatpush1.msra.mxu0 0.0
  %4661 = vmatprep.subr.mxu0 0.0
  %4662 = vmatpush1.msra.mxu0 0.0
  %4663 = vmatprep.subr.mxu0 0.0
  %4664 = vmatpush1.msra.mxu0 0.0
  %4665 = vmatprep.subr.mxu0 0.0
  %4666 = vmatpush1.msra.mxu0 0.0
  %4667 = vmatprep.subr.mxu0 0.0
  %4668 = vmatpush1.msra.mxu0 0.0
  %4669 = vmatprep.subr.mxu0 0.0
  %4670 = vmatpush1.msra.mxu0 0.0
  %4671 = vmatprep.subr.mxu0 0.0
  %4672 = vmatpush1.msra.mxu0 0.0
  %4673 = vmatprep.subr.mxu0 0.0
  %4674 = vmatpush1.msra.mxu0 0.0
  %4675 = vmatprep.subr.mxu0 0.0
  %4676 = vmatpush1.msra.mxu0 0.0
  %4677 = vmatprep.mubr.f32.mxu0 0.0
  %4678 = vmatmul.mubr.f32.gmra.mrb[0].mxu0 %v4611
  %v4679 = vpop.f32.mrb[0].mxu0
  %v4680 = vadd.f32 0.0, %v4679
  %v4681 = vpop.f32.mrb[0].mxu0
  %4682 = vdwg.mxu0
  %4683 = vrot.lane.b32.xlu0 %v349, 64
  %v4684 = vpop.permute.xlu0 %4683
  %v4687 = vsel %vm424, %v3226, 0
  %4689 = vmatprep.subr.mxu0 0.0
  %4690 = vmatpush1.msra.mxu0 %v4684
  %4691 = vmatprep.subr.mxu0 0.0
  %4692 = vmatpush1.msra.mxu0 0.0
  %4693 = vmatprep.subr.mxu0 0.0
  %4694 = vmatpush1.msra.mxu0 0.0
  %4695 = vmatprep.subr.mxu0 0.0
  %4696 = vmatpush1.msra.mxu0 0.0
  %4697 = vmatprep.subr.mxu0 0.0
  %4698 = vmatpush1.msra.mxu0 0.0
  %4699 = vmatprep.subr.mxu0 0.0
  %4700 = vmatpush1.msra.mxu0 0.0
  %4701 = vmatprep.subr.mxu0 0.0
  %4702 = vmatpush1.msra.mxu0 0.0
  %4703 = vmatprep.subr.mxu0 0.0
  %4704 = vmatpush1.msra.mxu0 0.0
  %4705 = vmatprep.subr.mxu0 0.0
  %4706 = vmatpush1.msra.mxu0 0.0
  %4707 = vmatprep.subr.mxu0 0.0
  %4708 = vmatpush1.msra.mxu0 0.0
  %4709 = vmatprep.subr.mxu0 0.0
  %4710 = vmatpush1.msra.mxu0 0.0
  %4711 = vmatprep.subr.mxu0 0.0
  %4712 = vmatpush1.msra.mxu0 0.0
  %4713 = vmatprep.subr.mxu0 0.0
  %4714 = vmatpush1.msra.mxu0 0.0
  %4715 = vmatprep.subr.mxu0 0.0
  %4716 = vmatpush1.msra.mxu0 0.0
  %4717 = vmatprep.subr.mxu0 0.0
  %4718 = vmatpush1.msra.mxu0 0.0
  %4719 = vmatprep.subr.mxu0 0.0
  %4720 = vmatpush1.msra.mxu0 0.0
  %4721 = vmatprep.subr.mxu0 0.0
  %4722 = vmatpush1.msra.mxu0 0.0
  %4723 = vmatprep.subr.mxu0 0.0
  %4724 = vmatpush1.msra.mxu0 0.0
  %4725 = vmatprep.subr.mxu0 0.0
  %4726 = vmatpush1.msra.mxu0 0.0
  %4727 = vmatprep.subr.mxu0 0.0
  %4728 = vmatpush1.msra.mxu0 0.0
  %4729 = vmatprep.subr.mxu0 0.0
  %4730 = vmatpush1.msra.mxu0 0.0
  %4731 = vmatprep.subr.mxu0 0.0
  %4732 = vmatpush1.msra.mxu0 0.0
  %4733 = vmatprep.subr.mxu0 0.0
  %4734 = vmatpush1.msra.mxu0 0.0
  %4735 = vmatprep.subr.mxu0 0.0
  %4736 = vmatpush1.msra.mxu0 0.0
  %4737 = vmatprep.subr.mxu0 0.0
  %4738 = vmatpush1.msra.mxu0 0.0
  %4739 = vmatprep.subr.mxu0 0.0
  %4740 = vmatpush1.msra.mxu0 0.0
  %4741 = vmatprep.subr.mxu0 0.0
  %4742 = vmatpush1.msra.mxu0 0.0
  %4743 = vmatprep.subr.mxu0 0.0
  %4744 = vmatpush1.msra.mxu0 0.0
  %4745 = vmatprep.subr.mxu0 0.0
  %4746 = vmatpush1.msra.mxu0 0.0
  %4747 = vmatprep.subr.mxu0 0.0
  %4748 = vmatpush1.msra.mxu0 0.0
  %4749 = vmatprep.subr.mxu0 0.0
  %4750 = vmatpush1.msra.mxu0 0.0
  %4751 = vmatprep.subr.mxu0 0.0
  %4752 = vmatpush1.msra.mxu0 0.0
  %4753 = vmatprep.mubr.f32.mxu0 0.0
  %4754 = vmatmul.mubr.f32.gmra.mrb[0].mxu0 %v4687
  %v4755 = vpop.f32.mrb[0].mxu0
  %v4756 = vadd.f32 0.0, %v4755
  %v4757 = vpop.f32.mrb[0].mxu0
  %4758 = vdwg.mxu0
  %4759 = vrot.lane.b32.xlu0 %v351, 64
  %v4760 = vpop.permute.xlu0 %4759
  %v4763 = vsel %vm424, %v3227, 0
  %4765 = vmatprep.subr.mxu0 0.0
  %4766 = vmatpush1.msra.mxu0 %v4760
  %4767 = vmatprep.subr.mxu0 0.0
  %4768 = vmatpush1.msra.mxu0 0.0
  %4769 = vmatprep.subr.mxu0 0.0
  %4770 = vmatpush1.msra.mxu0 0.0
  %4771 = vmatprep.subr.mxu0 0.0
  %4772 = vmatpush1.msra.mxu0 0.0
  %4773 = vmatprep.subr.mxu0 0.0
  %4774 = vmatpush1.msra.mxu0 0.0
  %4775 = vmatprep.subr.mxu0 0.0
  %4776 = vmatpush1.msra.mxu0 0.0
  %4777 = vmatprep.subr.mxu0 0.0
  %4778 = vmatpush1.msra.mxu0 0.0
  %4779 = vmatprep.subr.mxu0 0.0
  %4780 = vmatpush1.msra.mxu0 0.0
  %4781 = vmatprep.subr.mxu0 0.0
  %4782 = vmatpush1.msra.mxu0 0.0
  %4783 = vmatprep.subr.mxu0 0.0
  %4784 = vmatpush1.msra.mxu0 0.0
  %4785 = vmatprep.subr.mxu0 0.0
  %4786 = vmatpush1.msra.mxu0 0.0
  %4787 = vmatprep.subr.mxu0 0.0
  %4788 = vmatpush1.msra.mxu0 0.0
  %4789 = vmatprep.subr.mxu0 0.0
  %4790 = vmatpush1.msra.mxu0 0.0
  %4791 = vmatprep.subr.mxu0 0.0
  %4792 = vmatpush1.msra.mxu0 0.0
  %4793 = vmatprep.subr.mxu0 0.0
  %4794 = vmatpush1.msra.mxu0 0.0
  %4795 = vmatprep.subr.mxu0 0.0
  %4796 = vmatpush1.msra.mxu0 0.0
  %4797 = vmatprep.subr.mxu0 0.0
  %4798 = vmatpush1.msra.mxu0 0.0
  %4799 = vmatprep.subr.mxu0 0.0
  %4800 = vmatpush1.msra.mxu0 0.0
  %4801 = vmatprep.subr.mxu0 0.0
  %4802 = vmatpush1.msra.mxu0 0.0
  %4803 = vmatprep.subr.mxu0 0.0
  %4804 = vmatpush1.msra.mxu0 0.0
  %4805 = vmatprep.subr.mxu0 0.0
  %4806 = vmatpush1.msra.mxu0 0.0
  %4807 = vmatprep.subr.mxu0 0.0
  %4808 = vmatpush1.msra.mxu0 0.0
  %4809 = vmatprep.subr.mxu0 0.0
  %4810 = vmatpush1.msra.mxu0 0.0
  %4811 = vmatprep.subr.mxu0 0.0
  %4812 = vmatpush1.msra.mxu0 0.0
  %4813 = vmatprep.subr.mxu0 0.0
  %4814 = vmatpush1.msra.mxu0 0.0
  %4815 = vmatprep.subr.mxu0 0.0
  %4816 = vmatpush1.msra.mxu0 0.0
  %4817 = vmatprep.subr.mxu0 0.0
  %4818 = vmatpush1.msra.mxu0 0.0
  %4819 = vmatprep.subr.mxu0 0.0
  %4820 = vmatpush1.msra.mxu0 0.0
  %4821 = vmatprep.subr.mxu0 0.0
  %4822 = vmatpush1.msra.mxu0 0.0
  %4823 = vmatprep.subr.mxu0 0.0
  %4824 = vmatpush1.msra.mxu0 0.0
  %4825 = vmatprep.subr.mxu0 0.0
  %4826 = vmatpush1.msra.mxu0 0.0
  %4827 = vmatprep.subr.mxu0 0.0
  %4828 = vmatpush1.msra.mxu0 0.0
  %4829 = vmatprep.mubr.f32.mxu0 0.0
  %4830 = vmatmul.mubr.f32.gmra.mrb[0].mxu0 %v4763
  %v4831 = vpop.f32.mrb[0].mxu0
  %v4832 = vadd.f32 0.0, %v4831
  %v4833 = vpop.f32.mrb[0].mxu0
  %4834 = vdwg.mxu0
  %4835 = vrot.lane.b32.xlu0 %v353, 64
  %v4836 = vpop.permute.xlu0 %4835
  %v4839 = vsel %vm424, %v3228, 0
  %4841 = vmatprep.subr.mxu0 0.0
  %4842 = vmatpush1.msra.mxu0 %v4836
  %4843 = vmatprep.subr.mxu0 0.0
  %4844 = vmatpush1.msra.mxu0 0.0
  %4845 = vmatprep.subr.mxu0 0.0
  %4846 = vmatpush1.msra.mxu0 0.0
  %4847 = vmatprep.subr.mxu0 0.0
  %4848 = vmatpush1.msra.mxu0 0.0
  %4849 = vmatprep.subr.mxu0 0.0
  %4850 = vmatpush1.msra.mxu0 0.0
  %4851 = vmatprep.subr.mxu0 0.0
  %4852 = vmatpush1.msra.mxu0 0.0
  %4853 = vmatprep.subr.mxu0 0.0
  %4854 = vmatpush1.msra.mxu0 0.0
  %4855 = vmatprep.subr.mxu0 0.0
  %4856 = vmatpush1.msra.mxu0 0.0
  %4857 = vmatprep.subr.mxu0 0.0
  %4858 = vmatpush1.msra.mxu0 0.0
  %4859 = vmatprep.subr.mxu0 0.0
  %4860 = vmatpush1.msra.mxu0 0.0
  %4861 = vmatprep.subr.mxu0 0.0
  %4862 = vmatpush1.msra.mxu0 0.0
  %4863 = vmatprep.subr.mxu0 0.0
  %4864 = vmatpush1.msra.mxu0 0.0
  %4865 = vmatprep.subr.mxu0 0.0
  %4866 = vmatpush1.msra.mxu0 0.0
  %4867 = vmatprep.subr.mxu0 0.0
  %4868 = vmatpush1.msra.mxu0 0.0
  %4869 = vmatprep.subr.mxu0 0.0
  %4870 = vmatpush1.msra.mxu0 0.0
  %4871 = vmatprep.subr.mxu0 0.0
  %4872 = vmatpush1.msra.mxu0 0.0
  %4873 = vmatprep.subr.mxu0 0.0
  %4874 = vmatpush1.msra.mxu0 0.0
  %4875 = vmatprep.subr.mxu0 0.0
  %4876 = vmatpush1.msra.mxu0 0.0
  %4877 = vmatprep.subr.mxu0 0.0
  %4878 = vmatpush1.msra.mxu0 0.0
  %4879 = vmatprep.subr.mxu0 0.0
  %4880 = vmatpush1.msra.mxu0 0.0
  %4881 = vmatprep.subr.mxu0 0.0
  %4882 = vmatpush1.msra.mxu0 0.0
  %4883 = vmatprep.subr.mxu0 0.0
  %4884 = vmatpush1.msra.mxu0 0.0
  %4885 = vmatprep.subr.mxu0 0.0
  %4886 = vmatpush1.msra.mxu0 0.0
  %4887 = vmatprep.subr.mxu0 0.0
  %4888 = vmatpush1.msra.mxu0 0.0
  %4889 = vmatprep.subr.mxu0 0.0
  %4890 = vmatpush1.msra.mxu0 0.0
  %4891 = vmatprep.subr.mxu0 0.0
  %4892 = vmatpush1.msra.mxu0 0.0
  %4893 = vmatprep.subr.mxu0 0.0
  %4894 = vmatpush1.msra.mxu0 0.0
  %4895 = vmatprep.subr.mxu0 0.0
  %4896 = vmatpush1.msra.mxu0 0.0
  %4897 = vmatprep.subr.mxu0 0.0
  %4898 = vmatpush1.msra.mxu0 0.0
  %4899 = vmatprep.subr.mxu0 0.0
  %4900 = vmatpush1.msra.mxu0 0.0
  %4901 = vmatprep.subr.mxu0 0.0
  %4902 = vmatpush1.msra.mxu0 0.0
  %4903 = vmatprep.subr.mxu0 0.0
  %4904 = vmatpush1.msra.mxu0 0.0
  %4905 = vmatprep.mubr.f32.mxu0 0.0
  %4906 = vmatmul.mubr.f32.gmra.mrb[0].mxu0 %v4839
  %v4907 = vpop.f32.mrb[0].mxu0
  %v4908 = vadd.f32 0.0, %v4907
  %v4909 = vpop.f32.mrb[0].mxu0
  %4910 = vdwg.mxu0
  %4911 = vrot.lane.b32.xlu0 %v355, 64
  %v4912 = vpop.permute.xlu0 %4911
  %v4915 = vsel %vm424, %v3229, 0
  %4917 = vmatprep.subr.mxu0 0.0
  %4918 = vmatpush1.msra.mxu0 %v4912
  %4919 = vmatprep.subr.mxu0 0.0
  %4920 = vmatpush1.msra.mxu0 0.0
  %4921 = vmatprep.subr.mxu0 0.0
  %4922 = vmatpush1.msra.mxu0 0.0
  %4923 = vmatprep.subr.mxu0 0.0
  %4924 = vmatpush1.msra.mxu0 0.0
  %4925 = vmatprep.subr.mxu0 0.0
  %4926 = vmatpush1.msra.mxu0 0.0
  %4927 = vmatprep.subr.mxu0 0.0
  %4928 = vmatpush1.msra.mxu0 0.0
  %4929 = vmatprep.subr.mxu0 0.0
  %4930 = vmatpush1.msra.mxu0 0.0
  %4931 = vmatprep.subr.mxu0 0.0
  %4932 = vmatpush1.msra.mxu0 0.0
  %4933 = vmatprep.subr.mxu0 0.0
  %4934 = vmatpush1.msra.mxu0 0.0
  %4935 = vmatprep.subr.mxu0 0.0
  %4936 = vmatpush1.msra.mxu0 0.0
  %4937 = vmatprep.subr.mxu0 0.0
  %4938 = vmatpush1.msra.mxu0 0.0
  %4939 = vmatprep.subr.mxu0 0.0
  %4940 = vmatpush1.msra.mxu0 0.0
  %4941 = vmatprep.subr.mxu0 0.0
  %4942 = vmatpush1.msra.mxu0 0.0
  %4943 = vmatprep.subr.mxu0 0.0
  %4944 = vmatpush1.msra.mxu0 0.0
  %4945 = vmatprep.subr.mxu0 0.0
  %4946 = vmatpush1.msra.mxu0 0.0
  %4947 = vmatprep.subr.mxu0 0.0
  %4948 = vmatpush1.msra.mxu0 0.0
  %4949 = vmatprep.subr.mxu0 0.0
  %4950 = vmatpush1.msra.mxu0 0.0
  %4951 = vmatprep.subr.mxu0 0.0
  %4952 = vmatpush1.msra.mxu0 0.0
  %4953 = vmatprep.subr.mxu0 0.0
  %4954 = vmatpush1.msra.mxu0 0.0
  %4955 = vmatprep.subr.mxu0 0.0
  %4956 = vmatpush1.msra.mxu0 0.0
  %4957 = vmatprep.subr.mxu0 0.0
  %4958 = vmatpush1.msra.mxu0 0.0
  %4959 = vmatprep.subr.mxu0 0.0
  %4960 = vmatpush1.msra.mxu0 0.0
  %4961 = vmatprep.subr.mxu0 0.0
  %4962 = vmatpush1.msra.mxu0 0.0
  %4963 = vmatprep.subr.mxu0 0.0
  %4964 = vmatpush1.msra.mxu0 0.0
  %4965 = vmatprep.subr.mxu0 0.0
  %4966 = vmatpush1.msra.mxu0 0.0
  %4967 = vmatprep.subr.mxu0 0.0
  %4968 = vmatpush1.msra.mxu0 0.0
  %4969 = vmatprep.subr.mxu0 0.0
  %4970 = vmatpush1.msra.mxu0 0.0
  %4971 = vmatprep.subr.mxu0 0.0
  %4972 = vmatpush1.msra.mxu0 0.0
  %4973 = vmatprep.subr.mxu0 0.0
  %4974 = vmatpush1.msra.mxu0 0.0
  %4975 = vmatprep.subr.mxu0 0.0
  %4976 = vmatpush1.msra.mxu0 0.0
  %4977 = vmatprep.subr.mxu0 0.0
  %4978 = vmatpush1.msra.mxu0 0.0
  %4979 = vmatprep.subr.mxu0 0.0
  %4980 = vmatpush1.msra.mxu0 0.0
  %4981 = vmatprep.mubr.f32.mxu0 0.0
  %4982 = vmatmul.mubr.f32.gmra.mrb[0].mxu0 %v4915
  %v4983 = vpop.f32.mrb[0].mxu0
  %v4984 = vadd.f32 0.0, %v4983
  %v4985 = vpop.f32.mrb[0].mxu0
  %4986 = vdwg.mxu0
  %4987 = vrot.lane.b32.xlu0 %v357, 64
  %v4988 = vpop.permute.xlu0 %4987
  %v4991 = vsel %vm424, %v3230, 0
  %4993 = vmatprep.subr.mxu0 0.0
  %4994 = vmatpush1.msra.mxu0 %v4988
  %4995 = vmatprep.subr.mxu0 0.0
  %4996 = vmatpush1.msra.mxu0 0.0
  %4997 = vmatprep.subr.mxu0 0.0
  %4998 = vmatpush1.msra.mxu0 0.0
  %4999 = vmatprep.subr.mxu0 0.0
  %5000 = vmatpush1.msra.mxu0 0.0
  %5001 = vmatprep.subr.mxu0 0.0
  %5002 = vmatpush1.msra.mxu0 0.0
  %5003 = vmatprep.subr.mxu0 0.0
  %5004 = vmatpush1.msra.mxu0 0.0
  %5005 = vmatprep.subr.mxu0 0.0
  %5006 = vmatpush1.msra.mxu0 0.0
  %5007 = vmatprep.subr.mxu0 0.0
  %5008 = vmatpush1.msra.mxu0 0.0
  %5009 = vmatprep.subr.mxu0 0.0
  %5010 = vmatpush1.msra.mxu0 0.0
  %5011 = vmatprep.subr.mxu0 0.0
  %5012 = vmatpush1.msra.mxu0 0.0
  %5013 = vmatprep.subr.mxu0 0.0
  %5014 = vmatpush1.msra.mxu0 0.0
  %5015 = vmatprep.subr.mxu0 0.0
  %5016 = vmatpush1.msra.mxu0 0.0
  %5017 = vmatprep.subr.mxu0 0.0
  %5018 = vmatpush1.msra.mxu0 0.0
  %5019 = vmatprep.subr.mxu0 0.0
  %5020 = vmatpush1.msra.mxu0 0.0
  %5021 = vmatprep.subr.mxu0 0.0
  %5022 = vmatpush1.msra.mxu0 0.0
  %5023 = vmatprep.subr.mxu0 0.0
  %5024 = vmatpush1.msra.mxu0 0.0
  %5025 = vmatprep.subr.mxu0 0.0
  %5026 = vmatpush1.msra.mxu0 0.0
  %5027 = vmatprep.subr.mxu0 0.0
  %5028 = vmatpush1.msra.mxu0 0.0
  %5029 = vmatprep.subr.mxu0 0.0
  %5030 = vmatpush1.msra.mxu0 0.0
  %5031 = vmatprep.subr.mxu0 0.0
  %5032 = vmatpush1.msra.mxu0 0.0
  %5033 = vmatprep.subr.mxu0 0.0
  %5034 = vmatpush1.msra.mxu0 0.0
  %5035 = vmatprep.subr.mxu0 0.0
  %5036 = vmatpush1.msra.mxu0 0.0
  %5037 = vmatprep.subr.mxu0 0.0
  %5038 = vmatpush1.msra.mxu0 0.0
  %5039 = vmatprep.subr.mxu0 0.0
  %5040 = vmatpush1.msra.mxu0 0.0
  %5041 = vmatprep.subr.mxu0 0.0
  %5042 = vmatpush1.msra.mxu0 0.0
  %5043 = vmatprep.subr.mxu0 0.0
  %5044 = vmatpush1.msra.mxu0 0.0
  %5045 = vmatprep.subr.mxu0 0.0
  %5046 = vmatpush1.msra.mxu0 0.0
  %5047 = vmatprep.subr.mxu0 0.0
  %5048 = vmatpush1.msra.mxu0 0.0
  %5049 = vmatprep.subr.mxu0 0.0
  %5050 = vmatpush1.msra.mxu0 0.0
  %5051 = vmatprep.subr.mxu0 0.0
  %5052 = vmatpush1.msra.mxu0 0.0
  %5053 = vmatprep.subr.mxu0 0.0
  %5054 = vmatpush1.msra.mxu0 0.0
  %5055 = vmatprep.subr.mxu0 0.0
  %5056 = vmatpush1.msra.mxu0 0.0
  %5057 = vmatprep.mubr.f32.mxu0 0.0
  %5058 = vmatmul.mubr.f32.gmra.mrb[0].mxu0 %v4991
  %v5059 = vpop.f32.mrb[0].mxu0
  %v5060 = vadd.f32 0.0, %v5059
  %v5061 = vpop.f32.mrb[0].mxu0
  %5062 = vdwg.mxu0
  %5063 = vrot.lane.b32.xlu0 %v367, 64
  %v5064 = vpop.permute.xlu0 %5063
  %v5067 = vsel %vm424, %v3231, 0
  %5069 = vmatprep.subr.mxu0 0.0
  %5070 = vmatpush1.msra.mxu0 %v5064
  %5071 = vmatprep.subr.mxu0 0.0
  %5072 = vmatpush1.msra.mxu0 0.0
  %5073 = vmatprep.subr.mxu0 0.0
  %5074 = vmatpush1.msra.mxu0 0.0
  %5075 = vmatprep.subr.mxu0 0.0
  %5076 = vmatpush1.msra.mxu0 0.0
  %5077 = vmatprep.subr.mxu0 0.0
  %5078 = vmatpush1.msra.mxu0 0.0
  %5079 = vmatprep.subr.mxu0 0.0
  %5080 = vmatpush1.msra.mxu0 0.0
  %5081 = vmatprep.subr.mxu0 0.0
  %5082 = vmatpush1.msra.mxu0 0.0
  %5083 = vmatprep.subr.mxu0 0.0
  %5084 = vmatpush1.msra.mxu0 0.0
  %5085 = vmatprep.subr.mxu0 0.0
  %5086 = vmatpush1.msra.mxu0 0.0
  %5087 = vmatprep.subr.mxu0 0.0
  %5088 = vmatpush1.msra.mxu0 0.0
  %5089 = vmatprep.subr.mxu0 0.0
  %5090 = vmatpush1.msra.mxu0 0.0
  %5091 = vmatprep.subr.mxu0 0.0
  %5092 = vmatpush1.msra.mxu0 0.0
  %5093 = vmatprep.subr.mxu0 0.0
  %5094 = vmatpush1.msra.mxu0 0.0
  %5095 = vmatprep.subr.mxu0 0.0
  %5096 = vmatpush1.msra.mxu0 0.0
  %5097 = vmatprep.subr.mxu0 0.0
  %5098 = vmatpush1.msra.mxu0 0.0
  %5099 = vmatprep.subr.mxu0 0.0
  %5100 = vmatpush1.msra.mxu0 0.0
  %5101 = vmatprep.subr.mxu0 0.0
  %5102 = vmatpush1.msra.mxu0 0.0
  %5103 = vmatprep.subr.mxu0 0.0
  %5104 = vmatpush1.msra.mxu0 0.0
  %5105 = vmatprep.subr.mxu0 0.0
  %5106 = vmatpush1.msra.mxu0 0.0
  %5107 = vmatprep.subr.mxu0 0.0
  %5108 = vmatpush1.msra.mxu0 0.0
  %5109 = vmatprep.subr.mxu0 0.0
  %5110 = vmatpush1.msra.mxu0 0.0
  %5111 = vmatprep.subr.mxu0 0.0
  %5112 = vmatpush1.msra.mxu0 0.0
  %5113 = vmatprep.subr.mxu0 0.0
  %5114 = vmatpush1.msra.mxu0 0.0
  %5115 = vmatprep.subr.mxu0 0.0
  %5116 = vmatpush1.msra.mxu0 0.0
  %5117 = vmatprep.subr.mxu0 0.0
  %5118 = vmatpush1.msra.mxu0 0.0
  %5119 = vmatprep.subr.mxu0 0.0
  %5120 = vmatpush1.msra.mxu0 0.0
  %5121 = vmatprep.subr.mxu0 0.0
  %5122 = vmatpush1.msra.mxu0 0.0
  %5123 = vmatprep.subr.mxu0 0.0
  %5124 = vmatpush1.msra.mxu0 0.0
  %5125 = vmatprep.subr.mxu0 0.0
  %5126 = vmatpush1.msra.mxu0 0.0
  %5127 = vmatprep.subr.mxu0 0.0
  %5128 = vmatpush1.msra.mxu0 0.0
  %5129 = vmatprep.subr.mxu0 0.0
  %5130 = vmatpush1.msra.mxu0 0.0
  %5131 = vmatprep.subr.mxu0 0.0
  %5132 = vmatpush1.msra.mxu0 0.0
  %5133 = vmatprep.mubr.f32.mxu0 0.0
  %5134 = vmatmul.mubr.f32.gmra.mrb[0].mxu0 %v5067
  %v5135 = vpop.f32.mrb[0].mxu0
  %v5136 = vadd.f32 0.0, %v5135
  %v5137 = vpop.f32.mrb[0].mxu0
  %5138 = vdwg.mxu0
  %5139 = vrot.lane.b32.xlu0 %v369, 64
  %v5140 = vpop.permute.xlu0 %5139
  %v5143 = vsel %vm424, %v3232, 0
  %5145 = vmatprep.subr.mxu0 0.0
  %5146 = vmatpush1.msra.mxu0 %v5140
  %5147 = vmatprep.subr.mxu0 0.0
  %5148 = vmatpush1.msra.mxu0 0.0
  %5149 = vmatprep.subr.mxu0 0.0
  %5150 = vmatpush1.msra.mxu0 0.0
  %5151 = vmatprep.subr.mxu0 0.0
  %5152 = vmatpush1.msra.mxu0 0.0
  %5153 = vmatprep.subr.mxu0 0.0
  %5154 = vmatpush1.msra.mxu0 0.0
  %5155 = vmatprep.subr.mxu0 0.0
  %5156 = vmatpush1.msra.mxu0 0.0
  %5157 = vmatprep.subr.mxu0 0.0
  %5158 = vmatpush1.msra.mxu0 0.0
  %5159 = vmatprep.subr.mxu0 0.0
  %5160 = vmatpush1.msra.mxu0 0.0
  %5161 = vmatprep.subr.mxu0 0.0
  %5162 = vmatpush1.msra.mxu0 0.0
  %5163 = vmatprep.subr.mxu0 0.0
  %5164 = vmatpush1.msra.mxu0 0.0
  %5165 = vmatprep.subr.mxu0 0.0
  %5166 = vmatpush1.msra.mxu0 0.0
  %5167 = vmatprep.subr.mxu0 0.0
  %5168 = vmatpush1.msra.mxu0 0.0
  %5169 = vmatprep.subr.mxu0 0.0
  %5170 = vmatpush1.msra.mxu0 0.0
  %5171 = vmatprep.subr.mxu0 0.0
  %5172 = vmatpush1.msra.mxu0 0.0
  %5173 = vmatprep.subr.mxu0 0.0
  %5174 = vmatpush1.msra.mxu0 0.0
  %5175 = vmatprep.subr.mxu0 0.0
  %5176 = vmatpush1.msra.mxu0 0.0
  %5177 = vmatprep.subr.mxu0 0.0
  %5178 = vmatpush1.msra.mxu0 0.0
  %5179 = vmatprep.subr.mxu0 0.0
  %5180 = vmatpush1.msra.mxu0 0.0
  %5181 = vmatprep.subr.mxu0 0.0
  %5182 = vmatpush1.msra.mxu0 0.0
  %5183 = vmatprep.subr.mxu0 0.0
  %5184 = vmatpush1.msra.mxu0 0.0
  %5185 = vmatprep.subr.mxu0 0.0
  %5186 = vmatpush1.msra.mxu0 0.0
  %5187 = vmatprep.subr.mxu0 0.0
  %5188 = vmatpush1.msra.mxu0 0.0
  %5189 = vmatprep.subr.mxu0 0.0
  %5190 = vmatpush1.msra.mxu0 0.0
  %5191 = vmatprep.subr.mxu0 0.0
  %5192 = vmatpush1.msra.mxu0 0.0
  %5193 = vmatprep.subr.mxu0 0.0
  %5194 = vmatpush1.msra.mxu0 0.0
  %5195 = vmatprep.subr.mxu0 0.0
  %5196 = vmatpush1.msra.mxu0 0.0
  %5197 = vmatprep.subr.mxu0 0.0
  %5198 = vmatpush1.msra.mxu0 0.0
  %5199 = vmatprep.subr.mxu0 0.0
  %5200 = vmatpush1.msra.mxu0 0.0
  %5201 = vmatprep.subr.mxu0 0.0
  %5202 = vmatpush1.msra.mxu0 0.0
  %5203 = vmatprep.subr.mxu0 0.0
  %5204 = vmatpush1.msra.mxu0 0.0
  %5205 = vmatprep.subr.mxu0 0.0
  %5206 = vmatpush1.msra.mxu0 0.0
  %5207 = vmatprep.subr.mxu0 0.0
  %5208 = vmatpush1.msra.mxu0 0.0
  %5209 = vmatprep.mubr.f32.mxu0 0.0
  %5210 = vmatmul.mubr.f32.gmra.mrb[0].mxu0 %v5143
  %v5211 = vpop.f32.mrb[0].mxu0
  %v5212 = vadd.f32 0.0, %v5211
  %v5213 = vpop.f32.mrb[0].mxu0
  %5214 = vdwg.mxu0
  %5215 = vrot.lane.b32.xlu0 %v371, 64
  %v5216 = vpop.permute.xlu0 %5215
  %v5219 = vsel %vm424, %v3233, 0
  %5221 = vmatprep.subr.mxu0 0.0
  %5222 = vmatpush1.msra.mxu0 %v5216
  %5223 = vmatprep.subr.mxu0 0.0
  %5224 = vmatpush1.msra.mxu0 0.0
  %5225 = vmatprep.subr.mxu0 0.0
  %5226 = vmatpush1.msra.mxu0 0.0
  %5227 = vmatprep.subr.mxu0 0.0
  %5228 = vmatpush1.msra.mxu0 0.0
  %5229 = vmatprep.subr.mxu0 0.0
  %5230 = vmatpush1.msra.mxu0 0.0
  %5231 = vmatprep.subr.mxu0 0.0
  %5232 = vmatpush1.msra.mxu0 0.0
  %5233 = vmatprep.subr.mxu0 0.0
  %5234 = vmatpush1.msra.mxu0 0.0
  %5235 = vmatprep.subr.mxu0 0.0
  %5236 = vmatpush1.msra.mxu0 0.0
  %5237 = vmatprep.subr.mxu0 0.0
  %5238 = vmatpush1.msra.mxu0 0.0
  %5239 = vmatprep.subr.mxu0 0.0
  %5240 = vmatpush1.msra.mxu0 0.0
  %5241 = vmatprep.subr.mxu0 0.0
  %5242 = vmatpush1.msra.mxu0 0.0
  %5243 = vmatprep.subr.mxu0 0.0
  %5244 = vmatpush1.msra.mxu0 0.0
  %5245 = vmatprep.subr.mxu0 0.0
  %5246 = vmatpush1.msra.mxu0 0.0
  %5247 = vmatprep.subr.mxu0 0.0
  %5248 = vmatpush1.msra.mxu0 0.0
  %5249 = vmatprep.subr.mxu0 0.0
  %5250 = vmatpush1.msra.mxu0 0.0
  %5251 = vmatprep.subr.mxu0 0.0
  %5252 = vmatpush1.msra.mxu0 0.0
  %5253 = vmatprep.subr.mxu0 0.0
  %5254 = vmatpush1.msra.mxu0 0.0
  %5255 = vmatprep.subr.mxu0 0.0
  %5256 = vmatpush1.msra.mxu0 0.0
  %5257 = vmatprep.subr.mxu0 0.0
  %5258 = vmatpush1.msra.mxu0 0.0
  %5259 = vmatprep.subr.mxu0 0.0
  %5260 = vmatpush1.msra.mxu0 0.0
  %5261 = vmatprep.subr.mxu0 0.0
  %5262 = vmatpush1.msra.mxu0 0.0
  %5263 = vmatprep.subr.mxu0 0.0
  %5264 = vmatpush1.msra.mxu0 0.0
  %5265 = vmatprep.subr.mxu0 0.0
  %5266 = vmatpush1.msra.mxu0 0.0
  %5267 = vmatprep.subr.mxu0 0.0
  %5268 = vmatpush1.msra.mxu0 0.0
  %5269 = vmatprep.subr.mxu0 0.0
  %5270 = vmatpush1.msra.mxu0 0.0
  %5271 = vmatprep.subr.mxu0 0.0
  %5272 = vmatpush1.msra.mxu0 0.0
  %5273 = vmatprep.subr.mxu0 0.0
  %5274 = vmatpush1.msra.mxu0 0.0
  %5275 = vmatprep.subr.mxu0 0.0
  %5276 = vmatpush1.msra.mxu0 0.0
  %5277 = vmatprep.subr.mxu0 0.0
  %5278 = vmatpush1.msra.mxu0 0.0
  %5279 = vmatprep.subr.mxu0 0.0
  %5280 = vmatpush1.msra.mxu0 0.0
  %5281 = vmatprep.subr.mxu0 0.0
  %5282 = vmatpush1.msra.mxu0 0.0
  %5283 = vmatprep.subr.mxu0 0.0
  %5284 = vmatpush1.msra.mxu0 0.0
  %5285 = vmatprep.mubr.f32.mxu0 0.0
  %5286 = vmatmul.mubr.f32.gmra.mrb[0].mxu0 %v5219
  %v5287 = vpop.f32.mrb[0].mxu0
  %v5288 = vadd.f32 0.0, %v5287
  %v5289 = vpop.f32.mrb[0].mxu0
  %5290 = vdwg.mxu0
  %5291 = vrot.lane.b32.xlu0 %v373, 64
  %v5292 = vpop.permute.xlu0 %5291
  %v5295 = vsel %vm424, %v3234, 0
  %5297 = vmatprep.subr.mxu0 0.0
  %5298 = vmatpush1.msra.mxu0 %v5292
  %5299 = vmatprep.subr.mxu0 0.0
  %5300 = vmatpush1.msra.mxu0 0.0
  %5301 = vmatprep.subr.mxu0 0.0
  %5302 = vmatpush1.msra.mxu0 0.0
  %5303 = vmatprep.subr.mxu0 0.0
  %5304 = vmatpush1.msra.mxu0 0.0
  %5305 = vmatprep.subr.mxu0 0.0
  %5306 = vmatpush1.msra.mxu0 0.0
  %5307 = vmatprep.subr.mxu0 0.0
  %5308 = vmatpush1.msra.mxu0 0.0
  %5309 = vmatprep.subr.mxu0 0.0
  %5310 = vmatpush1.msra.mxu0 0.0
  %5311 = vmatprep.subr.mxu0 0.0
  %5312 = vmatpush1.msra.mxu0 0.0
  %5313 = vmatprep.subr.mxu0 0.0
  %5314 = vmatpush1.msra.mxu0 0.0
  %5315 = vmatprep.subr.mxu0 0.0
  %5316 = vmatpush1.msra.mxu0 0.0
  %5317 = vmatprep.subr.mxu0 0.0
  %5318 = vmatpush1.msra.mxu0 0.0
  %5319 = vmatprep.subr.mxu0 0.0
  %5320 = vmatpush1.msra.mxu0 0.0
  %5321 = vmatprep.subr.mxu0 0.0
  %5322 = vmatpush1.msra.mxu0 0.0
  %5323 = vmatprep.subr.mxu0 0.0
  %5324 = vmatpush1.msra.mxu0 0.0
  %5325 = vmatprep.subr.mxu0 0.0
  %5326 = vmatpush1.msra.mxu0 0.0
  %5327 = vmatprep.subr.mxu0 0.0
  %5328 = vmatpush1.msra.mxu0 0.0
  %5329 = vmatprep.subr.mxu0 0.0
  %5330 = vmatpush1.msra.mxu0 0.0
  %5331 = vmatprep.subr.mxu0 0.0
  %5332 = vmatpush1.msra.mxu0 0.0
  %5333 = vmatprep.subr.mxu0 0.0
  %5334 = vmatpush1.msra.mxu0 0.0
  %5335 = vmatprep.subr.mxu0 0.0
  %5336 = vmatpush1.msra.mxu0 0.0
  %5337 = vmatprep.subr.mxu0 0.0
  %5338 = vmatpush1.msra.mxu0 0.0
  %5339 = vmatprep.subr.mxu0 0.0
  %5340 = vmatpush1.msra.mxu0 0.0
  %5341 = vmatprep.subr.mxu0 0.0
  %5342 = vmatpush1.msra.mxu0 0.0
  %5343 = vmatprep.subr.mxu0 0.0
  %5344 = vmatpush1.msra.mxu0 0.0
  %5345 = vmatprep.subr.mxu0 0.0
  %5346 = vmatpush1.msra.mxu0 0.0
  %5347 = vmatprep.subr.mxu0 0.0
  %5348 = vmatpush1.msra.mxu0 0.0
  %5349 = vmatprep.subr.mxu0 0.0
  %5350 = vmatpush1.msra.mxu0 0.0
  %5351 = vmatprep.subr.mxu0 0.0
  %5352 = vmatpush1.msra.mxu0 0.0
  %5353 = vmatprep.subr.mxu0 0.0
  %5354 = vmatpush1.msra.mxu0 0.0
  %5355 = vmatprep.subr.mxu0 0.0
  %5356 = vmatpush1.msra.mxu0 0.0
  %5357 = vmatprep.subr.mxu0 0.0
  %5358 = vmatpush1.msra.mxu0 0.0
  %5359 = vmatprep.subr.mxu0 0.0
  %5360 = vmatpush1.msra.mxu0 0.0
  %5361 = vmatprep.mubr.f32.mxu0 0.0
  %5362 = vmatmul.mubr.f32.gmra.mrb[0].mxu0 %v5295
  %v5363 = vpop.f32.mrb[0].mxu0
  %v5364 = vadd.f32 0.0, %v5363
  %v5365 = vpop.f32.mrb[0].mxu0
  %5366 = vdwg.mxu0
  %5367 = vrot.lane.b32.xlu0 %v375, 64
  %v5368 = vpop.permute.xlu0 %5367
  %v5371 = vsel %vm424, %v3235, 0
  %5373 = vmatprep.subr.mxu0 0.0
  %5374 = vmatpush1.msra.mxu0 %v5368
  %5375 = vmatprep.subr.mxu0 0.0
  %5376 = vmatpush1.msra.mxu0 0.0
  %5377 = vmatprep.subr.mxu0 0.0
  %5378 = vmatpush1.msra.mxu0 0.0
  %5379 = vmatprep.subr.mxu0 0.0
  %5380 = vmatpush1.msra.mxu0 0.0
  %5381 = vmatprep.subr.mxu0 0.0
  %5382 = vmatpush1.msra.mxu0 0.0
  %5383 = vmatprep.subr.mxu0 0.0
  %5384 = vmatpush1.msra.mxu0 0.0
  %5385 = vmatprep.subr.mxu0 0.0
  %5386 = vmatpush1.msra.mxu0 0.0
  %5387 = vmatprep.subr.mxu0 0.0
  %5388 = vmatpush1.msra.mxu0 0.0
  %5389 = vmatprep.subr.mxu0 0.0
  %5390 = vmatpush1.msra.mxu0 0.0
  %5391 = vmatprep.subr.mxu0 0.0
  %5392 = vmatpush1.msra.mxu0 0.0
  %5393 = vmatprep.subr.mxu0 0.0
  %5394 = vmatpush1.msra.mxu0 0.0
  %5395 = vmatprep.subr.mxu0 0.0
  %5396 = vmatpush1.msra.mxu0 0.0
  %5397 = vmatprep.subr.mxu0 0.0
  %5398 = vmatpush1.msra.mxu0 0.0
  %5399 = vmatprep.subr.mxu0 0.0
  %5400 = vmatpush1.msra.mxu0 0.0
  %5401 = vmatprep.subr.mxu0 0.0
  %5402 = vmatpush1.msra.mxu0 0.0
  %5403 = vmatprep.subr.mxu0 0.0
  %5404 = vmatpush1.msra.mxu0 0.0
  %5405 = vmatprep.subr.mxu0 0.0
  %5406 = vmatpush1.msra.mxu0 0.0
  %5407 = vmatprep.subr.mxu0 0.0
  %5408 = vmatpush1.msra.mxu0 0.0
  %5409 = vmatprep.subr.mxu0 0.0
  %5410 = vmatpush1.msra.mxu0 0.0
  %5411 = vmatprep.subr.mxu0 0.0
  %5412 = vmatpush1.msra.mxu0 0.0
  %5413 = vmatprep.subr.mxu0 0.0
  %5414 = vmatpush1.msra.mxu0 0.0
  %5415 = vmatprep.subr.mxu0 0.0
  %5416 = vmatpush1.msra.mxu0 0.0
  %5417 = vmatprep.subr.mxu0 0.0
  %5418 = vmatpush1.msra.mxu0 0.0
  %5419 = vmatprep.subr.mxu0 0.0
  %5420 = vmatpush1.msra.mxu0 0.0
  %5421 = vmatprep.subr.mxu0 0.0
  %5422 = vmatpush1.msra.mxu0 0.0
  %5423 = vmatprep.subr.mxu0 0.0
  %5424 = vmatpush1.msra.mxu0 0.0
  %5425 = vmatprep.subr.mxu0 0.0
  %5426 = vmatpush1.msra.mxu0 0.0
  %5427 = vmatprep.subr.mxu0 0.0
  %5428 = vmatpush1.msra.mxu0 0.0
  %5429 = vmatprep.subr.mxu0 0.0
  %5430 = vmatpush1.msra.mxu0 0.0
  %5431 = vmatprep.subr.mxu0 0.0
  %5432 = vmatpush1.msra.mxu0 0.0
  %5433 = vmatprep.subr.mxu0 0.0
  %5434 = vmatpush1.msra.mxu0 0.0
  %5435 = vmatprep.subr.mxu0 0.0
  %5436 = vmatpush1.msra.mxu0 0.0
  %5437 = vmatprep.mubr.f32.mxu0 0.0
  %5438 = vmatmul.mubr.f32.gmra.mrb[0].mxu0 %v5371
  %v5439 = vpop.f32.mrb[0].mxu0
  %v5440 = vadd.f32 0.0, %v5439
  %v5441 = vpop.f32.mrb[0].mxu0
  %5442 = vdwg.mxu0
  %5443 = vrot.lane.b32.xlu0 %v377, 64
  %v5444 = vpop.permute.xlu0 %5443
  %v5447 = vsel %vm424, %v3236, 0
  %5449 = vmatprep.subr.mxu0 0.0
  %5450 = vmatpush1.msra.mxu0 %v5444
  %5451 = vmatprep.subr.mxu0 0.0
  %5452 = vmatpush1.msra.mxu0 0.0
  %5453 = vmatprep.subr.mxu0 0.0
  %5454 = vmatpush1.msra.mxu0 0.0
  %5455 = vmatprep.subr.mxu0 0.0
  %5456 = vmatpush1.msra.mxu0 0.0
  %5457 = vmatprep.subr.mxu0 0.0
  %5458 = vmatpush1.msra.mxu0 0.0
  %5459 = vmatprep.subr.mxu0 0.0
  %5460 = vmatpush1.msra.mxu0 0.0
  %5461 = vmatprep.subr.mxu0 0.0
  %5462 = vmatpush1.msra.mxu0 0.0
  %5463 = vmatprep.subr.mxu0 0.0
  %5464 = vmatpush1.msra.mxu0 0.0
  %5465 = vmatprep.subr.mxu0 0.0
  %5466 = vmatpush1.msra.mxu0 0.0
  %5467 = vmatprep.subr.mxu0 0.0
  %5468 = vmatpush1.msra.mxu0 0.0
  %5469 = vmatprep.subr.mxu0 0.0
  %5470 = vmatpush1.msra.mxu0 0.0
  %5471 = vmatprep.subr.mxu0 0.0
  %5472 = vmatpush1.msra.mxu0 0.0
  %5473 = vmatprep.subr.mxu0 0.0
  %5474 = vmatpush1.msra.mxu0 0.0
  %5475 = vmatprep.subr.mxu0 0.0
  %5476 = vmatpush1.msra.mxu0 0.0
  %5477 = vmatprep.subr.mxu0 0.0
  %5478 = vmatpush1.msra.mxu0 0.0
  %5479 = vmatprep.subr.mxu0 0.0
  %5480 = vmatpush1.msra.mxu0 0.0
  %5481 = vmatprep.subr.mxu0 0.0
  %5482 = vmatpush1.msra.mxu0 0.0
  %5483 = vmatprep.subr.mxu0 0.0
  %5484 = vmatpush1.msra.mxu0 0.0
  %5485 = vmatprep.subr.mxu0 0.0
  %5486 = vmatpush1.msra.mxu0 0.0
  %5487 = vmatprep.subr.mxu0 0.0
  %5488 = vmatpush1.msra.mxu0 0.0
  %5489 = vmatprep.subr.mxu0 0.0
  %5490 = vmatpush1.msra.mxu0 0.0
  %5491 = vmatprep.subr.mxu0 0.0
  %5492 = vmatpush1.msra.mxu0 0.0
  %5493 = vmatprep.subr.mxu0 0.0
  %5494 = vmatpush1.msra.mxu0 0.0
  %5495 = vmatprep.subr.mxu0 0.0
  %5496 = vmatpush1.msra.mxu0 0.0
  %5497 = vmatprep.subr.mxu0 0.0
  %5498 = vmatpush1.msra.mxu0 0.0
  %5499 = vmatprep.subr.mxu0 0.0
  %5500 = vmatpush1.msra.mxu0 0.0
  %5501 = vmatprep.subr.mxu0 0.0
  %5502 = vmatpush1.msra.mxu0 0.0
  %5503 = vmatprep.subr.mxu0 0.0
  %5504 = vmatpush1.msra.mxu0 0.0
  %5505 = vmatprep.subr.mxu0 0.0
  %5506 = vmatpush1.msra.mxu0 0.0
  %5507 = vmatprep.subr.mxu0 0.0
  %5508 = vmatpush1.msra.mxu0 0.0
  %5509 = vmatprep.subr.mxu0 0.0
  %5510 = vmatpush1.msra.mxu0 0.0
  %5511 = vmatprep.subr.mxu0 0.0
  %5512 = vmatpush1.msra.mxu0 0.0
  %5513 = vmatprep.mubr.f32.mxu0 0.0
  %5514 = vmatmul.mubr.f32.gmra.mrb[0].mxu0 %v5447
  %v5515 = vpop.f32.mrb[0].mxu0
  %v5516 = vadd.f32 0.0, %v5515
  %v5517 = vpop.f32.mrb[0].mxu0
  %5518 = vdwg.mxu0
  %5519 = vrot.lane.b32.xlu0 %v379, 64
  %v5520 = vpop.permute.xlu0 %5519
  %v5523 = vsel %vm424, %v3237, 0
  %5525 = vmatprep.subr.mxu0 0.0
  %5526 = vmatpush1.msra.mxu0 %v5520
  %5527 = vmatprep.subr.mxu0 0.0
  %5528 = vmatpush1.msra.mxu0 0.0
  %5529 = vmatprep.subr.mxu0 0.0
  %5530 = vmatpush1.msra.mxu0 0.0
  %5531 = vmatprep.subr.mxu0 0.0
  %5532 = vmatpush1.msra.mxu0 0.0
  %5533 = vmatprep.subr.mxu0 0.0
  %5534 = vmatpush1.msra.mxu0 0.0
  %5535 = vmatprep.subr.mxu0 0.0
  %5536 = vmatpush1.msra.mxu0 0.0
  %5537 = vmatprep.subr.mxu0 0.0
  %5538 = vmatpush1.msra.mxu0 0.0
  %5539 = vmatprep.subr.mxu0 0.0
  %5540 = vmatpush1.msra.mxu0 0.0
  %5541 = vmatprep.subr.mxu0 0.0
  %5542 = vmatpush1.msra.mxu0 0.0
  %5543 = vmatprep.subr.mxu0 0.0
  %5544 = vmatpush1.msra.mxu0 0.0
  %5545 = vmatprep.subr.mxu0 0.0
  %5546 = vmatpush1.msra.mxu0 0.0
  %5547 = vmatprep.subr.mxu0 0.0
  %5548 = vmatpush1.msra.mxu0 0.0
  %5549 = vmatprep.subr.mxu0 0.0
  %5550 = vmatpush1.msra.mxu0 0.0
  %5551 = vmatprep.subr.mxu0 0.0
  %5552 = vmatpush1.msra.mxu0 0.0
  %5553 = vmatprep.subr.mxu0 0.0
  %5554 = vmatpush1.msra.mxu0 0.0
  %5555 = vmatprep.subr.mxu0 0.0
  %5556 = vmatpush1.msra.mxu0 0.0
  %5557 = vmatprep.subr.mxu0 0.0
  %5558 = vmatpush1.msra.mxu0 0.0
  %5559 = vmatprep.subr.mxu0 0.0
  %5560 = vmatpush1.msra.mxu0 0.0
  %5561 = vmatprep.subr.mxu0 0.0
  %5562 = vmatpush1.msra.mxu0 0.0
  %5563 = vmatprep.subr.mxu0 0.0
  %5564 = vmatpush1.msra.mxu0 0.0
  %5565 = vmatprep.subr.mxu0 0.0
  %5566 = vmatpush1.msra.mxu0 0.0
  %5567 = vmatprep.subr.mxu0 0.0
  %5568 = vmatpush1.msra.mxu0 0.0
  %5569 = vmatprep.subr.mxu0 0.0
  %5570 = vmatpush1.msra.mxu0 0.0
  %5571 = vmatprep.subr.mxu0 0.0
  %5572 = vmatpush1.msra.mxu0 0.0
  %5573 = vmatprep.subr.mxu0 0.0
  %5574 = vmatpush1.msra.mxu0 0.0
  %5575 = vmatprep.subr.mxu0 0.0
  %5576 = vmatpush1.msra.mxu0 0.0
  %5577 = vmatprep.subr.mxu0 0.0
  %5578 = vmatpush1.msra.mxu0 0.0
  %5579 = vmatprep.subr.mxu0 0.0
  %5580 = vmatpush1.msra.mxu0 0.0
  %5581 = vmatprep.subr.mxu0 0.0
  %5582 = vmatpush1.msra.mxu0 0.0
  %5583 = vmatprep.subr.mxu0 0.0
  %5584 = vmatpush1.msra.mxu0 0.0
  %5585 = vmatprep.subr.mxu0 0.0
  %5586 = vmatpush1.msra.mxu0 0.0
  %5587 = vmatprep.subr.mxu0 0.0
  %5588 = vmatpush1.msra.mxu0 0.0
  %5589 = vmatprep.mubr.f32.mxu0 0.0
  %5590 = vmatmul.mubr.f32.gmra.mrb[0].mxu0 %v5523
  %v5591 = vpop.f32.mrb[0].mxu0
  %v5592 = vadd.f32 0.0, %v5591
  %v5593 = vpop.f32.mrb[0].mxu0
  %5594 = vdwg.mxu0
  %5595 = vrot.lane.b32.xlu0 %v381, 64
  %v5596 = vpop.permute.xlu0 %5595
  %v5599 = vsel %vm424, %v3238, 0
  %5601 = vmatprep.subr.mxu0 0.0
  %5602 = vmatpush1.msra.mxu0 %v5596
  %5603 = vmatprep.subr.mxu0 0.0
  %5604 = vmatpush1.msra.mxu0 0.0
  %5605 = vmatprep.subr.mxu0 0.0
  %5606 = vmatpush1.msra.mxu0 0.0
  %5607 = vmatprep.subr.mxu0 0.0
  %5608 = vmatpush1.msra.mxu0 0.0
  %5609 = vmatprep.subr.mxu0 0.0
  %5610 = vmatpush1.msra.mxu0 0.0
  %5611 = vmatprep.subr.mxu0 0.0
  %5612 = vmatpush1.msra.mxu0 0.0
  %5613 = vmatprep.subr.mxu0 0.0
  %5614 = vmatpush1.msra.mxu0 0.0
  %5615 = vmatprep.subr.mxu0 0.0
  %5616 = vmatpush1.msra.mxu0 0.0
  %5617 = vmatprep.subr.mxu0 0.0
  %5618 = vmatpush1.msra.mxu0 0.0
  %5619 = vmatprep.subr.mxu0 0.0
  %5620 = vmatpush1.msra.mxu0 0.0
  %5621 = vmatprep.subr.mxu0 0.0
  %5622 = vmatpush1.msra.mxu0 0.0
  %5623 = vmatprep.subr.mxu0 0.0
  %5624 = vmatpush1.msra.mxu0 0.0
  %5625 = vmatprep.subr.mxu0 0.0
  %5626 = vmatpush1.msra.mxu0 0.0
  %5627 = vmatprep.subr.mxu0 0.0
  %5628 = vmatpush1.msra.mxu0 0.0
  %5629 = vmatprep.subr.mxu0 0.0
  %5630 = vmatpush1.msra.mxu0 0.0
  %5631 = vmatprep.subr.mxu0 0.0
  %5632 = vmatpush1.msra.mxu0 0.0
  %5633 = vmatprep.subr.mxu0 0.0
  %5634 = vmatpush1.msra.mxu0 0.0
  %5635 = vmatprep.subr.mxu0 0.0
  %5636 = vmatpush1.msra.mxu0 0.0
  %5637 = vmatprep.subr.mxu0 0.0
  %5638 = vmatpush1.msra.mxu0 0.0
  %5639 = vmatprep.subr.mxu0 0.0
  %5640 = vmatpush1.msra.mxu0 0.0
  %5641 = vmatprep.subr.mxu0 0.0
  %5642 = vmatpush1.msra.mxu0 0.0
  %5643 = vmatprep.subr.mxu0 0.0
  %5644 = vmatpush1.msra.mxu0 0.0
  %5645 = vmatprep.subr.mxu0 0.0
  %5646 = vmatpush1.msra.mxu0 0.0
  %5647 = vmatprep.subr.mxu0 0.0
  %5648 = vmatpush1.msra.mxu0 0.0
  %5649 = vmatprep.subr.mxu0 0.0
  %5650 = vmatpush1.msra.mxu0 0.0
  %5651 = vmatprep.subr.mxu0 0.0
  %5652 = vmatpush1.msra.mxu0 0.0
  %5653 = vmatprep.subr.mxu0 0.0
  %5654 = vmatpush1.msra.mxu0 0.0
  %5655 = vmatprep.subr.mxu0 0.0
  %5656 = vmatpush1.msra.mxu0 0.0
  %5657 = vmatprep.subr.mxu0 0.0
  %5658 = vmatpush1.msra.mxu0 0.0
  %5659 = vmatprep.subr.mxu0 0.0
  %5660 = vmatpush1.msra.mxu0 0.0
  %5661 = vmatprep.subr.mxu0 0.0
  %5662 = vmatpush1.msra.mxu0 0.0
  %5663 = vmatprep.subr.mxu0 0.0
  %5664 = vmatpush1.msra.mxu0 0.0
  %5665 = vmatprep.mubr.f32.mxu0 0.0
  %5666 = vmatmul.mubr.f32.gmra.mrb[0].mxu0 %v5599
  %v5667 = vpop.f32.mrb[0].mxu0
  %v5668 = vadd.f32 0.0, %v5667
  %v5669 = vpop.f32.mrb[0].mxu0
  %5670 = vdwg.mxu0
  %5679 = vrot.lane.b32.xlu0 %v3920, 8
  %v5680 = vpop.permute.xlu0 %5679
  %5681 = vrot.lane.b32.xlu0 %v3996, 8
  %v5682 = vpop.permute.xlu0 %5681
  %5683 = vrot.lane.b32.xlu0 %v4072, 8
  %v5684 = vpop.permute.xlu0 %5683
  %5685 = vrot.lane.b32.xlu0 %v4148, 8
  %v5686 = vpop.permute.xlu0 %5685
  %5687 = vrot.lane.b32.xlu0 %v4224, 8
  %v5688 = vpop.permute.xlu0 %5687
  %5689 = vrot.lane.b32.xlu0 %v4300, 8
  %v5690 = vpop.permute.xlu0 %5689
  %5691 = vrot.lane.b32.xlu0 %v4376, 8
  %v5692 = vpop.permute.xlu0 %5691
  %5693 = vrot.lane.b32.xlu0 %v4452, 8
  %v5694 = vpop.permute.xlu0 %5693
  %5711 = vrot.lane.b32.xlu0 %v4528, 16
  %v5712 = vpop.permute.xlu0 %5711
  %5713 = vrot.lane.b32.xlu0 %v4604, 16
  %v5714 = vpop.permute.xlu0 %5713
  %5715 = vrot.lane.b32.xlu0 %v4680, 16
  %v5716 = vpop.permute.xlu0 %5715
  %5717 = vrot.lane.b32.xlu0 %v4756, 16
  %v5718 = vpop.permute.xlu0 %5717
  %5719 = vrot.lane.b32.xlu0 %v4832, 16
  %v5720 = vpop.permute.xlu0 %5719
  %5721 = vrot.lane.b32.xlu0 %v4908, 16
  %v5722 = vpop.permute.xlu0 %5721
  %5723 = vrot.lane.b32.xlu0 %v4984, 16
  %v5724 = vpop.permute.xlu0 %5723
  %5725 = vrot.lane.b32.xlu0 %v5060, 16
  %v5726 = vpop.permute.xlu0 %5725
  %5743 = vrot.lane.b32.xlu0 %v5136, 24
  %v5744 = vpop.permute.xlu0 %5743
  %5745 = vrot.lane.b32.xlu0 %v5212, 24
  %v5746 = vpop.permute.xlu0 %5745
  %5747 = vrot.lane.b32.xlu0 %v5288, 24
  %v5748 = vpop.permute.xlu0 %5747
  %5749 = vrot.lane.b32.xlu0 %v5364, 24
  %v5750 = vpop.permute.xlu0 %5749
  %5751 = vrot.lane.b32.xlu0 %v5440, 24
  %v5752 = vpop.permute.xlu0 %5751
  %5753 = vrot.lane.b32.xlu0 %v5516, 24
  %v5754 = vpop.permute.xlu0 %5753
  %5755 = vrot.lane.b32.xlu0 %v5592, 24
  %v5756 = vpop.permute.xlu0 %5755
  %5757 = vrot.lane.b32.xlu0 %v5668, 24
  %v5758 = vpop.permute.xlu0 %5757
  %v5767 = vsel %vm424, %v3312, %v5680
  %v5768 = vsel %vm424, %v3388, %v5682
  %v5769 = vsel %vm424, %v3464, %v5684
  %v5770 = vsel %vm424, %v3540, %v5686
  %v5771 = vsel %vm424, %v3616, %v5688
  %v5772 = vsel %vm424, %v3692, %v5690
  %v5773 = vsel %vm424, %v3768, %v5692
  %v5774 = vsel %vm424, %v3844, %v5694
  %vm5775 = vcmask 130048
  %v5776 = vsel %vm5775, %v5767, %v5712
  %v5777 = vsel %vm5775, %v5768, %v5714
  %v5778 = vsel %vm5775, %v5769, %v5716
  %v5779 = vsel %vm5775, %v5770, %v5718
  %v5780 = vsel %vm5775, %v5771, %v5720
  %v5781 = vsel %vm5775, %v5772, %v5722
  %v5782 = vsel %vm5775, %v5773, %v5724
  %v5783 = vsel %vm5775, %v5774, %v5726
  %vm5784 = vcmask 195584
  %v5785 = vsel %vm5784, %v5776, %v5744
  %v5786 = vsel %vm5784, %v5777, %v5746
  %v5787 = vsel %vm5784, %v5778, %v5748
  %v5788 = vsel %vm5784, %v5779, %v5750
  %v5789 = vsel %vm5784, %v5780, %v5752
  %v5790 = vsel %vm5784, %v5781, %v5754
  %v5791 = vsel %vm5784, %v5782, %v5756
  %v5792 = vsel %vm5784, %v5783, %v5758
  %v5793 = vld [vmem:[%s5] sm:$0xff]
  %v5794 = vld [vmem:[%s5 + $0x8] sm:$0xff]
  %v5795 = vld [vmem:[%s5 + $0x10] sm:$0xff]
  %v5796 = vld [vmem:[%s5 + $0x18] sm:$0xff]
  %v5797 = vld [vmem:[%s6] sm:$0x1]
  %v5799 = vlaneseq
  %v5800 = vshrl.u32 %v5799, 7
  %v5801 = vsub.s32 0, %v5800
  %v5802 = vrot.slane %v5797, %v5801
  %v5805 = vsel %vm34, %v5785, 0
  %v5808 = vsel %vm34, %v5786, 0
  %v5811 = vsel %vm34, %v5787, 0
  %v5814 = vsel %vm34, %v5788, 0
  %v5817 = vsel %vm34, %v5789, 0
  %v5820 = vsel %vm34, %v5790, 0
  %v5823 = vsel %vm34, %v5791, 0
  %v5826 = vsel %vm34, %v5792, 0
  %5828 = vmatprep.subr.mxu0 0.0
  %5829 = vmatpush1.msra.mxu0 %v5793
  %5830 = vmatprep.subr.mxu0 0.0
  %5831 = vmatpush1.msra.mxu0 %v5794
  %5832 = vmatprep.subr.mxu0 0.0
  %5833 = vmatpush1.msra.mxu0 %v5795
  %5834 = vmatprep.subr.mxu0 0.0
  %5835 = vmatpush1.msra.mxu0 %v5796
  %5836 = vmatprep.subr.mxu0 0.0
  %5837 = vmatpush1.msra.mxu0 0.0
  %5838 = vmatprep.subr.mxu0 0.0
  %5839 = vmatpush1.msra.mxu0 0.0
  %5840 = vmatprep.subr.mxu0 0.0
  %5841 = vmatpush1.msra.mxu0 0.0
  %5842 = vmatprep.subr.mxu0 0.0
  %5843 = vmatpush1.msra.mxu0 0.0
  %5844 = vmatprep.subr.mxu0 0.0
  %5845 = vmatpush1.msra.mxu0 0.0
  %5846 = vmatprep.subr.mxu0 0.0
  %5847 = vmatpush1.msra.mxu0 0.0
  %5848 = vmatprep.subr.mxu0 0.0
  %5849 = vmatpush1.msra.mxu0 0.0
  %5850 = vmatprep.subr.mxu0 0.0
  %5851 = vmatpush1.msra.mxu0 0.0
  %5852 = vmatprep.subr.mxu0 0.0
  %5853 = vmatpush1.msra.mxu0 0.0
  %5854 = vmatprep.subr.mxu0 0.0
  %5855 = vmatpush1.msra.mxu0 0.0
  %5856 = vmatprep.subr.mxu0 0.0
  %5857 = vmatpush1.msra.mxu0 0.0
  %5858 = vmatprep.subr.mxu0 0.0
  %5859 = vmatpush1.msra.mxu0 0.0
  %5860 = vmatprep.subr.mxu0 0.0
  %5861 = vmatpush1.msra.mxu0 0.0
  %5862 = vmatprep.subr.mxu0 0.0
  %5863 = vmatpush1.msra.mxu0 0.0
  %5864 = vmatprep.subr.mxu0 0.0
  %5865 = vmatpush1.msra.mxu0 0.0
  %5866 = vmatprep.subr.mxu0 0.0
  %5867 = vmatpush1.msra.mxu0 0.0
  %5868 = vmatprep.subr.mxu0 0.0
  %5869 = vmatpush1.msra.mxu0 0.0
  %5870 = vmatprep.subr.mxu0 0.0
  %5871 = vmatpush1.msra.mxu0 0.0
  %5872 = vmatprep.subr.mxu0 0.0
  %5873 = vmatpush1.msra.mxu0 0.0
  %5874 = vmatprep.subr.mxu0 0.0
  %5875 = vmatpush1.msra.mxu0 0.0
  %5876 = vmatprep.subr.mxu0 0.0
  %5877 = vmatpush1.msra.mxu0 0.0
  %5878 = vmatprep.subr.mxu0 0.0
  %5879 = vmatpush1.msra.mxu0 0.0
  %5880 = vmatprep.subr.mxu0 0.0
  %5881 = vmatpush1.msra.mxu0 0.0
  %5882 = vmatprep.subr.mxu0 0.0
  %5883 = vmatpush1.msra.mxu0 0.0
  %5884 = vmatprep.subr.mxu0 0.0
  %5885 = vmatpush1.msra.mxu0 0.0
  %5886 = vmatprep.subr.mxu0 0.0
  %5887 = vmatpush1.msra.mxu0 0.0
  %5888 = vmatprep.subr.mxu0 0.0
  %5889 = vmatpush1.msra.mxu0 0.0
  %5890 = vmatprep.subr.mxu0 0.0
  %5891 = vmatpush1.msra.mxu0 0.0
  %5892 = vmatprep.mubr.f32.mxu0 0.0
  %5893 = vmatmul.mubr.f32.gmra.mrb[0].mxu0 %v5805
  %v5894 = vpop.f32.mrb[0].mxu0
  %v5895 = vadd.f32 %v5802, %v5894
  %v5896 = vpop.f32.mrb[0].mxu0
  %5897 = vmatprep.mubr.f32.mxu0 0.0
  %5898 = vmatmul.mubr.f32.gmra.mrb[0].mxu0 %v5808
  %v5899 = vpop.f32.mrb[0].mxu0
  %v5900 = vadd.f32 %v5802, %v5899
  %v5901 = vpop.f32.mrb[0].mxu0
  %5902 = vmatprep.mubr.f32.mxu0 0.0
  %5903 = vmatmul.mubr.f32.gmra.mrb[0].mxu0 %v5811
  %v5904 = vpop.f32.mrb[0].mxu0
  %v5905 = vadd.f32 %v5802, %v5904
  %v5906 = vpop.f32.mrb[0].mxu0
  %5907 = vmatprep.mubr.f32.mxu0 0.0
  %5908 = vmatmul.mubr.f32.gmra.mrb[0].mxu0 %v5814
  %v5909 = vpop.f32.mrb[0].mxu0
  %v5910 = vadd.f32 %v5802, %v5909
  %v5911 = vpop.f32.mrb[0].mxu0
  %5912 = vmatprep.mubr.f32.mxu0 0.0
  %5913 = vmatmul.mubr.f32.gmra.mrb[0].mxu0 %v5817
  %v5914 = vpop.f32.mrb[0].mxu0
  %v5915 = vadd.f32 %v5802, %v5914
  %v5916 = vpop.f32.mrb[0].mxu0
  %5917 = vmatprep.mubr.f32.mxu0 0.0
  %5918 = vmatmul.mubr.f32.gmra.mrb[0].mxu0 %v5820
  %v5919 = vpop.f32.mrb[0].mxu0
  %v5920 = vadd.f32 %v5802, %v5919
  %v5921 = vpop.f32.mrb[0].mxu0
  %5922 = vmatprep.mubr.f32.mxu0 0.0
  %5923 = vmatmul.mubr.f32.gmra.mrb[0].mxu0 %v5823
  %v5924 = vpop.f32.mrb[0].mxu0
  %v5925 = vadd.f32 %v5802, %v5924
  %v5926 = vpop.f32.mrb[0].mxu0
  %5927 = vmatprep.mubr.f32.mxu0 0.0
  %5928 = vmatmul.mubr.f32.gmra.mrb[0].mxu0 %v5826
  %v5929 = vpop.f32.mrb[0].mxu0
  %v5930 = vadd.f32 %v5802, %v5929
  %v5931 = vpop.f32.mrb[0].mxu0
  %5932 = vdwg.mxu0
  %5933 = vst.msk [vmem:[%s7] sm:$0xff] %vm34, %v5895
  %5934 = vst.msk [vmem:[%s7 + $0x8] sm:$0xff] %vm34, %v5900
  %5935 = vst.msk [vmem:[%s7 + $0x10] sm:$0xff] %vm34, %v5905
  %5936 = vst.msk [vmem:[%s7 + $0x18] sm:$0xff] %vm34, %v5910
  %5937 = vst.msk [vmem:[%s7 + $0x20] sm:$0xff] %vm34, %v5915
  %5938 = vst.msk [vmem:[%s7 + $0x28] sm:$0xff] %vm34, %v5920
  %5939 = vst.msk [vmem:[%s7 + $0x30] sm:$0xff] %vm34, %v5925
  %5940 = vst.msk [vmem:[%s7 + $0x38] sm:$0xff] %vm34, %v5930
  // Predicated region
  $region30: #{tpu_custom_call.1} parent=0 // pred_check
    _
  $region31: #{tpu_custom_call.1} parent=0 // pred_check_branch
    %5942 = sbr.rel (0) target = $region33
  $region32: #{tpu_custom_call.1} parent=0 // pred_region
    _
  $region33: #{tpu_custom_call.1} parent=0 // pred_fallthru
    _
  // Predicated region
  $region34: #{tpu_custom_call.1} parent=0 // pred_check
    _
  $region35: #{tpu_custom_call.1} parent=0 // pred_check_branch
    %5944 = sbr.rel (0) target = $region37
  $region36: #{tpu_custom_call.1} parent=0 // pred_region
    _
  $region37: #{tpu_custom_call.1} parent=0 // pred_fallthru
    _

</llo_original>
